<compile_context>
chip_gen: v5e
topology: v5e:2x2
jax: 0.10.0
libtpu: 0.0.40
codegen_flags: <defaults>
</compile_context>

<pallas_src>
import functools

import numpy as np
import jax
import jax.numpy as jnp
from jax.experimental import pallas as pl
from jax.experimental.pallas import tpu as pltpu

EPS = 1e-5


# ------------------------------ fused kernel ------------------------------
def _fused_kernel(x_ref,
                  l0_wih, l0_whh, l0_b,
                  l1_wih, l1_whh, l1_b,
                  g0_wih, g0_whh, g0_bih, g0_bhh,
                  g1_wih, g1_whh, g1_bih, g1_bhh,
                  w1_ref, b1_ref, w2_ref, b2_ref,
                  o_ref, *, T, B, H, vpu_head):
    f32, bf16 = jnp.float32, jnp.bfloat16
    G = 4 * H                         # fused gate width (128 lanes for H=32)

    def sig(v):                       # sigmoid as a single EUP tanh
        return 0.5 * jnp.tanh(0.5 * v) + 0.5

    def grp(v, k):                    # bring lane-group k to lanes [0:H] (XLU rotate)
        return pltpu.roll(v, shift=(4 - k) * H, axis=1)

    def mm(a, w):                     # bf16 MXU matmul, f32 accumulation
        return jnp.dot(a, w, preferred_element_type=f32)

    # Load weights once (bf16 in VMEM).
    l0Wih, l0Whh = l0_wih[...], l0_whh[...]
    l1Wih, l1Whh = l1_wih[...], l1_whh[...]
    g0Wih, g0Whh = g0_wih[...], g0_whh[...]
    g1Wih, g1Whh = g1_wih[...], g1_whh[...]

    # Hoisted input projection for LSTM layer 0 (input BN folded into weights).
    gx0 = mm(x_ref[...], l0Wih) + l0_b[...]            # (T*B, G) f32

    # Pre-broadcast per-step biases once (JAX does not CSE broadcast_in_dim).
    l1b  = jnp.broadcast_to(l1_b[...],   (B, G))
    g0bi = jnp.broadcast_to(g0_bih[...], (B, G))
    g0bh = jnp.broadcast_to(g0_bhh[...], (B, G))
    g1bi = jnp.broadcast_to(g1_bih[...], (B, G))
    g1bh = jnp.broadcast_to(g1_bhh[...], (B, G))

    def lstm_cell(pre, c):
        # pre: (B, G) with gate groups [i | f | g | o].  Only lanes [0:H] of the
        # returned h/c are meaningful; other lanes carry bounded garbage that is
        # killed by zero-padded weight rows downstream.
        s = sig(pre)
        th = jnp.tanh(pre)
        c_new = grp(s, 1) * c + s * grp(th, 2)          # f*c + i*g  in lanes [0:H]
        h_new = grp(s, 3) * jnp.tanh(c_new)             # o*tanh(c)
        return h_new.astype(bf16), c_new

    def gru_cell(gi, gh, h):
        # gi = x@Wih + (b_ih + b_hh for r,z); gh = h@Whh + (b_hh for n only)
        # gate groups [r | z | n | 0]
        s = sig(gi + gh)
        r_at_n = pltpu.roll(s, shift=2 * H, axis=1)     # align r with the n group
        n = jnp.tanh(gi + r_at_n * gh)
        z = grp(s, 1)
        return (1.0 - z) * grp(n, 2) + z * h            # valid in lanes [0:H]

    zf = jnp.zeros((B, G), f32)
    zb = jnp.zeros((B, G), bf16)
    h0, c0 = zb, zf                  # LSTM layer 0
    h1, c1 = zb, zf                  # LSTM layer 1
    hg0, hg0b = zf, zb               # GRU layer 0
    hg1, hg1b = zf, zb               # GRU layer 1

    # Wavefront over time: all four layers advance inside one unrolled loop so
    # the scheduler can overlap layer L step t with layer L-1 step t+1.
    for t in range(T):
        r0 = t * B                                       # B == 8 -> sublane aligned
        pre0 = gx0[r0:r0 + B] + mm(h0, l0Whh)
        h0, c0 = lstm_cell(pre0, c0)
        # TODO(synk): LSTM inter-layer dropout (p=0.2) omitted (eval-mode identity)

        pre1 = mm(h0, l1Wih) + mm(h1, l1Whh) + l1b
        h1, c1 = lstm_cell(pre1, c1)

        gi0 = mm(h1, g0Wih) + g0bi                       # mid-BN folded into g0Wih
        gh0 = mm(hg0b, g0Whh) + g0bh
        hg0 = gru_cell(gi0, gh0, hg0)
        hg0b = hg0.astype(bf16)

        gi1 = mm(hg0b, g1Wih) + g1bi
        gh1 = mm(hg1b, g1Whh) + g1bh
        hg1 = gru_cell(gi1, gh1, hg1)
        hg1b = hg1.astype(bf16)

    # Head: bn_final folded into fc1 (rows beyond H are zero, killing garbage
    # lanes); fc2 (out_size=1) as a VPU multiply + lane reduction.
    y = jnp.maximum(mm(hg1b, w1_ref[...]) + b1_ref[...], 0.0)
    if vpu_head:
        o_ref[...] = jnp.sum(y * w2_ref[...], axis=1, keepdims=True) + b2_ref[...]
    else:
        o_ref[...] = mm(y.astype(bf16), w2_ref[...]) + b2_ref[...]


# ----------------------- weight folding / padding -----------------------
def _bn_scale_shift(bn_p):
    g, b, m, v = bn_p
    s = g * jax.lax.rsqrt(v + EPS)                 # (1, C)
    t = b - m * s                                  # (1, C)
    return s, t


def _pad_to(w, rows, cols):
    return jnp.pad(w, ((0, rows - w.shape[0]), (0, cols - w.shape[1])))


def prepare_weights(p):
    """Fold eval-mode BNs into adjacent matmuls, keep gates lane-fused, zero-pad
    weights to the 4H lane width, and cast matmul operands to bf16."""
    f32, bf16 = jnp.float32, jnp.bfloat16
    H = p["lstm"][0][1].shape[0]                   # whh is (H, 4H)
    assert p["gru"][0][1].shape[0] == H, "kernel assumes hidden_lstm == hidden_gru"
    G = 4 * H
    args = []

    # ---- LSTM stack ----
    s_in, t_in = _bn_scale_shift(p["bn_in"])
    for li, (wih, whh, b) in enumerate(p["lstm"]):
        if li == 0:                                # fold input BN into layer 0
            b = b + t_in @ wih
            wih = s_in.reshape(-1, 1) * wih
            wih_p = wih                            # x keeps its native feature width
        else:                                      # input is the previous h tile
            wih_p = _pad_to(wih, G, G)
        whh_p = _pad_to(whh, G, G)
        args += [wih_p.astype(bf16), whh_p.astype(bf16), b.astype(f32)]

    # ---- GRU stack ----
    s_mid, t_mid = _bn_scale_shift(p["bn_mid"])
    for gi, (wih, whh, bih, bhh) in enumerate(p["gru"]):
        if gi == 0:                                # fold mid BN into layer 0
            bih = bih + t_mid @ wih
            wih = s_mid.reshape(-1, 1) * wih
        # input-side bias: (b_ih + b_hh) for r,z; b_ih only for n
        bih_c = jnp.concatenate(
            [bih[:, :2 * H] + bhh[:, :2 * H], bih[:, 2 * H:]], axis=1)
        # recurrent-side bias: only b_hh for n survives (it is gated by r)
        bhh_e = jnp.concatenate(
            [jnp.zeros((1, 2 * H), f32), bhh[:, 2 * H:]], axis=1)
        args += [_pad_to(wih, G, G).astype(bf16), _pad_to(whh, G, G).astype(bf16),
                 _pad_to(bih_c, 1, G).astype(f32), _pad_to(bhh_e, 1, G).astype(f32)]

    # ---- head: fold bn_final into fc1, zero-pad fc1 rows to the h tile width ----
    s_f, t_f = _bn_scale_shift(p["bn_final"])
    w1 = s_f.reshape(-1, 1) * p["fc1_w"]
    b1 = p["fc1_b"] + t_f @ p["fc1_w"]
    w1_p = jnp.pad(w1, ((0, G - w1.shape[0]), (0, 0)))
    out_size = p["fc2_w"].shape[1]
    if out_size == 1:
        w2 = p["fc2_w"].T.astype(f32)              # (1, H//2) row, VPU mul+reduce
    else:
        w2 = p["fc2_w"].astype(bf16)
    args += [w1_p.astype(bf16), b1.astype(f32), w2, p["fc2_b"].astype(f32)]
    return tuple(args), H, out_size


# ------------------------------- forward pass -------------------------------
@jax.jit
def pallas_forward(x_btf, p):
    B, T, F = x_btf.shape
    args, H, out_size = prepare_weights(p)
    Bp = max(8, ((B + 7) // 8) * 8)                # sublane-align per-step slices
    x_p = jnp.pad(x_btf, ((0, Bp - B), (0, 0), (0, 0)))
    # time-major flattening: rows [t*Bp, (t+1)*Bp) hold timestep t
    x2d = jnp.transpose(x_p, (1, 0, 2)).reshape(T * Bp, F).astype(jnp.bfloat16)
    kernel = functools.partial(_fused_kernel, T=T, B=Bp, H=H,
                               vpu_head=(out_size == 1))
    # TODO(synk): for large B/T/H add a batch-parallel grid axis (v7x second TC)
    # and a vmem_limit_bytes budget; unnecessary at these shapes.
    out = pl.pallas_call(
        kernel,
        out_shape=jax.ShapeDtypeStruct((Bp, out_size), jnp.float32),
    )(x2d, *args)
    return out[:B]


# ------------------------------- pure-JAX reference -------------------------------
def ref_forward(x_btf, p):
    B, T, F = x_btf.shape

    def bn(x2d, bn_p):
        g, b, m, v = bn_p
        return (x2d - m) * jax.lax.rsqrt(v + EPS) * g + b

    h_seq = bn(x_btf.reshape(B * T, F), p["bn_in"]).reshape(B, T, F)

    for (wih, whh, bias) in p["lstm"]:
        H = whh.shape[0]
        h = jnp.zeros((B, H)); c = jnp.zeros((B, H)); outs = []
        for t in range(T):
            gates = h_seq[:, t, :] @ wih + h @ whh + bias
            i = jax.nn.sigmoid(gates[:, :H])
            f = jax.nn.sigmoid(gates[:, H:2 * H])
            g_ = jnp.tanh(gates[:, 2 * H:3 * H])
            o = jax.nn.sigmoid(gates[:, 3 * H:])
            c = f * c + i * g_
            h = o * jnp.tanh(c)
            outs.append(h)
        h_seq = jnp.stack(outs, axis=1)

    Hl = h_seq.shape[-1]
    h_seq = bn(h_seq.reshape(B * T, Hl), p["bn_mid"]).reshape(B, T, Hl)

    for (wih, whh, bih, bhh) in p["gru"]:
        H = whh.shape[0]
        h = jnp.zeros((B, H)); outs = []
        for t in range(T):
            gi = h_seq[:, t, :] @ wih + bih
            gh = h @ whh + bhh
            r = jax.nn.sigmoid(gi[:, :H] + gh[:, :H])
            z = jax.nn.sigmoid(gi[:, H:2 * H] + gh[:, H:2 * H])
            n = jnp.tanh(gi[:, 2 * H:] + r * gh[:, 2 * H:])
            h = (1.0 - z) * n + z * h
            outs.append(h)
        h_seq = jnp.stack(outs, axis=1)

    last = h_seq[:, -1, :]
    y = bn(last, p["bn_final"])
    y = jnp.maximum(y @ p["fc1_w"] + p["fc1_b"], 0.0)
    return y @ p["fc2_w"] + p["fc2_b"]


# --------------------------------- parameter init ---------------------------------
def make_params(key, F, Hl, Hg, out_size, num_layers=2):
    keys = list(jax.random.split(key, 64))
    it = iter(keys)

    def u(shape, scale):
        return jax.random.uniform(next(it), shape, jnp.float32, -scale, scale)

    def bn_p(C):
        gamma = 1.0 + 0.1 * u((1, C), 1.0)
        beta = 0.1 * u((1, C), 1.0)
        mean = 0.05 * u((1, C), 1.0)
        var = 1.0 + 0.1 * jnp.abs(u((1, C), 1.0))
        return (gamma, beta, mean, var)

    p = {"bn_in": bn_p(F)}

    lstm, in_dim = [], F
    for _ in range(num_layers):
        s = 1.0 / np.sqrt(Hl)
        wih = u((in_dim, 4 * Hl), s)                  # transposed vs torch weight_ih
        whh = u((Hl, 4 * Hl), s)
        bias = u((1, 4 * Hl), s) + u((1, 4 * Hl), s)  # b_ih + b_hh combined
        lstm.append((wih, whh, bias))
        in_dim = Hl
    p["lstm"] = lstm
    p["bn_mid"] = bn_p(Hl)

    gru, in_dim = [], Hl
    for _ in range(num_layers):
        s = 1.0 / np.sqrt(Hg)
        gru.append((u((in_dim, 3 * Hg), s), u((Hg, 3 * Hg), s),
                    u((1, 3 * Hg), s), u((1, 3 * Hg), s)))
        in_dim = Hg
    p["gru"] = gru
    p["bn_final"] = bn_p(Hg)

    s1 = 1.0 / np.sqrt(Hg)
    p["fc1_w"] = u((Hg, Hg // 2), s1)
    p["fc1_b"] = u((1, Hg // 2), s1)
    s2 = 1.0 / np.sqrt(Hg // 2)
    p["fc2_w"] = u((Hg // 2, out_size), s2)
    p["fc2_b"] = u((1, out_size), s2)
    return p


if __name__ == "__main__":
    B, T, F = 4, 8, 16
    Hl = Hg = 32
    key = jax.random.PRNGKey(0)
    kx, kp = jax.random.split(key)
    x = jax.random.normal(kx, (B, T, F), jnp.float32)
    params = make_params(kp, F, Hl, Hg, out_size=1)

    out = jax.block_until_ready(pallas_forward(x, params))
    ref = jax.block_until_ready(ref_forward(x, params))

    assert out.shape == (B, 1), out.shape
    # bf16 MXU operands (f32 accumulation) -> slightly looser tolerance than pure f32
    np.testing.assert_allclose(np.asarray(out), np.asarray(ref),
                               rtol=2e-2, atol=1e-2)
    print("KERNEL_OK")
</pallas_src>

<mosaic_0001>
module attributes {stable_mosaic.version = 11 : i64} {
  func.func @_fused_kernel(%arg0: memref<64x16xbf16, #tpu.memory_space<vmem>>, %arg1: memref<16x128xbf16, #tpu.memory_space<vmem>>, %arg2: memref<128x128xbf16, #tpu.memory_space<vmem>>, %arg3: memref<1x128xf32, #tpu.memory_space<vmem>>, %arg4: memref<128x128xbf16, #tpu.memory_space<vmem>>, %arg5: memref<128x128xbf16, #tpu.memory_space<vmem>>, %arg6: memref<1x128xf32, #tpu.memory_space<vmem>>, %arg7: memref<128x128xbf16, #tpu.memory_space<vmem>>, %arg8: memref<128x128xbf16, #tpu.memory_space<vmem>>, %arg9: memref<1x128xf32, #tpu.memory_space<vmem>>, %arg10: memref<1x128xf32, #tpu.memory_space<vmem>>, %arg11: memref<128x128xbf16, #tpu.memory_space<vmem>>, %arg12: memref<128x128xbf16, #tpu.memory_space<vmem>>, %arg13: memref<1x128xf32, #tpu.memory_space<vmem>>, %arg14: memref<1x128xf32, #tpu.memory_space<vmem>>, %arg15: memref<128x16xbf16, #tpu.memory_space<vmem>>, %arg16: memref<1x16xf32, #tpu.memory_space<vmem>>, %arg17: memref<1x16xf32, #tpu.memory_space<vmem>>, %arg18: memref<1x1xf32, #tpu.memory_space<vmem>>, %arg19: memref<8x1xf32, #tpu.memory_space<vmem>>) attributes {dimension_semantics = [], scalar_prefetch = 0 : i64, scratch_operands = 0 : i64, tpu.core_type = #tpu.core_type<tc>} {
    %c0 = arith.constant 0 : index
    %c0_0 = arith.constant 0 : index
    %0 = vector.load %arg1[%c0, %c0_0] : memref<16x128xbf16, #tpu.memory_space<vmem>>, vector<16x128xbf16>
    %c0_1 = arith.constant 0 : index
    %c0_2 = arith.constant 0 : index
    %1 = vector.load %arg2[%c0_1, %c0_2] : memref<128x128xbf16, #tpu.memory_space<vmem>>, vector<128x128xbf16>
    %c0_3 = arith.constant 0 : index
    %c0_4 = arith.constant 0 : index
    %2 = vector.load %arg4[%c0_3, %c0_4] : memref<128x128xbf16, #tpu.memory_space<vmem>>, vector<128x128xbf16>
    %c0_5 = arith.constant 0 : index
    %c0_6 = arith.constant 0 : index
    %3 = vector.load %arg5[%c0_5, %c0_6] : memref<128x128xbf16, #tpu.memory_space<vmem>>, vector<128x128xbf16>
    %c0_7 = arith.constant 0 : index
    %c0_8 = arith.constant 0 : index
    %4 = vector.load %arg7[%c0_7, %c0_8] : memref<128x128xbf16, #tpu.memory_space<vmem>>, vector<128x128xbf16>
    %c0_9 = arith.constant 0 : index
    %c0_10 = arith.constant 0 : index
    %5 = vector.load %arg8[%c0_9, %c0_10] : memref<128x128xbf16, #tpu.memory_space<vmem>>, vector<128x128xbf16>
    %c0_11 = arith.constant 0 : index
    %c0_12 = arith.constant 0 : index
    %6 = vector.load %arg11[%c0_11, %c0_12] : memref<128x128xbf16, #tpu.memory_space<vmem>>, vector<128x128xbf16>
    %c0_13 = arith.constant 0 : index
    %c0_14 = arith.constant 0 : index
    %7 = vector.load %arg12[%c0_13, %c0_14] : memref<128x128xbf16, #tpu.memory_space<vmem>>, vector<128x128xbf16>
    %c0_15 = arith.constant 0 : index
    %c0_16 = arith.constant 0 : index
    %8 = vector.load %arg0[%c0_15, %c0_16] : memref<64x16xbf16, #tpu.memory_space<vmem>>, vector<64x16xbf16>
    %cst = arith.constant dense<0.000000e+00> : vector<64x128xf32>
    %9 = tpu.matmul %8, %0, %cst {dimension_numbers = #tpu.dot_dimension_numbers<[1], [0], [0], [1], [0, 0, 1, 1], [], []>} : vector<64x16xbf16>, vector<16x128xbf16>, vector<64x128xf32> -> vector<64x128xf32>
    %c0_17 = arith.constant 0 : index
    %c0_18 = arith.constant 0 : index
    %10 = vector.load %arg3[%c0_17, %c0_18] : memref<1x128xf32, #tpu.memory_space<vmem>>, vector<1x128xf32>
    %11 = vector.broadcast %10 : vector<1x128xf32> to vector<64x128xf32>
    %12 = arith.addf %9, %11 : vector<64x128xf32>
    %c0_19 = arith.constant 0 : index
    %c0_20 = arith.constant 0 : index
    %13 = vector.load %arg6[%c0_19, %c0_20] : memref<1x128xf32, #tpu.memory_space<vmem>>, vector<1x128xf32>
    %14 = vector.shape_cast %13 : vector<1x128xf32> to vector<1x128xf32>
    %15 = vector.broadcast %14 : vector<1x128xf32> to vector<8x128xf32>
    %c0_21 = arith.constant 0 : index
    %c0_22 = arith.constant 0 : index
    %16 = vector.load %arg9[%c0_21, %c0_22] : memref<1x128xf32, #tpu.memory_space<vmem>>, vector<1x128xf32>
    %17 = vector.shape_cast %16 : vector<1x128xf32> to vector<1x128xf32>
    %18 = vector.broadcast %17 : vector<1x128xf32> to vector<8x128xf32>
    %c0_23 = arith.constant 0 : index
    %c0_24 = arith.constant 0 : index
    %19 = vector.load %arg10[%c0_23, %c0_24] : memref<1x128xf32, #tpu.memory_space<vmem>>, vector<1x128xf32>
    %20 = vector.shape_cast %19 : vector<1x128xf32> to vector<1x128xf32>
    %21 = vector.broadcast %20 : vector<1x128xf32> to vector<8x128xf32>
    %c0_25 = arith.constant 0 : index
    %c0_26 = arith.constant 0 : index
    %22 = vector.load %arg13[%c0_25, %c0_26] : memref<1x128xf32, #tpu.memory_space<vmem>>, vector<1x128xf32>
    %23 = vector.shape_cast %22 : vector<1x128xf32> to vector<1x128xf32>
    %24 = vector.broadcast %23 : vector<1x128xf32> to vector<8x128xf32>
    %c0_27 = arith.constant 0 : index
    %c0_28 = arith.constant 0 : index
    %25 = vector.load %arg14[%c0_27, %c0_28] : memref<1x128xf32, #tpu.memory_space<vmem>>, vector<1x128xf32>
    %26 = vector.shape_cast %25 : vector<1x128xf32> to vector<1x128xf32>
    %27 = vector.broadcast %26 : vector<1x128xf32> to vector<8x128xf32>
    %cst_29 = arith.constant 0.000000e+00 : f32
    %28 = vector.broadcast %cst_29 : f32 to vector<8x128xf32>
    %cst_30 = arith.constant 0.000000e+00 : bf16
    %29 = vector.broadcast %cst_30 : bf16 to vector<8x128xbf16>
    %30 = vector.extract_strided_slice %12 {offsets = [0, 0], sizes = [8, 128], strides = [1, 1]} : vector<64x128xf32> to vector<8x128xf32>
    %cst_31 = arith.constant dense<0.000000e+00> : vector<8x128xf32>
    %31 = tpu.matmul %29, %1, %cst_31 {dimension_numbers = #tpu.dot_dimension_numbers<[1], [0], [0], [1], [0, 0, 1, 1], [], []>} : vector<8x128xbf16>, vector<128x128xbf16>, vector<8x128xf32> -> vector<8x128xf32>
    %32 = arith.addf %30, %31 : vector<8x128xf32>
    %cst_32 = arith.constant 5.000000e-01 : f32
    %33 = vector.broadcast %cst_32 : f32 to vector<8x128xf32>
    %34 = arith.mulf %33, %32 : vector<8x128xf32>
    %35 = math.tanh %34 : vector<8x128xf32>
    %cst_33 = arith.constant 5.000000e-01 : f32
    %36 = vector.broadcast %cst_33 : f32 to vector<8x128xf32>
    %37 = arith.mulf %36, %35 : vector<8x128xf32>
    %cst_34 = arith.constant 5.000000e-01 : f32
    %38 = vector.broadcast %cst_34 : f32 to vector<8x128xf32>
    %39 = arith.addf %37, %38 : vector<8x128xf32>
    %40 = math.tanh %32 : vector<8x128xf32>
    %c96_i32 = arith.constant 96 : i32
    %41 = tpu.dynamic_rotate %39 by %c96_i32 dim 1 : vector<8x128xf32>, i32 -> vector<8x128xf32>
    %42 = arith.mulf %41, %28 : vector<8x128xf32>
    %c64_i32 = arith.constant 64 : i32
    %43 = tpu.dynamic_rotate %40 by %c64_i32 dim 1 : vector<8x128xf32>, i32 -> vector<8x128xf32>
    %44 = arith.mulf %39, %43 : vector<8x128xf32>
    %45 = arith.addf %42, %44 : vector<8x128xf32>
    %c32_i32 = arith.constant 32 : i32
    %46 = tpu.dynamic_rotate %39 by %c32_i32 dim 1 : vector<8x128xf32>, i32 -> vector<8x128xf32>
    %47 = math.tanh %45 : vector<8x128xf32>
    %48 = arith.mulf %46, %47 : vector<8x128xf32>
    %49 = arith.truncf %48 : vector<8x128xf32> to vector<8x128xbf16>
    %cst_35 = arith.constant dense<0.000000e+00> : vector<8x128xf32>
    %50 = tpu.matmul %49, %2, %cst_35 {dimension_numbers = #tpu.dot_dimension_numbers<[1], [0], [0], [1], [0, 0, 1, 1], [], []>} : vector<8x128xbf16>, vector<128x128xbf16>, vector<8x128xf32> -> vector<8x128xf32>
    %cst_36 = arith.constant dense<0.000000e+00> : vector<8x128xf32>
    %51 = tpu.matmul %29, %3, %cst_36 {dimension_numbers = #tpu.dot_dimension_numbers<[1], [0], [0], [1], [0, 0, 1, 1], [], []>} : vector<8x128xbf16>, vector<128x128xbf16>, vector<8x128xf32> -> vector<8x128xf32>
    %52 = arith.addf %50, %51 : vector<8x128xf32>
    %53 = arith.addf %52, %15 : vector<8x128xf32>
    %cst_37 = arith.constant 5.000000e-01 : f32
    %54 = vector.broadcast %cst_37 : f32 to vector<8x128xf32>
    %55 = arith.mulf %54, %53 : vector<8x128xf32>
    %56 = math.tanh %55 : vector<8x128xf32>
    %cst_38 = arith.constant 5.000000e-01 : f32
    %57 = vector.broadcast %cst_38 : f32 to vector<8x128xf32>
    %58 = arith.mulf %57, %56 : vector<8x128xf32>
    %cst_39 = arith.constant 5.000000e-01 : f32
    %59 = vector.broadcast %cst_39 : f32 to vector<8x128xf32>
    %60 = arith.addf %58, %59 : vector<8x128xf32>
    %61 = math.tanh %53 : vector<8x128xf32>
    %c96_i32_40 = arith.constant 96 : i32
    %62 = tpu.dynamic_rotate %60 by %c96_i32_40 dim 1 : vector<8x128xf32>, i32 -> vector<8x128xf32>
    %63 = arith.mulf %62, %28 : vector<8x128xf32>
    %c64_i32_41 = arith.constant 64 : i32
    %64 = tpu.dynamic_rotate %61 by %c64_i32_41 dim 1 : vector<8x128xf32>, i32 -> vector<8x128xf32>
    %65 = arith.mulf %60, %64 : vector<8x128xf32>
    %66 = arith.addf %63, %65 : vector<8x128xf32>
    %c32_i32_42 = arith.constant 32 : i32
    %67 = tpu.dynamic_rotate %60 by %c32_i32_42 dim 1 : vector<8x128xf32>, i32 -> vector<8x128xf32>
    %68 = math.tanh %66 : vector<8x128xf32>
    %69 = arith.mulf %67, %68 : vector<8x128xf32>
    %70 = arith.truncf %69 : vector<8x128xf32> to vector<8x128xbf16>
    %cst_43 = arith.constant dense<0.000000e+00> : vector<8x128xf32>
    %71 = tpu.matmul %70, %4, %cst_43 {dimension_numbers = #tpu.dot_dimension_numbers<[1], [0], [0], [1], [0, 0, 1, 1], [], []>} : vector<8x128xbf16>, vector<128x128xbf16>, vector<8x128xf32> -> vector<8x128xf32>
    %72 = arith.addf %71, %18 : vector<8x128xf32>
    %cst_44 = arith.constant dense<0.000000e+00> : vector<8x128xf32>
    %73 = tpu.matmul %29, %5, %cst_44 {dimension_numbers = #tpu.dot_dimension_numbers<[1], [0], [0], [1], [0, 0, 1, 1], [], []>} : vector<8x128xbf16>, vector<128x128xbf16>, vector<8x128xf32> -> vector<8x128xf32>
    %74 = arith.addf %73, %21 : vector<8x128xf32>
    %75 = arith.addf %72, %74 : vector<8x128xf32>
    %cst_45 = arith.constant 5.000000e-01 : f32
    %76 = vector.broadcast %cst_45 : f32 to vector<8x128xf32>
    %77 = arith.mulf %76, %75 : vector<8x128xf32>
    %78 = math.tanh %77 : vector<8x128xf32>
    %cst_46 = arith.constant 5.000000e-01 : f32
    %79 = vector.broadcast %cst_46 : f32 to vector<8x128xf32>
    %80 = arith.mulf %79, %78 : vector<8x128xf32>
    %cst_47 = arith.constant 5.000000e-01 : f32
    %81 = vector.broadcast %cst_47 : f32 to vector<8x128xf32>
    %82 = arith.addf %80, %81 : vector<8x128xf32>
    %c64_i32_48 = arith.constant 64 : i32
    %83 = tpu.dynamic_rotate %82 by %c64_i32_48 dim 1 : vector<8x128xf32>, i32 -> vector<8x128xf32>
    %84 = arith.mulf %83, %74 : vector<8x128xf32>
    %85 = arith.addf %72, %84 : vector<8x128xf32>
    %86 = math.tanh %85 : vector<8x128xf32>
    %c96_i32_49 = arith.constant 96 : i32
    %87 = tpu.dynamic_rotate %82 by %c96_i32_49 dim 1 : vector<8x128xf32>, i32 -> vector<8x128xf32>
    %cst_50 = arith.constant 1.000000e+00 : f32
    %88 = vector.broadcast %cst_50 : f32 to vector<8x128xf32>
    %89 = arith.subf %88, %87 : vector<8x128xf32>
    %c64_i32_51 = arith.constant 64 : i32
    %90 = tpu.dynamic_rotate %86 by %c64_i32_51 dim 1 : vector<8x128xf32>, i32 -> vector<8x128xf32>
    %91 = arith.mulf %89, %90 : vector<8x128xf32>
    %92 = arith.mulf %87, %28 : vector<8x128xf32>
    %93 = arith.addf %91, %92 : vector<8x128xf32>
    %94 = arith.truncf %93 : vector<8x128xf32> to vector<8x128xbf16>
    %cst_52 = arith.constant dense<0.000000e+00> : vector<8x128xf32>
    %95 = tpu.matmul %94, %6, %cst_52 {dimension_numbers = #tpu.dot_dimension_numbers<[1], [0], [0], [1], [0, 0, 1, 1], [], []>} : vector<8x128xbf16>, vector<128x128xbf16>, vector<8x128xf32> -> vector<8x128xf32>
    %96 = arith.addf %95, %24 : vector<8x128xf32>
    %cst_53 = arith.constant dense<0.000000e+00> : vector<8x128xf32>
    %97 = tpu.matmul %29, %7, %cst_53 {dimension_numbers = #tpu.dot_dimension_numbers<[1], [0], [0], [1], [0, 0, 1, 1], [], []>} : vector<8x128xbf16>, vector<128x128xbf16>, vector<8x128xf32> -> vector<8x128xf32>
    %98 = arith.addf %97, %27 : vector<8x128xf32>
    %99 = arith.addf %96, %98 : vector<8x128xf32>
    %cst_54 = arith.constant 5.000000e-01 : f32
    %100 = vector.broadcast %cst_54 : f32 to vector<8x128xf32>
    %101 = arith.mulf %100, %99 : vector<8x128xf32>
    %102 = math.tanh %101 : vector<8x128xf32>
    %cst_55 = arith.constant 5.000000e-01 : f32
    %103 = vector.broadcast %cst_55 : f32 to vector<8x128xf32>
    %104 = arith.mulf %103, %102 : vector<8x128xf32>
    %cst_56 = arith.constant 5.000000e-01 : f32
    %105 = vector.broadcast %cst_56 : f32 to vector<8x128xf32>
    %106 = arith.addf %104, %105 : vector<8x128xf32>
    %c64_i32_57 = arith.constant 64 : i32
    %107 = tpu.dynamic_rotate %106 by %c64_i32_57 dim 1 : vector<8x128xf32>, i32 -> vector<8x128xf32>
    %108 = arith.mulf %107, %98 : vector<8x128xf32>
    %109 = arith.addf %96, %108 : vector<8x128xf32>
    %110 = math.tanh %109 : vector<8x128xf32>
    %c96_i32_58 = arith.constant 96 : i32
    %111 = tpu.dynamic_rotate %106 by %c96_i32_58 dim 1 : vector<8x128xf32>, i32 -> vector<8x128xf32>
    %cst_59 = arith.constant 1.000000e+00 : f32
    %112 = vector.broadcast %cst_59 : f32 to vector<8x128xf32>
    %113 = arith.subf %112, %111 : vector<8x128xf32>
    %c64_i32_60 = arith.constant 64 : i32
    %114 = tpu.dynamic_rotate %110 by %c64_i32_60 dim 1 : vector<8x128xf32>, i32 -> vector<8x128xf32>
    %115 = arith.mulf %113, %114 : vector<8x128xf32>
    %116 = arith.mulf %111, %28 : vector<8x128xf32>
    %117 = arith.addf %115, %116 : vector<8x128xf32>
    %118 = arith.truncf %117 : vector<8x128xf32> to vector<8x128xbf16>
    %119 = vector.extract_strided_slice %12 {offsets = [8, 0], sizes = [8, 128], strides = [1, 1]} : vector<64x128xf32> to vector<8x128xf32>
    %cst_61 = arith.constant dense<0.000000e+00> : vector<8x128xf32>
    %120 = tpu.matmul %49, %1, %cst_61 {dimension_numbers = #tpu.dot_dimension_numbers<[1], [0], [0], [1], [0, 0, 1, 1], [], []>} : vector<8x128xbf16>, vector<128x128xbf16>, vector<8x128xf32> -> vector<8x128xf32>
    %121 = arith.addf %119, %120 : vector<8x128xf32>
    %cst_62 = arith.constant 5.000000e-01 : f32
    %122 = vector.broadcast %cst_62 : f32 to vector<8x128xf32>
    %123 = arith.mulf %122, %121 : vector<8x128xf32>
    %124 = math.tanh %123 : vector<8x128xf32>
    %cst_63 = arith.constant 5.000000e-01 : f32
    %125 = vector.broadcast %cst_63 : f32 to vector<8x128xf32>
    %126 = arith.mulf %125, %124 : vector<8x128xf32>
    %cst_64 = arith.constant 5.000000e-01 : f32
    %127 = vector.broadcast %cst_64 : f32 to vector<8x128xf32>
    %128 = arith.addf %126, %127 : vector<8x128xf32>
    %129 = math.tanh %121 : vector<8x128xf32>
    %c96_i32_65 = arith.constant 96 : i32
    %130 = tpu.dynamic_rotate %128 by %c96_i32_65 dim 1 : vector<8x128xf32>, i32 -> vector<8x128xf32>
    %131 = arith.mulf %130, %45 : vector<8x128xf32>
    %c64_i32_66 = arith.constant 64 : i32
    %132 = tpu.dynamic_rotate %129 by %c64_i32_66 dim 1 : vector<8x128xf32>, i32 -> vector<8x128xf32>
    %133 = arith.mulf %128, %132 : vector<8x128xf32>
    %134 = arith.addf %131, %133 : vector<8x128xf32>
    %c32_i32_67 = arith.constant 32 : i32
    %135 = tpu.dynamic_rotate %128 by %c32_i32_67 dim 1 : vector<8x128xf32>, i32 -> vector<8x128xf32>
    %136 = math.tanh %134 : vector<8x128xf32>
    %137 = arith.mulf %135, %136 : vector<8x128xf32>
    %138 = arith.truncf %137 : vector<8x128xf32> to vector<8x128xbf16>
    %cst_68 = arith.constant dense<0.000000e+00> : vector<8x128xf32>
    %139 = tpu.matmul %138, %2, %cst_68 {dimension_numbers = #tpu.dot_dimension_numbers<[1], [0], [0], [1], [0, 0, 1, 1], [], []>} : vector<8x128xbf16>, vector<128x128xbf16>, vector<8x128xf32> -> vector<8x128xf32>
    %cst_69 = arith.constant dense<0.000000e+00> : vector<8x128xf32>
    %140 = tpu.matmul %70, %3, %cst_69 {dimension_numbers = #tpu.dot_dimension_numbers<[1], [0], [0], [1], [0, 0, 1, 1], [], []>} : vector<8x128xbf16>, vector<128x128xbf16>, vector<8x128xf32> -> vector<8x128xf32>
    %141 = arith.addf %139, %140 : vector<8x128xf32>
    %142 = arith.addf %141, %15 : vector<8x128xf32>
    %cst_70 = arith.constant 5.000000e-01 : f32
    %143 = vector.broadcast %cst_70 : f32 to vector<8x128xf32>
    %144 = arith.mulf %143, %142 : vector<8x128xf32>
    %145 = math.tanh %144 : vector<8x128xf32>
    %cst_71 = arith.constant 5.000000e-01 : f32
    %146 = vector.broadcast %cst_71 : f32 to vector<8x128xf32>
    %147 = arith.mulf %146, %145 : vector<8x128xf32>
    %cst_72 = arith.constant 5.000000e-01 : f32
    %148 = vector.broadcast %cst_72 : f32 to vector<8x128xf32>
    %149 = arith.addf %147, %148 : vector<8x128xf32>
    %150 = math.tanh %142 : vector<8x128xf32>
    %c96_i32_73 = arith.constant 96 : i32
    %151 = tpu.dynamic_rotate %149 by %c96_i32_73 dim 1 : vector<8x128xf32>, i32 -> vector<8x128xf32>
    %152 = arith.mulf %151, %66 : vector<8x128xf32>
    %c64_i32_74 = arith.constant 64 : i32
    %153 = tpu.dynamic_rotate %150 by %c64_i32_74 dim 1 : vector<8x128xf32>, i32 -> vector<8x128xf32>
    %154 = arith.mulf %149, %153 : vector<8x128xf32>
    %155 = arith.addf %152, %154 : vector<8x128xf32>
    %c32_i32_75 = arith.constant 32 : i32
    %156 = tpu.dynamic_rotate %149 by %c32_i32_75 dim 1 : vector<8x128xf32>, i32 -> vector<8x128xf32>
    %157 = math.tanh %155 : vector<8x128xf32>
    %158 = arith.mulf %156, %157 : vector<8x128xf32>
    %159 = arith.truncf %158 : vector<8x128xf32> to vector<8x128xbf16>
    %cst_76 = arith.constant dense<0.000000e+00> : vector<8x128xf32>
    %160 = tpu.matmul %159, %4, %cst_76 {dimension_numbers = #tpu.dot_dimension_numbers<[1], [0], [0], [1], [0, 0, 1, 1], [], []>} : vector<8x128xbf16>, vector<128x128xbf16>, vector<8x128xf32> -> vector<8x128xf32>
    %161 = arith.addf %160, %18 : vector<8x128xf32>
    %cst_77 = arith.constant dense<0.000000e+00> : vector<8x128xf32>
    %162 = tpu.matmul %94, %5, %cst_77 {dimension_numbers = #tpu.dot_dimension_numbers<[1], [0], [0], [1], [0, 0, 1, 1], [], []>} : vector<8x128xbf16>, vector<128x128xbf16>, vector<8x128xf32> -> vector<8x128xf32>
    %163 = arith.addf %162, %21 : vector<8x128xf32>
    %164 = arith.addf %161, %163 : vector<8x128xf32>
    %cst_78 = arith.constant 5.000000e-01 : f32
    %165 = vector.broadcast %cst_78 : f32 to vector<8x128xf32>
    %166 = arith.mulf %165, %164 : vector<8x128xf32>
    %167 = math.tanh %166 : vector<8x128xf32>
    %cst_79 = arith.constant 5.000000e-01 : f32
    %168 = vector.broadcast %cst_79 : f32 to vector<8x128xf32>
    %169 = arith.mulf %168, %167 : vector<8x128xf32>
    %cst_80 = arith.constant 5.000000e-01 : f32
    %170 = vector.broadcast %cst_80 : f32 to vector<8x128xf32>
    %171 = arith.addf %169, %170 : vector<8x128xf32>
    %c64_i32_81 = arith.constant 64 : i32
    %172 = tpu.dynamic_rotate %171 by %c64_i32_81 dim 1 : vector<8x128xf32>, i32 -> vector<8x128xf32>
    %173 = arith.mulf %172, %163 : vector<8x128xf32>
    %174 = arith.addf %161, %173 : vector<8x128xf32>
    %175 = math.tanh %174 : vector<8x128xf32>
    %c96_i32_82 = arith.constant 96 : i32
    %176 = tpu.dynamic_rotate %171 by %c96_i32_82 dim 1 : vector<8x128xf32>, i32 -> vector<8x128xf32>
    %cst_83 = arith.constant 1.000000e+00 : f32
    %177 = vector.broadcast %cst_83 : f32 to vector<8x128xf32>
    %178 = arith.subf %177, %176 : vector<8x128xf32>
    %c64_i32_84 = arith.constant 64 : i32
    %179 = tpu.dynamic_rotate %175 by %c64_i32_84 dim 1 : vector<8x128xf32>, i32 -> vector<8x128xf32>
    %180 = arith.mulf %178, %179 : vector<8x128xf32>
    %181 = arith.mulf %176, %93 : vector<8x128xf32>
    %182 = arith.addf %180, %181 : vector<8x128xf32>
    %183 = arith.truncf %182 : vector<8x128xf32> to vector<8x128xbf16>
    %cst_85 = arith.constant dense<0.000000e+00> : vector<8x128xf32>
    %184 = tpu.matmul %183, %6, %cst_85 {dimension_numbers = #tpu.dot_dimension_numbers<[1], [0], [0], [1], [0, 0, 1, 1], [], []>} : vector<8x128xbf16>, vector<128x128xbf16>, vector<8x128xf32> -> vector<8x128xf32>
    %185 = arith.addf %184, %24 : vector<8x128xf32>
    %cst_86 = arith.constant dense<0.000000e+00> : vector<8x128xf32>
    %186 = tpu.matmul %118, %7, %cst_86 {dimension_numbers = #tpu.dot_dimension_numbers<[1], [0], [0], [1], [0, 0, 1, 1], [], []>} : vector<8x128xbf16>, vector<128x128xbf16>, vector<8x128xf32> -> vector<8x128xf32>
    %187 = arith.addf %186, %27 : vector<8x128xf32>
    %188 = arith.addf %185, %187 : vector<8x128xf32>
    %cst_87 = arith.constant 5.000000e-01 : f32
    %189 = vector.broadcast %cst_87 : f32 to vector<8x128xf32>
    %190 = arith.mulf %189, %188 : vector<8x128xf32>
    %191 = math.tanh %190 : vector<8x128xf32>
    %cst_88 = arith.constant 5.000000e-01 : f32
    %192 = vector.broadcast %cst_88 : f32 to vector<8x128xf32>
    %193 = arith.mulf %192, %191 : vector<8x128xf32>
    %cst_89 = arith.constant 5.000000e-01 : f32
    %194 = vector.broadcast %cst_89 : f32 to vector<8x128xf32>
    %195 = arith.addf %193, %194 : vector<8x128xf32>
    %c64_i32_90 = arith.constant 64 : i32
    %196 = tpu.dynamic_rotate %195 by %c64_i32_90 dim 1 : vector<8x128xf32>, i32 -> vector<8x128xf32>
    %197 = arith.mulf %196, %187 : vector<8x128xf32>
    %198 = arith.addf %185, %197 : vector<8x128xf32>
    %199 = math.tanh %198 : vector<8x128xf32>
    %c96_i32_91 = arith.constant 96 : i32
    %200 = tpu.dynamic_rotate %195 by %c96_i32_91 dim 1 : vector<8x128xf32>, i32 -> vector<8x128xf32>
    %cst_92 = arith.constant 1.000000e+00 : f32
    %201 = vector.broadcast %cst_92 : f32 to vector<8x128xf32>
    %202 = arith.subf %201, %200 : vector<8x128xf32>
    %c64_i32_93 = arith.constant 64 : i32
    %203 = tpu.dynamic_rotate %199 by %c64_i32_93 dim 1 : vector<8x128xf32>, i32 -> vector<8x128xf32>
    %204 = arith.mulf %202, %203 : vector<8x128xf32>
    %205 = arith.mulf %200, %117 : vector<8x128xf32>
    %206 = arith.addf %204, %205 : vector<8x128xf32>
    %207 = arith.truncf %206 : vector<8x128xf32> to vector<8x128xbf16>
    %208 = vector.extract_strided_slice %12 {offsets = [16, 0], sizes = [8, 128], strides = [1, 1]} : vector<64x128xf32> to vector<8x128xf32>
    %cst_94 = arith.constant dense<0.000000e+00> : vector<8x128xf32>
    %209 = tpu.matmul %138, %1, %cst_94 {dimension_numbers = #tpu.dot_dimension_numbers<[1], [0], [0], [1], [0, 0, 1, 1], [], []>} : vector<8x128xbf16>, vector<128x128xbf16>, vector<8x128xf32> -> vector<8x128xf32>
    %210 = arith.addf %208, %209 : vector<8x128xf32>
    %cst_95 = arith.constant 5.000000e-01 : f32
    %211 = vector.broadcast %cst_95 : f32 to vector<8x128xf32>
    %212 = arith.mulf %211, %210 : vector<8x128xf32>
    %213 = math.tanh %212 : vector<8x128xf32>
    %cst_96 = arith.constant 5.000000e-01 : f32
    %214 = vector.broadcast %cst_96 : f32 to vector<8x128xf32>
    %215 = arith.mulf %214, %213 : vector<8x128xf32>
    %cst_97 = arith.constant 5.000000e-01 : f32
    %216 = vector.broadcast %cst_97 : f32 to vector<8x128xf32>
    %217 = arith.addf %215, %216 : vector<8x128xf32>
    %218 = math.tanh %210 : vector<8x128xf32>
    %c96_i32_98 = arith.constant 96 : i32
    %219 = tpu.dynamic_rotate %217 by %c96_i32_98 dim 1 : vector<8x128xf32>, i32 -> vector<8x128xf32>
    %220 = arith.mulf %219, %134 : vector<8x128xf32>
    %c64_i32_99 = arith.constant 64 : i32
    %221 = tpu.dynamic_rotate %218 by %c64_i32_99 dim 1 : vector<8x128xf32>, i32 -> vector<8x128xf32>
    %222 = arith.mulf %217, %221 : vector<8x128xf32>
    %223 = arith.addf %220, %222 : vector<8x128xf32>
    %c32_i32_100 = arith.constant 32 : i32
    %224 = tpu.dynamic_rotate %217 by %c32_i32_100 dim 1 : vector<8x128xf32>, i32 -> vector<8x128xf32>
    %225 = math.tanh %223 : vector<8x128xf32>
    %226 = arith.mulf %224, %225 : vector<8x128xf32>
    %227 = arith.truncf %226 : vector<8x128xf32> to vector<8x128xbf16>
    %cst_101 = arith.constant dense<0.000000e+00> : vector<8x128xf32>
    %228 = tpu.matmul %227, %2, %cst_101 {dimension_numbers = #tpu.dot_dimension_numbers<[1], [0], [0], [1], [0, 0, 1, 1], [], []>} : vector<8x128xbf16>, vector<128x128xbf16>, vector<8x128xf32> -> vector<8x128xf32>
    %cst_102 = arith.constant dense<0.000000e+00> : vector<8x128xf32>
    %229 = tpu.matmul %159, %3, %cst_102 {dimension_numbers = #tpu.dot_dimension_numbers<[1], [0], [0], [1], [0, 0, 1, 1], [], []>} : vector<8x128xbf16>, vector<128x128xbf16>, vector<8x128xf32> -> vector<8x128xf32>
    %230 = arith.addf %228, %229 : vector<8x128xf32>
    %231 = arith.addf %230, %15 : vector<8x128xf32>
    %cst_103 = arith.constant 5.000000e-01 : f32
    %232 = vector.broadcast %cst_103 : f32 to vector<8x128xf32>
    %233 = arith.mulf %232, %231 : vector<8x128xf32>
    %234 = math.tanh %233 : vector<8x128xf32>
    %cst_104 = arith.constant 5.000000e-01 : f32
    %235 = vector.broadcast %cst_104 : f32 to vector<8x128xf32>
    %236 = arith.mulf %235, %234 : vector<8x128xf32>
    %cst_105 = arith.constant 5.000000e-01 : f32
    %237 = vector.broadcast %cst_105 : f32 to vector<8x128xf32>
    %238 = arith.addf %236, %237 : vector<8x128xf32>
    %239 = math.tanh %231 : vector<8x128xf32>
    %c96_i32_106 = arith.constant 96 : i32
    %240 = tpu.dynamic_rotate %238 by %c96_i32_106 dim 1 : vector<8x128xf32>, i32 -> vector<8x128xf32>
    %241 = arith.mulf %240, %155 : vector<8x128xf32>
    %c64_i32_107 = arith.constant 64 : i32
    %242 = tpu.dynamic_rotate %239 by %c64_i32_107 dim 1 : vector<8x128xf32>, i32 -> vector<8x128xf32>
    %243 = arith.mulf %238, %242 : vector<8x128xf32>
    %244 = arith.addf %241, %243 : vector<8x128xf32>
    %c32_i32_108 = arith.constant 32 : i32
    %245 = tpu.dynamic_rotate %238 by %c32_i32_108 dim 1 : vector<8x128xf32>, i32 -> vector<8x128xf32>
    %246 = math.tanh %244 : vector<8x128xf32>
    %247 = arith.mulf %245, %246 : vector<8x128xf32>
    %248 = arith.truncf %247 : vector<8x128xf32> to vector<8x128xbf16>
    %cst_109 = arith.constant dense<0.000000e+00> : vector<8x128xf32>
    %249 = tpu.matmul %248, %4, %cst_109 {dimension_numbers = #tpu.dot_dimension_numbers<[1], [0], [0], [1], [0, 0, 1, 1], [], []>} : vector<8x128xbf16>, vector<128x128xbf16>, vector<8x128xf32> -> vector<8x128xf32>
    %250 = arith.addf %249, %18 : vector<8x128xf32>
    %cst_110 = arith.constant dense<0.000000e+00> : vector<8x128xf32>
    %251 = tpu.matmul %183, %5, %cst_110 {dimension_numbers = #tpu.dot_dimension_numbers<[1], [0], [0], [1], [0, 0, 1, 1], [], []>} : vector<8x128xbf16>, vector<128x128xbf16>, vector<8x128xf32> -> vector<8x128xf32>
    %252 = arith.addf %251, %21 : vector<8x128xf32>
    %253 = arith.addf %250, %252 : vector<8x128xf32>
    %cst_111 = arith.constant 5.000000e-01 : f32
    %254 = vector.broadcast %cst_111 : f32 to vector<8x128xf32>
    %255 = arith.mulf %254, %253 : vector<8x128xf32>
    %256 = math.tanh %255 : vector<8x128xf32>
    %cst_112 = arith.constant 5.000000e-01 : f32
    %257 = vector.broadcast %cst_112 : f32 to vector<8x128xf32>
    %258 = arith.mulf %257, %256 : vector<8x128xf32>
    %cst_113 = arith.constant 5.000000e-01 : f32
    %259 = vector.broadcast %cst_113 : f32 to vector<8x128xf32>
    %260 = arith.addf %258, %259 : vector<8x128xf32>
    %c64_i32_114 = arith.constant 64 : i32
    %261 = tpu.dynamic_rotate %260 by %c64_i32_114 dim 1 : vector<8x128xf32>, i32 -> vector<8x128xf32>
    %262 = arith.mulf %261, %252 : vector<8x128xf32>
    %263 = arith.addf %250, %262 : vector<8x128xf32>
    %264 = math.tanh %263 : vector<8x128xf32>
    %c96_i32_115 = arith.constant 96 : i32
    %265 = tpu.dynamic_rotate %260 by %c96_i32_115 dim 1 : vector<8x128xf32>, i32 -> vector<8x128xf32>
    %cst_116 = arith.constant 1.000000e+00 : f32
    %266 = vector.broadcast %cst_116 : f32 to vector<8x128xf32>
    %267 = arith.subf %266, %265 : vector<8x128xf32>
    %c64_i32_117 = arith.constant 64 : i32
    %268 = tpu.dynamic_rotate %264 by %c64_i32_117 dim 1 : vector<8x128xf32>, i32 -> vector<8x128xf32>
    %269 = arith.mulf %267, %268 : vector<8x128xf32>
    %270 = arith.mulf %265, %182 : vector<8x128xf32>
    %271 = arith.addf %269, %270 : vector<8x128xf32>
    %272 = arith.truncf %271 : vector<8x128xf32> to vector<8x128xbf16>
    %cst_118 = arith.constant dense<0.000000e+00> : vector<8x128xf32>
    %273 = tpu.matmul %272, %6, %cst_118 {dimension_numbers = #tpu.dot_dimension_numbers<[1], [0], [0], [1], [0, 0, 1, 1], [], []>} : vector<8x128xbf16>, vector<128x128xbf16>, vector<8x128xf32> -> vector<8x128xf32>
    %274 = arith.addf %273, %24 : vector<8x128xf32>
    %cst_119 = arith.constant dense<0.000000e+00> : vector<8x128xf32>
    %275 = tpu.matmul %207, %7, %cst_119 {dimension_numbers = #tpu.dot_dimension_numbers<[1], [0], [0], [1], [0, 0, 1, 1], [], []>} : vector<8x128xbf16>, vector<128x128xbf16>, vector<8x128xf32> -> vector<8x128xf32>
    %276 = arith.addf %275, %27 : vector<8x128xf32>
    %277 = arith.addf %274, %276 : vector<8x128xf32>
    %cst_120 = arith.constant 5.000000e-01 : f32
    %278 = vector.broadcast %cst_120 : f32 to vector<8x128xf32>
    %279 = arith.mulf %278, %277 : vector<8x128xf32>
    %280 = math.tanh %279 : vector<8x128xf32>
    %cst_121 = arith.constant 5.000000e-01 : f32
    %281 = vector.broadcast %cst_121 : f32 to vector<8x128xf32>
    %282 = arith.mulf %281, %280 : vector<8x128xf32>
    %cst_122 = arith.constant 5.000000e-01 : f32
    %283 = vector.broadcast %cst_122 : f32 to vector<8x128xf32>
    %284 = arith.addf %282, %283 : vector<8x128xf32>
    %c64_i32_123 = arith.constant 64 : i32
    %285 = tpu.dynamic_rotate %284 by %c64_i32_123 dim 1 : vector<8x128xf32>, i32 -> vector<8x128xf32>
    %286 = arith.mulf %285, %276 : vector<8x128xf32>
    %287 = arith.addf %274, %286 : vector<8x128xf32>
    %288 = math.tanh %287 : vector<8x128xf32>
    %c96_i32_124 = arith.constant 96 : i32
    %289 = tpu.dynamic_rotate %284 by %c96_i32_124 dim 1 : vector<8x128xf32>, i32 -> vector<8x128xf32>
    %cst_125 = arith.constant 1.000000e+00 : f32
    %290 = vector.broadcast %cst_125 : f32 to vector<8x128xf32>
    %291 = arith.subf %290, %289 : vector<8x128xf32>
    %c64_i32_126 = arith.constant 64 : i32
    %292 = tpu.dynamic_rotate %288 by %c64_i32_126 dim 1 : vector<8x128xf32>, i32 -> vector<8x128xf32>
    %293 = arith.mulf %291, %292 : vector<8x128xf32>
    %294 = arith.mulf %289, %206 : vector<8x128xf32>
    %295 = arith.addf %293, %294 : vector<8x128xf32>
    %296 = arith.truncf %295 : vector<8x128xf32> to vector<8x128xbf16>
    %297 = vector.extract_strided_slice %12 {offsets = [24, 0], sizes = [8, 128], strides = [1, 1]} : vector<64x128xf32> to vector<8x128xf32>
    %cst_127 = arith.constant dense<0.000000e+00> : vector<8x128xf32>
    %298 = tpu.matmul %227, %1, %cst_127 {dimension_numbers = #tpu.dot_dimension_numbers<[1], [0], [0], [1], [0, 0, 1, 1], [], []>} : vector<8x128xbf16>, vector<128x128xbf16>, vector<8x128xf32> -> vector<8x128xf32>
    %299 = arith.addf %297, %298 : vector<8x128xf32>
    %cst_128 = arith.constant 5.000000e-01 : f32
    %300 = vector.broadcast %cst_128 : f32 to vector<8x128xf32>
    %301 = arith.mulf %300, %299 : vector<8x128xf32>
    %302 = math.tanh %301 : vector<8x128xf32>
    %cst_129 = arith.constant 5.000000e-01 : f32
    %303 = vector.broadcast %cst_129 : f32 to vector<8x128xf32>
    %304 = arith.mulf %303, %302 : vector<8x128xf32>
    %cst_130 = arith.constant 5.000000e-01 : f32
    %305 = vector.broadcast %cst_130 : f32 to vector<8x128xf32>
    %306 = arith.addf %304, %305 : vector<8x128xf32>
    %307 = math.tanh %299 : vector<8x128xf32>
    %c96_i32_131 = arith.constant 96 : i32
    %308 = tpu.dynamic_rotate %306 by %c96_i32_131 dim 1 : vector<8x128xf32>, i32 -> vector<8x128xf32>
    %309 = arith.mulf %308, %223 : vector<8x128xf32>
    %c64_i32_132 = arith.constant 64 : i32
    %310 = tpu.dynamic_rotate %307 by %c64_i32_132 dim 1 : vector<8x128xf32>, i32 -> vector<8x128xf32>
    %311 = arith.mulf %306, %310 : vector<8x128xf32>
    %312 = arith.addf %309, %311 : vector<8x128xf32>
    %c32_i32_133 = arith.constant 32 : i32
    %313 = tpu.dynamic_rotate %306 by %c32_i32_133 dim 1 : vector<8x128xf32>, i32 -> vector<8x128xf32>
    %314 = math.tanh %312 : vector<8x128xf32>
    %315 = arith.mulf %313, %314 : vector<8x128xf32>
    %316 = arith.truncf %315 : vector<8x128xf32> to vector<8x128xbf16>
    %cst_134 = arith.constant dense<0.000000e+00> : vector<8x128xf32>
    %317 = tpu.matmul %316, %2, %cst_134 {dimension_numbers = #tpu.dot_dimension_numbers<[1], [0], [0], [1], [0, 0, 1, 1], [], []>} : vector<8x128xbf16>, vector<128x128xbf16>, vector<8x128xf32> -> vector<8x128xf32>
    %cst_135 = arith.constant dense<0.000000e+00> : vector<8x128xf32>
    %318 = tpu.matmul %248, %3, %cst_135 {dimension_numbers = #tpu.dot_dimension_numbers<[1], [0], [0], [1], [0, 0, 1, 1], [], []>} : vector<8x128xbf16>, vector<128x128xbf16>, vector<8x128xf32> -> vector<8x128xf32>
    %319 = arith.addf %317, %318 : vector<8x128xf32>
    %320 = arith.addf %319, %15 : vector<8x128xf32>
    %cst_136 = arith.constant 5.000000e-01 : f32
    %321 = vector.broadcast %cst_136 : f32 to vector<8x128xf32>
    %322 = arith.mulf %321, %320 : vector<8x128xf32>
    %323 = math.tanh %322 : vector<8x128xf32>
    %cst_137 = arith.constant 5.000000e-01 : f32
    %324 = vector.broadcast %cst_137 : f32 to vector<8x128xf32>
    %325 = arith.mulf %324, %323 : vector<8x128xf32>
    %cst_138 = arith.constant 5.000000e-01 : f32
    %326 = vector.broadcast %cst_138 : f32 to vector<8x128xf32>
    %327 = arith.addf %325, %326 : vector<8x128xf32>
    %328 = math.tanh %320 : vector<8x128xf32>
    %c96_i32_139 = arith.constant 96 : i32
    %329 = tpu.dynamic_rotate %327 by %c96_i32_139 dim 1 : vector<8x128xf32>, i32 -> vector<8x128xf32>
    %330 = arith.mulf %329, %244 : vector<8x128xf32>
    %c64_i32_140 = arith.constant 64 : i32
    %331 = tpu.dynamic_rotate %328 by %c64_i32_140 dim 1 : vector<8x128xf32>, i32 -> vector<8x128xf32>
    %332 = arith.mulf %327, %331 : vector<8x128xf32>
    %333 = arith.addf %330, %332 : vector<8x128xf32>
    %c32_i32_141 = arith.constant 32 : i32
    %334 = tpu.dynamic_rotate %327 by %c32_i32_141 dim 1 : vector<8x128xf32>, i32 -> vector<8x128xf32>
    %335 = math.tanh %333 : vector<8x128xf32>
    %336 = arith.mulf %334, %335 : vector<8x128xf32>
    %337 = arith.truncf %336 : vector<8x128xf32> to vector<8x128xbf16>
    %cst_142 = arith.constant dense<0.000000e+00> : vector<8x128xf32>
    %338 = tpu.matmul %337, %4, %cst_142 {dimension_numbers = #tpu.dot_dimension_numbers<[1], [0], [0], [1], [0, 0, 1, 1], [], []>} : vector<8x128xbf16>, vector<128x128xbf16>, vector<8x128xf32> -> vector<8x128xf32>
    %339 = arith.addf %338, %18 : vector<8x128xf32>
    %cst_143 = arith.constant dense<0.000000e+00> : vector<8x128xf32>
    %340 = tpu.matmul %272, %5, %cst_143 {dimension_numbers = #tpu.dot_dimension_numbers<[1], [0], [0], [1], [0, 0, 1, 1], [], []>} : vector<8x128xbf16>, vector<128x128xbf16>, vector<8x128xf32> -> vector<8x128xf32>
    %341 = arith.addf %340, %21 : vector<8x128xf32>
    %342 = arith.addf %339, %341 : vector<8x128xf32>
    %cst_144 = arith.constant 5.000000e-01 : f32
    %343 = vector.broadcast %cst_144 : f32 to vector<8x128xf32>
    %344 = arith.mulf %343, %342 : vector<8x128xf32>
    %345 = math.tanh %344 : vector<8x128xf32>
    %cst_145 = arith.constant 5.000000e-01 : f32
    %346 = vector.broadcast %cst_145 : f32 to vector<8x128xf32>
    %347 = arith.mulf %346, %345 : vector<8x128xf32>
    %cst_146 = arith.constant 5.000000e-01 : f32
    %348 = vector.broadcast %cst_146 : f32 to vector<8x128xf32>
    %349 = arith.addf %347, %348 : vector<8x128xf32>
    %c64_i32_147 = arith.constant 64 : i32
    %350 = tpu.dynamic_rotate %349 by %c64_i32_147 dim 1 : vector<8x128xf32>, i32 -> vector<8x128xf32>
    %351 = arith.mulf %350, %341 : vector<8x128xf32>
    %352 = arith.addf %339, %351 : vector<8x128xf32>
    %353 = math.tanh %352 : vector<8x128xf32>
    %c96_i32_148 = arith.constant 96 : i32
    %354 = tpu.dynamic_rotate %349 by %c96_i32_148 dim 1 : vector<8x128xf32>, i32 -> vector<8x128xf32>
    %cst_149 = arith.constant 1.000000e+00 : f32
    %355 = vector.broadcast %cst_149 : f32 to vector<8x128xf32>
    %356 = arith.subf %355, %354 : vector<8x128xf32>
    %c64_i32_150 = arith.constant 64 : i32
    %357 = tpu.dynamic_rotate %353 by %c64_i32_150 dim 1 : vector<8x128xf32>, i32 -> vector<8x128xf32>
    %358 = arith.mulf %356, %357 : vector<8x128xf32>
    %359 = arith.mulf %354, %271 : vector<8x128xf32>
    %360 = arith.addf %358, %359 : vector<8x128xf32>
    %361 = arith.truncf %360 : vector<8x128xf32> to vector<8x128xbf16>
    %cst_151 = arith.constant dense<0.000000e+00> : vector<8x128xf32>
    %362 = tpu.matmul %361, %6, %cst_151 {dimension_numbers = #tpu.dot_dimension_numbers<[1], [0], [0], [1], [0, 0, 1, 1], [], []>} : vector<8x128xbf16>, vector<128x128xbf16>, vector<8x128xf32> -> vector<8x128xf32>
    %363 = arith.addf %362, %24 : vector<8x128xf32>
    %cst_152 = arith.constant dense<0.000000e+00> : vector<8x128xf32>
    %364 = tpu.matmul %296, %7, %cst_152 {dimension_numbers = #tpu.dot_dimension_numbers<[1], [0], [0], [1], [0, 0, 1, 1], [], []>} : vector<8x128xbf16>, vector<128x128xbf16>, vector<8x128xf32> -> vector<8x128xf32>
    %365 = arith.addf %364, %27 : vector<8x128xf32>
    %366 = arith.addf %363, %365 : vector<8x128xf32>
    %cst_153 = arith.constant 5.000000e-01 : f32
    %367 = vector.broadcast %cst_153 : f32 to vector<8x128xf32>
    %368 = arith.mulf %367, %366 : vector<8x128xf32>
    %369 = math.tanh %368 : vector<8x128xf32>
    %cst_154 = arith.constant 5.000000e-01 : f32
    %370 = vector.broadcast %cst_154 : f32 to vector<8x128xf32>
    %371 = arith.mulf %370, %369 : vector<8x128xf32>
    %cst_155 = arith.constant 5.000000e-01 : f32
    %372 = vector.broadcast %cst_155 : f32 to vector<8x128xf32>
    %373 = arith.addf %371, %372 : vector<8x128xf32>
    %c64_i32_156 = arith.constant 64 : i32
    %374 = tpu.dynamic_rotate %373 by %c64_i32_156 dim 1 : vector<8x128xf32>, i32 -> vector<8x128xf32>
    %375 = arith.mulf %374, %365 : vector<8x128xf32>
    %376 = arith.addf %363, %375 : vector<8x128xf32>
    %377 = math.tanh %376 : vector<8x128xf32>
    %c96_i32_157 = arith.constant 96 : i32
    %378 = tpu.dynamic_rotate %373 by %c96_i32_157 dim 1 : vector<8x128xf32>, i32 -> vector<8x128xf32>
    %cst_158 = arith.constant 1.000000e+00 : f32
    %379 = vector.broadcast %cst_158 : f32 to vector<8x128xf32>
    %380 = arith.subf %379, %378 : vector<8x128xf32>
    %c64_i32_159 = arith.constant 64 : i32
    %381 = tpu.dynamic_rotate %377 by %c64_i32_159 dim 1 : vector<8x128xf32>, i32 -> vector<8x128xf32>
    %382 = arith.mulf %380, %381 : vector<8x128xf32>
    %383 = arith.mulf %378, %295 : vector<8x128xf32>
    %384 = arith.addf %382, %383 : vector<8x128xf32>
    %385 = arith.truncf %384 : vector<8x128xf32> to vector<8x128xbf16>
    %386 = vector.extract_strided_slice %12 {offsets = [32, 0], sizes = [8, 128], strides = [1, 1]} : vector<64x128xf32> to vector<8x128xf32>
    %cst_160 = arith.constant dense<0.000000e+00> : vector<8x128xf32>
    %387 = tpu.matmul %316, %1, %cst_160 {dimension_numbers = #tpu.dot_dimension_numbers<[1], [0], [0], [1], [0, 0, 1, 1], [], []>} : vector<8x128xbf16>, vector<128x128xbf16>, vector<8x128xf32> -> vector<8x128xf32>
    %388 = arith.addf %386, %387 : vector<8x128xf32>
    %cst_161 = arith.constant 5.000000e-01 : f32
    %389 = vector.broadcast %cst_161 : f32 to vector<8x128xf32>
    %390 = arith.mulf %389, %388 : vector<8x128xf32>
    %391 = math.tanh %390 : vector<8x128xf32>
    %cst_162 = arith.constant 5.000000e-01 : f32
    %392 = vector.broadcast %cst_162 : f32 to vector<8x128xf32>
    %393 = arith.mulf %392, %391 : vector<8x128xf32>
    %cst_163 = arith.constant 5.000000e-01 : f32
    %394 = vector.broadcast %cst_163 : f32 to vector<8x128xf32>
    %395 = arith.addf %393, %394 : vector<8x128xf32>
    %396 = math.tanh %388 : vector<8x128xf32>
    %c96_i32_164 = arith.constant 96 : i32
    %397 = tpu.dynamic_rotate %395 by %c96_i32_164 dim 1 : vector<8x128xf32>, i32 -> vector<8x128xf32>
    %398 = arith.mulf %397, %312 : vector<8x128xf32>
    %c64_i32_165 = arith.constant 64 : i32
    %399 = tpu.dynamic_rotate %396 by %c64_i32_165 dim 1 : vector<8x128xf32>, i32 -> vector<8x128xf32>
    %400 = arith.mulf %395, %399 : vector<8x128xf32>
    %401 = arith.addf %398, %400 : vector<8x128xf32>
    %c32_i32_166 = arith.constant 32 : i32
    %402 = tpu.dynamic_rotate %395 by %c32_i32_166 dim 1 : vector<8x128xf32>, i32 -> vector<8x128xf32>
    %403 = math.tanh %401 : vector<8x128xf32>
    %404 = arith.mulf %402, %403 : vector<8x128xf32>
    %405 = arith.truncf %404 : vector<8x128xf32> to vector<8x128xbf16>
    %cst_167 = arith.constant dense<0.000000e+00> : vector<8x128xf32>
    %406 = tpu.matmul %405, %2, %cst_167 {dimension_numbers = #tpu.dot_dimension_numbers<[1], [0], [0], [1], [0, 0, 1, 1], [], []>} : vector<8x128xbf16>, vector<128x128xbf16>, vector<8x128xf32> -> vector<8x128xf32>
    %cst_168 = arith.constant dense<0.000000e+00> : vector<8x128xf32>
    %407 = tpu.matmul %337, %3, %cst_168 {dimension_numbers = #tpu.dot_dimension_numbers<[1], [0], [0], [1], [0, 0, 1, 1], [], []>} : vector<8x128xbf16>, vector<128x128xbf16>, vector<8x128xf32> -> vector<8x128xf32>
    %408 = arith.addf %406, %407 : vector<8x128xf32>
    %409 = arith.addf %408, %15 : vector<8x128xf32>
    %cst_169 = arith.constant 5.000000e-01 : f32
    %410 = vector.broadcast %cst_169 : f32 to vector<8x128xf32>
    %411 = arith.mulf %410, %409 : vector<8x128xf32>
    %412 = math.tanh %411 : vector<8x128xf32>
    %cst_170 = arith.constant 5.000000e-01 : f32
    %413 = vector.broadcast %cst_170 : f32 to vector<8x128xf32>
    %414 = arith.mulf %413, %412 : vector<8x128xf32>
    %cst_171 = arith.constant 5.000000e-01 : f32
    %415 = vector.broadcast %cst_171 : f32 to vector<8x128xf32>
    %416 = arith.addf %414, %415 : vector<8x128xf32>
    %417 = math.tanh %409 : vector<8x128xf32>
    %c96_i32_172 = arith.constant 96 : i32
    %418 = tpu.dynamic_rotate %416 by %c96_i32_172 dim 1 : vector<8x128xf32>, i32 -> vector<8x128xf32>
    %419 = arith.mulf %418, %333 : vector<8x128xf32>
    %c64_i32_173 = arith.constant 64 : i32
    %420 = tpu.dynamic_rotate %417 by %c64_i32_173 dim 1 : vector<8x128xf32>, i32 -> vector<8x128xf32>
    %421 = arith.mulf %416, %420 : vector<8x128xf32>
    %422 = arith.addf %419, %421 : vector<8x128xf32>
    %c32_i32_174 = arith.constant 32 : i32
    %423 = tpu.dynamic_rotate %416 by %c32_i32_174 dim 1 : vector<8x128xf32>, i32 -> vector<8x128xf32>
    %424 = math.tanh %422 : vector<8x128xf32>
    %425 = arith.mulf %423, %424 : vector<8x128xf32>
    %426 = arith.truncf %425 : vector<8x128xf32> to vector<8x128xbf16>
    %cst_175 = arith.constant dense<0.000000e+00> : vector<8x128xf32>
    %427 = tpu.matmul %426, %4, %cst_175 {dimension_numbers = #tpu.dot_dimension_numbers<[1], [0], [0], [1], [0, 0, 1, 1], [], []>} : vector<8x128xbf16>, vector<128x128xbf16>, vector<8x128xf32> -> vector<8x128xf32>
    %428 = arith.addf %427, %18 : vector<8x128xf32>
    %cst_176 = arith.constant dense<0.000000e+00> : vector<8x128xf32>
    %429 = tpu.matmul %361, %5, %cst_176 {dimension_numbers = #tpu.dot_dimension_numbers<[1], [0], [0], [1], [0, 0, 1, 1], [], []>} : vector<8x128xbf16>, vector<128x128xbf16>, vector<8x128xf32> -> vector<8x128xf32>
    %430 = arith.addf %429, %21 : vector<8x128xf32>
    %431 = arith.addf %428, %430 : vector<8x128xf32>
    %cst_177 = arith.constant 5.000000e-01 : f32
    %432 = vector.broadcast %cst_177 : f32 to vector<8x128xf32>
    %433 = arith.mulf %432, %431 : vector<8x128xf32>
    %434 = math.tanh %433 : vector<8x128xf32>
    %cst_178 = arith.constant 5.000000e-01 : f32
    %435 = vector.broadcast %cst_178 : f32 to vector<8x128xf32>
    %436 = arith.mulf %435, %434 : vector<8x128xf32>
    %cst_179 = arith.constant 5.000000e-01 : f32
    %437 = vector.broadcast %cst_179 : f32 to vector<8x128xf32>
    %438 = arith.addf %436, %437 : vector<8x128xf32>
    %c64_i32_180 = arith.constant 64 : i32
    %439 = tpu.dynamic_rotate %438 by %c64_i32_180 dim 1 : vector<8x128xf32>, i32 -> vector<8x128xf32>
    %440 = arith.mulf %439, %430 : vector<8x128xf32>
    %441 = arith.addf %428, %440 : vector<8x128xf32>
    %442 = math.tanh %441 : vector<8x128xf32>
    %c96_i32_181 = arith.constant 96 : i32
    %443 = tpu.dynamic_rotate %438 by %c96_i32_181 dim 1 : vector<8x128xf32>, i32 -> vector<8x128xf32>
    %cst_182 = arith.constant 1.000000e+00 : f32
    %444 = vector.broadcast %cst_182 : f32 to vector<8x128xf32>
    %445 = arith.subf %444, %443 : vector<8x128xf32>
    %c64_i32_183 = arith.constant 64 : i32
    %446 = tpu.dynamic_rotate %442 by %c64_i32_183 dim 1 : vector<8x128xf32>, i32 -> vector<8x128xf32>
    %447 = arith.mulf %445, %446 : vector<8x128xf32>
    %448 = arith.mulf %443, %360 : vector<8x128xf32>
    %449 = arith.addf %447, %448 : vector<8x128xf32>
    %450 = arith.truncf %449 : vector<8x128xf32> to vector<8x128xbf16>
    %cst_184 = arith.constant dense<0.000000e+00> : vector<8x128xf32>
    %451 = tpu.matmul %450, %6, %cst_184 {dimension_numbers = #tpu.dot_dimension_numbers<[1], [0], [0], [1], [0, 0, 1, 1], [], []>} : vector<8x128xbf16>, vector<128x128xbf16>, vector<8x128xf32> -> vector<8x128xf32>
    %452 = arith.addf %451, %24 : vector<8x128xf32>
    %cst_185 = arith.constant dense<0.000000e+00> : vector<8x128xf32>
    %453 = tpu.matmul %385, %7, %cst_185 {dimension_numbers = #tpu.dot_dimension_numbers<[1], [0], [0], [1], [0, 0, 1, 1], [], []>} : vector<8x128xbf16>, vector<128x128xbf16>, vector<8x128xf32> -> vector<8x128xf32>
    %454 = arith.addf %453, %27 : vector<8x128xf32>
    %455 = arith.addf %452, %454 : vector<8x128xf32>
    %cst_186 = arith.constant 5.000000e-01 : f32
    %456 = vector.broadcast %cst_186 : f32 to vector<8x128xf32>
    %457 = arith.mulf %456, %455 : vector<8x128xf32>
    %458 = math.tanh %457 : vector<8x128xf32>
    %cst_187 = arith.constant 5.000000e-01 : f32
    %459 = vector.broadcast %cst_187 : f32 to vector<8x128xf32>
    %460 = arith.mulf %459, %458 : vector<8x128xf32>
    %cst_188 = arith.constant 5.000000e-01 : f32
    %461 = vector.broadcast %cst_188 : f32 to vector<8x128xf32>
    %462 = arith.addf %460, %461 : vector<8x128xf32>
    %c64_i32_189 = arith.constant 64 : i32
    %463 = tpu.dynamic_rotate %462 by %c64_i32_189 dim 1 : vector<8x128xf32>, i32 -> vector<8x128xf32>
    %464 = arith.mulf %463, %454 : vector<8x128xf32>
    %465 = arith.addf %452, %464 : vector<8x128xf32>
    %466 = math.tanh %465 : vector<8x128xf32>
    %c96_i32_190 = arith.constant 96 : i32
    %467 = tpu.dynamic_rotate %462 by %c96_i32_190 dim 1 : vector<8x128xf32>, i32 -> vector<8x128xf32>
    %cst_191 = arith.constant 1.000000e+00 : f32
    %468 = vector.broadcast %cst_191 : f32 to vector<8x128xf32>
    %469 = arith.subf %468, %467 : vector<8x128xf32>
    %c64_i32_192 = arith.constant 64 : i32
    %470 = tpu.dynamic_rotate %466 by %c64_i32_192 dim 1 : vector<8x128xf32>, i32 -> vector<8x128xf32>
    %471 = arith.mulf %469, %470 : vector<8x128xf32>
    %472 = arith.mulf %467, %384 : vector<8x128xf32>
    %473 = arith.addf %471, %472 : vector<8x128xf32>
    %474 = arith.truncf %473 : vector<8x128xf32> to vector<8x128xbf16>
    %475 = vector.extract_strided_slice %12 {offsets = [40, 0], sizes = [8, 128], strides = [1, 1]} : vector<64x128xf32> to vector<8x128xf32>
    %cst_193 = arith.constant dense<0.000000e+00> : vector<8x128xf32>
    %476 = tpu.matmul %405, %1, %cst_193 {dimension_numbers = #tpu.dot_dimension_numbers<[1], [0], [0], [1], [0, 0, 1, 1], [], []>} : vector<8x128xbf16>, vector<128x128xbf16>, vector<8x128xf32> -> vector<8x128xf32>
    %477 = arith.addf %475, %476 : vector<8x128xf32>
    %cst_194 = arith.constant 5.000000e-01 : f32
    %478 = vector.broadcast %cst_194 : f32 to vector<8x128xf32>
    %479 = arith.mulf %478, %477 : vector<8x128xf32>
    %480 = math.tanh %479 : vector<8x128xf32>
    %cst_195 = arith.constant 5.000000e-01 : f32
    %481 = vector.broadcast %cst_195 : f32 to vector<8x128xf32>
    %482 = arith.mulf %481, %480 : vector<8x128xf32>
    %cst_196 = arith.constant 5.000000e-01 : f32
    %483 = vector.broadcast %cst_196 : f32 to vector<8x128xf32>
    %484 = arith.addf %482, %483 : vector<8x128xf32>
    %485 = math.tanh %477 : vector<8x128xf32>
    %c96_i32_197 = arith.constant 96 : i32
    %486 = tpu.dynamic_rotate %484 by %c96_i32_197 dim 1 : vector<8x128xf32>, i32 -> vector<8x128xf32>
    %487 = arith.mulf %486, %401 : vector<8x128xf32>
    %c64_i32_198 = arith.constant 64 : i32
    %488 = tpu.dynamic_rotate %485 by %c64_i32_198 dim 1 : vector<8x128xf32>, i32 -> vector<8x128xf32>
    %489 = arith.mulf %484, %488 : vector<8x128xf32>
    %490 = arith.addf %487, %489 : vector<8x128xf32>
    %c32_i32_199 = arith.constant 32 : i32
    %491 = tpu.dynamic_rotate %484 by %c32_i32_199 dim 1 : vector<8x128xf32>, i32 -> vector<8x128xf32>
    %492 = math.tanh %490 : vector<8x128xf32>
    %493 = arith.mulf %491, %492 : vector<8x128xf32>
    %494 = arith.truncf %493 : vector<8x128xf32> to vector<8x128xbf16>
    %cst_200 = arith.constant dense<0.000000e+00> : vector<8x128xf32>
    %495 = tpu.matmul %494, %2, %cst_200 {dimension_numbers = #tpu.dot_dimension_numbers<[1], [0], [0], [1], [0, 0, 1, 1], [], []>} : vector<8x128xbf16>, vector<128x128xbf16>, vector<8x128xf32> -> vector<8x128xf32>
    %cst_201 = arith.constant dense<0.000000e+00> : vector<8x128xf32>
    %496 = tpu.matmul %426, %3, %cst_201 {dimension_numbers = #tpu.dot_dimension_numbers<[1], [0], [0], [1], [0, 0, 1, 1], [], []>} : vector<8x128xbf16>, vector<128x128xbf16>, vector<8x128xf32> -> vector<8x128xf32>
    %497 = arith.addf %495, %496 : vector<8x128xf32>
    %498 = arith.addf %497, %15 : vector<8x128xf32>
    %cst_202 = arith.constant 5.000000e-01 : f32
    %499 = vector.broadcast %cst_202 : f32 to vector<8x128xf32>
    %500 = arith.mulf %499, %498 : vector<8x128xf32>
    %501 = math.tanh %500 : vector<8x128xf32>
    %cst_203 = arith.constant 5.000000e-01 : f32
    %502 = vector.broadcast %cst_203 : f32 to vector<8x128xf32>
    %503 = arith.mulf %502, %501 : vector<8x128xf32>
    %cst_204 = arith.constant 5.000000e-01 : f32
    %504 = vector.broadcast %cst_204 : f32 to vector<8x128xf32>
    %505 = arith.addf %503, %504 : vector<8x128xf32>
    %506 = math.tanh %498 : vector<8x128xf32>
    %c96_i32_205 = arith.constant 96 : i32
    %507 = tpu.dynamic_rotate %505 by %c96_i32_205 dim 1 : vector<8x128xf32>, i32 -> vector<8x128xf32>
    %508 = arith.mulf %507, %422 : vector<8x128xf32>
    %c64_i32_206 = arith.constant 64 : i32
    %509 = tpu.dynamic_rotate %506 by %c64_i32_206 dim 1 : vector<8x128xf32>, i32 -> vector<8x128xf32>
    %510 = arith.mulf %505, %509 : vector<8x128xf32>
    %511 = arith.addf %508, %510 : vector<8x128xf32>
    %c32_i32_207 = arith.constant 32 : i32
    %512 = tpu.dynamic_rotate %505 by %c32_i32_207 dim 1 : vector<8x128xf32>, i32 -> vector<8x128xf32>
    %513 = math.tanh %511 : vector<8x128xf32>
    %514 = arith.mulf %512, %513 : vector<8x128xf32>
    %515 = arith.truncf %514 : vector<8x128xf32> to vector<8x128xbf16>
    %cst_208 = arith.constant dense<0.000000e+00> : vector<8x128xf32>
    %516 = tpu.matmul %515, %4, %cst_208 {dimension_numbers = #tpu.dot_dimension_numbers<[1], [0], [0], [1], [0, 0, 1, 1], [], []>} : vector<8x128xbf16>, vector<128x128xbf16>, vector<8x128xf32> -> vector<8x128xf32>
    %517 = arith.addf %516, %18 : vector<8x128xf32>
    %cst_209 = arith.constant dense<0.000000e+00> : vector<8x128xf32>
    %518 = tpu.matmul %450, %5, %cst_209 {dimension_numbers = #tpu.dot_dimension_numbers<[1], [0], [0], [1], [0, 0, 1, 1], [], []>} : vector<8x128xbf16>, vector<128x128xbf16>, vector<8x128xf32> -> vector<8x128xf32>
    %519 = arith.addf %518, %21 : vector<8x128xf32>
    %520 = arith.addf %517, %519 : vector<8x128xf32>
    %cst_210 = arith.constant 5.000000e-01 : f32
    %521 = vector.broadcast %cst_210 : f32 to vector<8x128xf32>
    %522 = arith.mulf %521, %520 : vector<8x128xf32>
    %523 = math.tanh %522 : vector<8x128xf32>
    %cst_211 = arith.constant 5.000000e-01 : f32
    %524 = vector.broadcast %cst_211 : f32 to vector<8x128xf32>
    %525 = arith.mulf %524, %523 : vector<8x128xf32>
    %cst_212 = arith.constant 5.000000e-01 : f32
    %526 = vector.broadcast %cst_212 : f32 to vector<8x128xf32>
    %527 = arith.addf %525, %526 : vector<8x128xf32>
    %c64_i32_213 = arith.constant 64 : i32
    %528 = tpu.dynamic_rotate %527 by %c64_i32_213 dim 1 : vector<8x128xf32>, i32 -> vector<8x128xf32>
    %529 = arith.mulf %528, %519 : vector<8x128xf32>
    %530 = arith.addf %517, %529 : vector<8x128xf32>
    %531 = math.tanh %530 : vector<8x128xf32>
    %c96_i32_214 = arith.constant 96 : i32
    %532 = tpu.dynamic_rotate %527 by %c96_i32_214 dim 1 : vector<8x128xf32>, i32 -> vector<8x128xf32>
    %cst_215 = arith.constant 1.000000e+00 : f32
    %533 = vector.broadcast %cst_215 : f32 to vector<8x128xf32>
    %534 = arith.subf %533, %532 : vector<8x128xf32>
    %c64_i32_216 = arith.constant 64 : i32
    %535 = tpu.dynamic_rotate %531 by %c64_i32_216 dim 1 : vector<8x128xf32>, i32 -> vector<8x128xf32>
    %536 = arith.mulf %534, %535 : vector<8x128xf32>
    %537 = arith.mulf %532, %449 : vector<8x128xf32>
    %538 = arith.addf %536, %537 : vector<8x128xf32>
    %539 = arith.truncf %538 : vector<8x128xf32> to vector<8x128xbf16>
    %cst_217 = arith.constant dense<0.000000e+00> : vector<8x128xf32>
    %540 = tpu.matmul %539, %6, %cst_217 {dimension_numbers = #tpu.dot_dimension_numbers<[1], [0], [0], [1], [0, 0, 1, 1], [], []>} : vector<8x128xbf16>, vector<128x128xbf16>, vector<8x128xf32> -> vector<8x128xf32>
    %541 = arith.addf %540, %24 : vector<8x128xf32>
    %cst_218 = arith.constant dense<0.000000e+00> : vector<8x128xf32>
    %542 = tpu.matmul %474, %7, %cst_218 {dimension_numbers = #tpu.dot_dimension_numbers<[1], [0], [0], [1], [0, 0, 1, 1], [], []>} : vector<8x128xbf16>, vector<128x128xbf16>, vector<8x128xf32> -> vector<8x128xf32>
    %543 = arith.addf %542, %27 : vector<8x128xf32>
    %544 = arith.addf %541, %543 : vector<8x128xf32>
    %cst_219 = arith.constant 5.000000e-01 : f32
    %545 = vector.broadcast %cst_219 : f32 to vector<8x128xf32>
    %546 = arith.mulf %545, %544 : vector<8x128xf32>
    %547 = math.tanh %546 : vector<8x128xf32>
    %cst_220 = arith.constant 5.000000e-01 : f32
    %548 = vector.broadcast %cst_220 : f32 to vector<8x128xf32>
    %549 = arith.mulf %548, %547 : vector<8x128xf32>
    %cst_221 = arith.constant 5.000000e-01 : f32
    %550 = vector.broadcast %cst_221 : f32 to vector<8x128xf32>
    %551 = arith.addf %549, %550 : vector<8x128xf32>
    %c64_i32_222 = arith.constant 64 : i32
    %552 = tpu.dynamic_rotate %551 by %c64_i32_222 dim 1 : vector<8x128xf32>, i32 -> vector<8x128xf32>
    %553 = arith.mulf %552, %543 : vector<8x128xf32>
    %554 = arith.addf %541, %553 : vector<8x128xf32>
    %555 = math.tanh %554 : vector<8x128xf32>
    %c96_i32_223 = arith.constant 96 : i32
    %556 = tpu.dynamic_rotate %551 by %c96_i32_223 dim 1 : vector<8x128xf32>, i32 -> vector<8x128xf32>
    %cst_224 = arith.constant 1.000000e+00 : f32
    %557 = vector.broadcast %cst_224 : f32 to vector<8x128xf32>
    %558 = arith.subf %557, %556 : vector<8x128xf32>
    %c64_i32_225 = arith.constant 64 : i32
    %559 = tpu.dynamic_rotate %555 by %c64_i32_225 dim 1 : vector<8x128xf32>, i32 -> vector<8x128xf32>
    %560 = arith.mulf %558, %559 : vector<8x128xf32>
    %561 = arith.mulf %556, %473 : vector<8x128xf32>
    %562 = arith.addf %560, %561 : vector<8x128xf32>
    %563 = arith.truncf %562 : vector<8x128xf32> to vector<8x128xbf16>
    %564 = vector.extract_strided_slice %12 {offsets = [48, 0], sizes = [8, 128], strides = [1, 1]} : vector<64x128xf32> to vector<8x128xf32>
    %cst_226 = arith.constant dense<0.000000e+00> : vector<8x128xf32>
    %565 = tpu.matmul %494, %1, %cst_226 {dimension_numbers = #tpu.dot_dimension_numbers<[1], [0], [0], [1], [0, 0, 1, 1], [], []>} : vector<8x128xbf16>, vector<128x128xbf16>, vector<8x128xf32> -> vector<8x128xf32>
    %566 = arith.addf %564, %565 : vector<8x128xf32>
    %cst_227 = arith.constant 5.000000e-01 : f32
    %567 = vector.broadcast %cst_227 : f32 to vector<8x128xf32>
    %568 = arith.mulf %567, %566 : vector<8x128xf32>
    %569 = math.tanh %568 : vector<8x128xf32>
    %cst_228 = arith.constant 5.000000e-01 : f32
    %570 = vector.broadcast %cst_228 : f32 to vector<8x128xf32>
    %571 = arith.mulf %570, %569 : vector<8x128xf32>
    %cst_229 = arith.constant 5.000000e-01 : f32
    %572 = vector.broadcast %cst_229 : f32 to vector<8x128xf32>
    %573 = arith.addf %571, %572 : vector<8x128xf32>
    %574 = math.tanh %566 : vector<8x128xf32>
    %c96_i32_230 = arith.constant 96 : i32
    %575 = tpu.dynamic_rotate %573 by %c96_i32_230 dim 1 : vector<8x128xf32>, i32 -> vector<8x128xf32>
    %576 = arith.mulf %575, %490 : vector<8x128xf32>
    %c64_i32_231 = arith.constant 64 : i32
    %577 = tpu.dynamic_rotate %574 by %c64_i32_231 dim 1 : vector<8x128xf32>, i32 -> vector<8x128xf32>
    %578 = arith.mulf %573, %577 : vector<8x128xf32>
    %579 = arith.addf %576, %578 : vector<8x128xf32>
    %c32_i32_232 = arith.constant 32 : i32
    %580 = tpu.dynamic_rotate %573 by %c32_i32_232 dim 1 : vector<8x128xf32>, i32 -> vector<8x128xf32>
    %581 = math.tanh %579 : vector<8x128xf32>
    %582 = arith.mulf %580, %581 : vector<8x128xf32>
    %583 = arith.truncf %582 : vector<8x128xf32> to vector<8x128xbf16>
    %cst_233 = arith.constant dense<0.000000e+00> : vector<8x128xf32>
    %584 = tpu.matmul %583, %2, %cst_233 {dimension_numbers = #tpu.dot_dimension_numbers<[1], [0], [0], [1], [0, 0, 1, 1], [], []>} : vector<8x128xbf16>, vector<128x128xbf16>, vector<8x128xf32> -> vector<8x128xf32>
    %cst_234 = arith.constant dense<0.000000e+00> : vector<8x128xf32>
    %585 = tpu.matmul %515, %3, %cst_234 {dimension_numbers = #tpu.dot_dimension_numbers<[1], [0], [0], [1], [0, 0, 1, 1], [], []>} : vector<8x128xbf16>, vector<128x128xbf16>, vector<8x128xf32> -> vector<8x128xf32>
    %586 = arith.addf %584, %585 : vector<8x128xf32>
    %587 = arith.addf %586, %15 : vector<8x128xf32>
    %cst_235 = arith.constant 5.000000e-01 : f32
    %588 = vector.broadcast %cst_235 : f32 to vector<8x128xf32>
    %589 = arith.mulf %588, %587 : vector<8x128xf32>
    %590 = math.tanh %589 : vector<8x128xf32>
    %cst_236 = arith.constant 5.000000e-01 : f32
    %591 = vector.broadcast %cst_236 : f32 to vector<8x128xf32>
    %592 = arith.mulf %591, %590 : vector<8x128xf32>
    %cst_237 = arith.constant 5.000000e-01 : f32
    %593 = vector.broadcast %cst_237 : f32 to vector<8x128xf32>
    %594 = arith.addf %592, %593 : vector<8x128xf32>
    %595 = math.tanh %587 : vector<8x128xf32>
    %c96_i32_238 = arith.constant 96 : i32
    %596 = tpu.dynamic_rotate %594 by %c96_i32_238 dim 1 : vector<8x128xf32>, i32 -> vector<8x128xf32>
    %597 = arith.mulf %596, %511 : vector<8x128xf32>
    %c64_i32_239 = arith.constant 64 : i32
    %598 = tpu.dynamic_rotate %595 by %c64_i32_239 dim 1 : vector<8x128xf32>, i32 -> vector<8x128xf32>
    %599 = arith.mulf %594, %598 : vector<8x128xf32>
    %600 = arith.addf %597, %599 : vector<8x128xf32>
    %c32_i32_240 = arith.constant 32 : i32
    %601 = tpu.dynamic_rotate %594 by %c32_i32_240 dim 1 : vector<8x128xf32>, i32 -> vector<8x128xf32>
    %602 = math.tanh %600 : vector<8x128xf32>
    %603 = arith.mulf %601, %602 : vector<8x128xf32>
    %604 = arith.truncf %603 : vector<8x128xf32> to vector<8x128xbf16>
    %cst_241 = arith.constant dense<0.000000e+00> : vector<8x128xf32>
    %605 = tpu.matmul %604, %4, %cst_241 {dimension_numbers = #tpu.dot_dimension_numbers<[1], [0], [0], [1], [0, 0, 1, 1], [], []>} : vector<8x128xbf16>, vector<128x128xbf16>, vector<8x128xf32> -> vector<8x128xf32>
    %606 = arith.addf %605, %18 : vector<8x128xf32>
    %cst_242 = arith.constant dense<0.000000e+00> : vector<8x128xf32>
    %607 = tpu.matmul %539, %5, %cst_242 {dimension_numbers = #tpu.dot_dimension_numbers<[1], [0], [0], [1], [0, 0, 1, 1], [], []>} : vector<8x128xbf16>, vector<128x128xbf16>, vector<8x128xf32> -> vector<8x128xf32>
    %608 = arith.addf %607, %21 : vector<8x128xf32>
    %609 = arith.addf %606, %608 : vector<8x128xf32>
    %cst_243 = arith.constant 5.000000e-01 : f32
    %610 = vector.broadcast %cst_243 : f32 to vector<8x128xf32>
    %611 = arith.mulf %610, %609 : vector<8x128xf32>
    %612 = math.tanh %611 : vector<8x128xf32>
    %cst_244 = arith.constant 5.000000e-01 : f32
    %613 = vector.broadcast %cst_244 : f32 to vector<8x128xf32>
    %614 = arith.mulf %613, %612 : vector<8x128xf32>
    %cst_245 = arith.constant 5.000000e-01 : f32
    %615 = vector.broadcast %cst_245 : f32 to vector<8x128xf32>
    %616 = arith.addf %614, %615 : vector<8x128xf32>
    %c64_i32_246 = arith.constant 64 : i32
    %617 = tpu.dynamic_rotate %616 by %c64_i32_246 dim 1 : vector<8x128xf32>, i32 -> vector<8x128xf32>
    %618 = arith.mulf %617, %608 : vector<8x128xf32>
    %619 = arith.addf %606, %618 : vector<8x128xf32>
    %620 = math.tanh %619 : vector<8x128xf32>
    %c96_i32_247 = arith.constant 96 : i32
    %621 = tpu.dynamic_rotate %616 by %c96_i32_247 dim 1 : vector<8x128xf32>, i32 -> vector<8x128xf32>
    %cst_248 = arith.constant 1.000000e+00 : f32
    %622 = vector.broadcast %cst_248 : f32 to vector<8x128xf32>
    %623 = arith.subf %622, %621 : vector<8x128xf32>
    %c64_i32_249 = arith.constant 64 : i32
    %624 = tpu.dynamic_rotate %620 by %c64_i32_249 dim 1 : vector<8x128xf32>, i32 -> vector<8x128xf32>
    %625 = arith.mulf %623, %624 : vector<8x128xf32>
    %626 = arith.mulf %621, %538 : vector<8x128xf32>
    %627 = arith.addf %625, %626 : vector<8x128xf32>
    %628 = arith.truncf %627 : vector<8x128xf32> to vector<8x128xbf16>
    %cst_250 = arith.constant dense<0.000000e+00> : vector<8x128xf32>
    %629 = tpu.matmul %628, %6, %cst_250 {dimension_numbers = #tpu.dot_dimension_numbers<[1], [0], [0], [1], [0, 0, 1, 1], [], []>} : vector<8x128xbf16>, vector<128x128xbf16>, vector<8x128xf32> -> vector<8x128xf32>
    %630 = arith.addf %629, %24 : vector<8x128xf32>
    %cst_251 = arith.constant dense<0.000000e+00> : vector<8x128xf32>
    %631 = tpu.matmul %563, %7, %cst_251 {dimension_numbers = #tpu.dot_dimension_numbers<[1], [0], [0], [1], [0, 0, 1, 1], [], []>} : vector<8x128xbf16>, vector<128x128xbf16>, vector<8x128xf32> -> vector<8x128xf32>
    %632 = arith.addf %631, %27 : vector<8x128xf32>
    %633 = arith.addf %630, %632 : vector<8x128xf32>
    %cst_252 = arith.constant 5.000000e-01 : f32
    %634 = vector.broadcast %cst_252 : f32 to vector<8x128xf32>
    %635 = arith.mulf %634, %633 : vector<8x128xf32>
    %636 = math.tanh %635 : vector<8x128xf32>
    %cst_253 = arith.constant 5.000000e-01 : f32
    %637 = vector.broadcast %cst_253 : f32 to vector<8x128xf32>
    %638 = arith.mulf %637, %636 : vector<8x128xf32>
    %cst_254 = arith.constant 5.000000e-01 : f32
    %639 = vector.broadcast %cst_254 : f32 to vector<8x128xf32>
    %640 = arith.addf %638, %639 : vector<8x128xf32>
    %c64_i32_255 = arith.constant 64 : i32
    %641 = tpu.dynamic_rotate %640 by %c64_i32_255 dim 1 : vector<8x128xf32>, i32 -> vector<8x128xf32>
    %642 = arith.mulf %641, %632 : vector<8x128xf32>
    %643 = arith.addf %630, %642 : vector<8x128xf32>
    %644 = math.tanh %643 : vector<8x128xf32>
    %c96_i32_256 = arith.constant 96 : i32
    %645 = tpu.dynamic_rotate %640 by %c96_i32_256 dim 1 : vector<8x128xf32>, i32 -> vector<8x128xf32>
    %cst_257 = arith.constant 1.000000e+00 : f32
    %646 = vector.broadcast %cst_257 : f32 to vector<8x128xf32>
    %647 = arith.subf %646, %645 : vector<8x128xf32>
    %c64_i32_258 = arith.constant 64 : i32
    %648 = tpu.dynamic_rotate %644 by %c64_i32_258 dim 1 : vector<8x128xf32>, i32 -> vector<8x128xf32>
    %649 = arith.mulf %647, %648 : vector<8x128xf32>
    %650 = arith.mulf %645, %562 : vector<8x128xf32>
    %651 = arith.addf %649, %650 : vector<8x128xf32>
    %652 = arith.truncf %651 : vector<8x128xf32> to vector<8x128xbf16>
    %653 = vector.extract_strided_slice %12 {offsets = [56, 0], sizes = [8, 128], strides = [1, 1]} : vector<64x128xf32> to vector<8x128xf32>
    %cst_259 = arith.constant dense<0.000000e+00> : vector<8x128xf32>
    %654 = tpu.matmul %583, %1, %cst_259 {dimension_numbers = #tpu.dot_dimension_numbers<[1], [0], [0], [1], [0, 0, 1, 1], [], []>} : vector<8x128xbf16>, vector<128x128xbf16>, vector<8x128xf32> -> vector<8x128xf32>
    %655 = arith.addf %653, %654 : vector<8x128xf32>
    %cst_260 = arith.constant 5.000000e-01 : f32
    %656 = vector.broadcast %cst_260 : f32 to vector<8x128xf32>
    %657 = arith.mulf %656, %655 : vector<8x128xf32>
    %658 = math.tanh %657 : vector<8x128xf32>
    %cst_261 = arith.constant 5.000000e-01 : f32
    %659 = vector.broadcast %cst_261 : f32 to vector<8x128xf32>
    %660 = arith.mulf %659, %658 : vector<8x128xf32>
    %cst_262 = arith.constant 5.000000e-01 : f32
    %661 = vector.broadcast %cst_262 : f32 to vector<8x128xf32>
    %662 = arith.addf %660, %661 : vector<8x128xf32>
    %663 = math.tanh %655 : vector<8x128xf32>
    %c96_i32_263 = arith.constant 96 : i32
    %664 = tpu.dynamic_rotate %662 by %c96_i32_263 dim 1 : vector<8x128xf32>, i32 -> vector<8x128xf32>
    %665 = arith.mulf %664, %579 : vector<8x128xf32>
    %c64_i32_264 = arith.constant 64 : i32
    %666 = tpu.dynamic_rotate %663 by %c64_i32_264 dim 1 : vector<8x128xf32>, i32 -> vector<8x128xf32>
    %667 = arith.mulf %662, %666 : vector<8x128xf32>
    %668 = arith.addf %665, %667 : vector<8x128xf32>
    %c32_i32_265 = arith.constant 32 : i32
    %669 = tpu.dynamic_rotate %662 by %c32_i32_265 dim 1 : vector<8x128xf32>, i32 -> vector<8x128xf32>
    %670 = math.tanh %668 : vector<8x128xf32>
    %671 = arith.mulf %669, %670 : vector<8x128xf32>
    %672 = arith.truncf %671 : vector<8x128xf32> to vector<8x128xbf16>
    %cst_266 = arith.constant dense<0.000000e+00> : vector<8x128xf32>
    %673 = tpu.matmul %672, %2, %cst_266 {dimension_numbers = #tpu.dot_dimension_numbers<[1], [0], [0], [1], [0, 0, 1, 1], [], []>} : vector<8x128xbf16>, vector<128x128xbf16>, vector<8x128xf32> -> vector<8x128xf32>
    %cst_267 = arith.constant dense<0.000000e+00> : vector<8x128xf32>
    %674 = tpu.matmul %604, %3, %cst_267 {dimension_numbers = #tpu.dot_dimension_numbers<[1], [0], [0], [1], [0, 0, 1, 1], [], []>} : vector<8x128xbf16>, vector<128x128xbf16>, vector<8x128xf32> -> vector<8x128xf32>
    %675 = arith.addf %673, %674 : vector<8x128xf32>
    %676 = arith.addf %675, %15 : vector<8x128xf32>
    %cst_268 = arith.constant 5.000000e-01 : f32
    %677 = vector.broadcast %cst_268 : f32 to vector<8x128xf32>
    %678 = arith.mulf %677, %676 : vector<8x128xf32>
    %679 = math.tanh %678 : vector<8x128xf32>
    %cst_269 = arith.constant 5.000000e-01 : f32
    %680 = vector.broadcast %cst_269 : f32 to vector<8x128xf32>
    %681 = arith.mulf %680, %679 : vector<8x128xf32>
    %cst_270 = arith.constant 5.000000e-01 : f32
    %682 = vector.broadcast %cst_270 : f32 to vector<8x128xf32>
    %683 = arith.addf %681, %682 : vector<8x128xf32>
    %684 = math.tanh %676 : vector<8x128xf32>
    %c96_i32_271 = arith.constant 96 : i32
    %685 = tpu.dynamic_rotate %683 by %c96_i32_271 dim 1 : vector<8x128xf32>, i32 -> vector<8x128xf32>
    %686 = arith.mulf %685, %600 : vector<8x128xf32>
    %c64_i32_272 = arith.constant 64 : i32
    %687 = tpu.dynamic_rotate %684 by %c64_i32_272 dim 1 : vector<8x128xf32>, i32 -> vector<8x128xf32>
    %688 = arith.mulf %683, %687 : vector<8x128xf32>
    %689 = arith.addf %686, %688 : vector<8x128xf32>
    %c32_i32_273 = arith.constant 32 : i32
    %690 = tpu.dynamic_rotate %683 by %c32_i32_273 dim 1 : vector<8x128xf32>, i32 -> vector<8x128xf32>
    %691 = math.tanh %689 : vector<8x128xf32>
    %692 = arith.mulf %690, %691 : vector<8x128xf32>
    %693 = arith.truncf %692 : vector<8x128xf32> to vector<8x128xbf16>
    %cst_274 = arith.constant dense<0.000000e+00> : vector<8x128xf32>
    %694 = tpu.matmul %693, %4, %cst_274 {dimension_numbers = #tpu.dot_dimension_numbers<[1], [0], [0], [1], [0, 0, 1, 1], [], []>} : vector<8x128xbf16>, vector<128x128xbf16>, vector<8x128xf32> -> vector<8x128xf32>
    %695 = arith.addf %694, %18 : vector<8x128xf32>
    %cst_275 = arith.constant dense<0.000000e+00> : vector<8x128xf32>
    %696 = tpu.matmul %628, %5, %cst_275 {dimension_numbers = #tpu.dot_dimension_numbers<[1], [0], [0], [1], [0, 0, 1, 1], [], []>} : vector<8x128xbf16>, vector<128x128xbf16>, vector<8x128xf32> -> vector<8x128xf32>
    %697 = arith.addf %696, %21 : vector<8x128xf32>
    %698 = arith.addf %695, %697 : vector<8x128xf32>
    %cst_276 = arith.constant 5.000000e-01 : f32
    %699 = vector.broadcast %cst_276 : f32 to vector<8x128xf32>
    %700 = arith.mulf %699, %698 : vector<8x128xf32>
    %701 = math.tanh %700 : vector<8x128xf32>
    %cst_277 = arith.constant 5.000000e-01 : f32
    %702 = vector.broadcast %cst_277 : f32 to vector<8x128xf32>
    %703 = arith.mulf %702, %701 : vector<8x128xf32>
    %cst_278 = arith.constant 5.000000e-01 : f32
    %704 = vector.broadcast %cst_278 : f32 to vector<8x128xf32>
    %705 = arith.addf %703, %704 : vector<8x128xf32>
    %c64_i32_279 = arith.constant 64 : i32
    %706 = tpu.dynamic_rotate %705 by %c64_i32_279 dim 1 : vector<8x128xf32>, i32 -> vector<8x128xf32>
    %707 = arith.mulf %706, %697 : vector<8x128xf32>
    %708 = arith.addf %695, %707 : vector<8x128xf32>
    %709 = math.tanh %708 : vector<8x128xf32>
    %c96_i32_280 = arith.constant 96 : i32
    %710 = tpu.dynamic_rotate %705 by %c96_i32_280 dim 1 : vector<8x128xf32>, i32 -> vector<8x128xf32>
    %cst_281 = arith.constant 1.000000e+00 : f32
    %711 = vector.broadcast %cst_281 : f32 to vector<8x128xf32>
    %712 = arith.subf %711, %710 : vector<8x128xf32>
    %c64_i32_282 = arith.constant 64 : i32
    %713 = tpu.dynamic_rotate %709 by %c64_i32_282 dim 1 : vector<8x128xf32>, i32 -> vector<8x128xf32>
    %714 = arith.mulf %712, %713 : vector<8x128xf32>
    %715 = arith.mulf %710, %627 : vector<8x128xf32>
    %716 = arith.addf %714, %715 : vector<8x128xf32>
    %717 = arith.truncf %716 : vector<8x128xf32> to vector<8x128xbf16>
    %cst_283 = arith.constant dense<0.000000e+00> : vector<8x128xf32>
    %718 = tpu.matmul %717, %6, %cst_283 {dimension_numbers = #tpu.dot_dimension_numbers<[1], [0], [0], [1], [0, 0, 1, 1], [], []>} : vector<8x128xbf16>, vector<128x128xbf16>, vector<8x128xf32> -> vector<8x128xf32>
    %719 = arith.addf %718, %24 : vector<8x128xf32>
    %cst_284 = arith.constant dense<0.000000e+00> : vector<8x128xf32>
    %720 = tpu.matmul %652, %7, %cst_284 {dimension_numbers = #tpu.dot_dimension_numbers<[1], [0], [0], [1], [0, 0, 1, 1], [], []>} : vector<8x128xbf16>, vector<128x128xbf16>, vector<8x128xf32> -> vector<8x128xf32>
    %721 = arith.addf %720, %27 : vector<8x128xf32>
    %722 = arith.addf %719, %721 : vector<8x128xf32>
    %cst_285 = arith.constant 5.000000e-01 : f32
    %723 = vector.broadcast %cst_285 : f32 to vector<8x128xf32>
    %724 = arith.mulf %723, %722 : vector<8x128xf32>
    %725 = math.tanh %724 : vector<8x128xf32>
    %cst_286 = arith.constant 5.000000e-01 : f32
    %726 = vector.broadcast %cst_286 : f32 to vector<8x128xf32>
    %727 = arith.mulf %726, %725 : vector<8x128xf32>
    %cst_287 = arith.constant 5.000000e-01 : f32
    %728 = vector.broadcast %cst_287 : f32 to vector<8x128xf32>
    %729 = arith.addf %727, %728 : vector<8x128xf32>
    %c64_i32_288 = arith.constant 64 : i32
    %730 = tpu.dynamic_rotate %729 by %c64_i32_288 dim 1 : vector<8x128xf32>, i32 -> vector<8x128xf32>
    %731 = arith.mulf %730, %721 : vector<8x128xf32>
    %732 = arith.addf %719, %731 : vector<8x128xf32>
    %733 = math.tanh %732 : vector<8x128xf32>
    %c96_i32_289 = arith.constant 96 : i32
    %734 = tpu.dynamic_rotate %729 by %c96_i32_289 dim 1 : vector<8x128xf32>, i32 -> vector<8x128xf32>
    %cst_290 = arith.constant 1.000000e+00 : f32
    %735 = vector.broadcast %cst_290 : f32 to vector<8x128xf32>
    %736 = arith.subf %735, %734 : vector<8x128xf32>
    %c64_i32_291 = arith.constant 64 : i32
    %737 = tpu.dynamic_rotate %733 by %c64_i32_291 dim 1 : vector<8x128xf32>, i32 -> vector<8x128xf32>
    %738 = arith.mulf %736, %737 : vector<8x128xf32>
    %739 = arith.mulf %734, %651 : vector<8x128xf32>
    %740 = arith.addf %738, %739 : vector<8x128xf32>
    %741 = arith.truncf %740 : vector<8x128xf32> to vector<8x128xbf16>
    %c0_292 = arith.constant 0 : index
    %c0_293 = arith.constant 0 : index
    %742 = vector.load %arg15[%c0_292, %c0_293] : memref<128x16xbf16, #tpu.memory_space<vmem>>, vector<128x16xbf16>
    %cst_294 = arith.constant dense<0.000000e+00> : vector<8x16xf32>
    %743 = tpu.matmul %741, %742, %cst_294 {dimension_numbers = #tpu.dot_dimension_numbers<[1], [0], [0], [1], [0, 0, 1, 1], [], []>} : vector<8x128xbf16>, vector<128x16xbf16>, vector<8x16xf32> -> vector<8x16xf32>
    %c0_295 = arith.constant 0 : index
    %c0_296 = arith.constant 0 : index
    %744 = vector.load %arg16[%c0_295, %c0_296] : memref<1x16xf32, #tpu.memory_space<vmem>>, vector<1x16xf32>
    %745 = vector.broadcast %744 : vector<1x16xf32> to vector<8x16xf32>
    %746 = arith.addf %743, %745 : vector<8x16xf32>
    %cst_297 = arith.constant 0.000000e+00 : f32
    %747 = vector.broadcast %cst_297 : f32 to vector<8x16xf32>
    %748 = arith.maximumf %746, %747 : vector<8x16xf32>
    %c0_298 = arith.constant 0 : index
    %c0_299 = arith.constant 0 : index
    %749 = vector.load %arg17[%c0_298, %c0_299] : memref<1x16xf32, #tpu.memory_space<vmem>>, vector<1x16xf32>
    %750 = vector.broadcast %749 : vector<1x16xf32> to vector<8x16xf32>
    %751 = arith.mulf %748, %750 : vector<8x16xf32>
    %cst_300 = arith.constant dense<0.000000e+00> : vector<8xf32>
    %752 = vector.multi_reduction <add>, %751, %cst_300 [1] : vector<8x16xf32> to vector<8xf32>
    %753 = vector.shape_cast %752 : vector<8xf32> to vector<8x1xf32>
    %c0_301 = arith.constant 0 : index
    %c0_302 = arith.constant 0 : index
    %754 = vector.load %arg18[%c0_301, %c0_302] : memref<1x1xf32, #tpu.memory_space<vmem>>, vector<1x1xf32>
    %755 = vector.broadcast %754 : vector<1x1xf32> to vector<8x1xf32>
    %756 = arith.addf %753, %755 : vector<8x1xf32>
    %c0_303 = arith.constant 0 : index
    %c0_304 = arith.constant 0 : index
    %757 = vector.load %arg19[%c0_303, %c0_304] : memref<8x1xf32, #tpu.memory_space<vmem>>, vector<8x1xf32>
    tpu.vector_store %arg19[%c0_303, %c0_304], %756 {strides = array<i32>} : memref<8x1xf32, #tpu.memory_space<vmem>>, vector<8x1xf32>,
    return
  }
}

</mosaic_0001>

<llo_original>
// kernel: pallas_forward.1
$region0: #{pallas_forward.1}
  #allocation0 [shape = 'u32[]', space=smem, size = 0x4, offset = 0x4, fixed_abs, tag = 'smem constant byte address 0x4 - core index']
  #allocation1 [shape = 'u32[72,128]{1,0:T(1,128)}', space=vmem, size = 0x9000, scoped, tag = 'internal scratch']
  #allocation2 [shape = 'f32[1,1]{1,0:T(1,128)S(1)}', space=vmem, size = 0x200, scoped, tag = 'scoped memory for pallas_forward.1']
  %s0 = inlined_call_operand.vmem [shape: bf16[64,16], index: 0, kind: input, shape index: {}]
  %s1 = inlined_call_operand.vmem [shape: bf16[16,128], index: 1, kind: input, shape index: {}]
  %s2 = inlined_call_operand.vmem [shape: bf16[128,128], index: 2, kind: input, shape index: {}]
  %s3 = inlined_call_operand.vmem [shape: f32[1,128], index: 3, kind: input, shape index: {}]
  %s4 = inlined_call_operand.vmem [shape: bf16[128,128], index: 4, kind: input, shape index: {}]
  %s5 = inlined_call_operand.vmem [shape: bf16[128,128], index: 5, kind: input, shape index: {}]
  %s6 = inlined_call_operand.vmem [shape: f32[1,128], index: 6, kind: input, shape index: {}]
  %s7 = inlined_call_operand.vmem [shape: bf16[128,128], index: 7, kind: input, shape index: {}]
  %s8 = inlined_call_operand.vmem [shape: bf16[128,128], index: 8, kind: input, shape index: {}]
  %s9 = inlined_call_operand.vmem [shape: f32[1,128], index: 9, kind: input, shape index: {}]
  %s10 = inlined_call_operand.vmem [shape: f32[1,128], index: 10, kind: input, shape index: {}]
  %s11 = inlined_call_operand.vmem [shape: bf16[128,128], index: 11, kind: input, shape index: {}]
  %s12 = inlined_call_operand.vmem [shape: bf16[128,128], index: 12, kind: input, shape index: {}]
  %s13 = inlined_call_operand.vmem [shape: f32[1,128], index: 13, kind: input, shape index: {}]
  %s14 = inlined_call_operand.vmem [shape: f32[1,128], index: 14, kind: input, shape index: {}]
  %s15 = inlined_call_operand.vmem [shape: bf16[128,16], index: 15, kind: input, shape index: {}]
  %s16 = inlined_call_operand.vmem [shape: f32[1,16], index: 16, kind: input, shape index: {}]
  %s17 = inlined_call_operand.vmem [shape: f32[1,16], index: 17, kind: input, shape index: {}]
  %s18 = inlined_call_operand.<no memory space> [shape: f32[1,1], index: 18, kind: input, shape index: {}]
  %s19 = inlined_call_operand.vmem [shape: f32[8,1], index: 19, kind: output, shape index: {}]
  %s20 = sld [smem:[#allocation0]]
  $region86: #{pallas_forward.1} parent=0
    _
  %s22 = ssub.s32 1, %s20
  %s23 = scalar_select 0, %s22, %s20
  %v24 = vstv %s18
  %25 = vst [vmem:[#allocation2] sm:$0x1] %v24
  // Predicated region
  $region2: #{pallas_forward.1} parent=0 // pred_check
    _
  $region3: #{pallas_forward.1} parent=0 // pred_check_branch
    %27 = sbr.rel (0) target = $region5
  $region4: #{pallas_forward.1} parent=0 // pred_region
    _
  $region5: #{pallas_forward.1} parent=0 // pred_fallthru
    _
  // Predicated region
  $region6: #{pallas_forward.1} parent=0 // pred_check
    _
  $region7: #{pallas_forward.1} parent=0 // pred_check_branch
    %29 = sbr.rel (0) target = $region9
  $region8: #{pallas_forward.1} parent=0 // pred_region
    _
  $region9: #{pallas_forward.1} parent=0 // pred_fallthru
    _
  // Predicated region
  $region10: #{pallas_forward.1} parent=0 // pred_check
    _
  $region11: #{pallas_forward.1} parent=0 // pred_check_branch
    %31 = sbr.rel (0) target = $region13
  $region12: #{pallas_forward.1} parent=0 // pred_region
    _
  $region13: #{pallas_forward.1} parent=0 // pred_fallthru
    _
  // Predicated region
  $region14: #{pallas_forward.1} parent=0 // pred_check
    _
  $region15: #{pallas_forward.1} parent=0 // pred_check_branch
    %33 = sbr.rel (0) target = $region17
  $region16: #{pallas_forward.1} parent=0 // pred_region
    _
  $region17: #{pallas_forward.1} parent=0 // pred_fallthru
    _
  // Predicated region
  $region18: #{pallas_forward.1} parent=0 // pred_check
    _
  $region19: #{pallas_forward.1} parent=0 // pred_check_branch
    %35 = sbr.rel (0) target = $region21
  $region20: #{pallas_forward.1} parent=0 // pred_region
    _
  $region21: #{pallas_forward.1} parent=0 // pred_fallthru
    _
  // Predicated region
  $region22: #{pallas_forward.1} parent=0 // pred_check
    _
  $region23: #{pallas_forward.1} parent=0 // pred_check_branch
    %37 = sbr.rel (0) target = $region25
  $region24: #{pallas_forward.1} parent=0 // pred_region
    _
  $region25: #{pallas_forward.1} parent=0 // pred_fallthru
    _
  // Predicated region
  $region26: #{pallas_forward.1} parent=0 // pred_check
    _
  $region27: #{pallas_forward.1} parent=0 // pred_check_branch
    %39 = sbr.rel (0) target = $region29
  $region28: #{pallas_forward.1} parent=0 // pred_region
    _
  $region29: #{pallas_forward.1} parent=0 // pred_fallthru
    _
  // Predicated region
  $region30: #{pallas_forward.1} parent=0 // pred_check
    _
  $region31: #{pallas_forward.1} parent=0 // pred_check_branch
    %41 = sbr.rel (0) target = $region33
  $region32: #{pallas_forward.1} parent=0 // pred_region
    _
  $region33: #{pallas_forward.1} parent=0 // pred_fallthru
    _
  // Predicated region
  $region34: #{pallas_forward.1} parent=0 // pred_check
    _
  $region35: #{pallas_forward.1} parent=0 // pred_check_branch
    %43 = sbr.rel (0) target = $region37
  $region36: #{pallas_forward.1} parent=0 // pred_region
    _
  $region37: #{pallas_forward.1} parent=0 // pred_fallthru
    _
  // Predicated region
  $region38: #{pallas_forward.1} parent=0 // pred_check
    _
  $region39: #{pallas_forward.1} parent=0 // pred_check_branch
    %45 = sbr.rel (0) target = $region41
  $region40: #{pallas_forward.1} parent=0 // pred_region
    _
  $region41: #{pallas_forward.1} parent=0 // pred_fallthru
    _
  // Predicated region
  $region42: #{pallas_forward.1} parent=0 // pred_check
    _
  $region43: #{pallas_forward.1} parent=0 // pred_check_branch
    %47 = sbr.rel (0) target = $region45
  $region44: #{pallas_forward.1} parent=0 // pred_region
    _
  $region45: #{pallas_forward.1} parent=0 // pred_fallthru
    _
  // Predicated region
  $region46: #{pallas_forward.1} parent=0 // pred_check
    _
  $region47: #{pallas_forward.1} parent=0 // pred_check_branch
    %49 = sbr.rel (0) target = $region49
  $region48: #{pallas_forward.1} parent=0 // pred_region
    _
  $region49: #{pallas_forward.1} parent=0 // pred_fallthru
    _
  // Predicated region
  $region50: #{pallas_forward.1} parent=0 // pred_check
    _
  $region51: #{pallas_forward.1} parent=0 // pred_check_branch
    %51 = sbr.rel (0) target = $region53
  $region52: #{pallas_forward.1} parent=0 // pred_region
    _
  $region53: #{pallas_forward.1} parent=0 // pred_fallthru
    _
  // Predicated region
  $region54: #{pallas_forward.1} parent=0 // pred_check
    _
  $region55: #{pallas_forward.1} parent=0 // pred_check_branch
    %53 = sbr.rel (0) target = $region57
  $region56: #{pallas_forward.1} parent=0 // pred_region
    _
  $region57: #{pallas_forward.1} parent=0 // pred_fallthru
    _
  // Predicated region
  $region58: #{pallas_forward.1} parent=0 // pred_check
    _
  $region59: #{pallas_forward.1} parent=0 // pred_check_branch
    %55 = sbr.rel (0) target = $region61
  $region60: #{pallas_forward.1} parent=0 // pred_region
    _
  $region61: #{pallas_forward.1} parent=0 // pred_fallthru
    _
  // Predicated region
  $region62: #{pallas_forward.1} parent=0 // pred_check
    _
  $region63: #{pallas_forward.1} parent=0 // pred_check_branch
    %57 = sbr.rel (0) target = $region65
  $region64: #{pallas_forward.1} parent=0 // pred_region
    _
  $region65: #{pallas_forward.1} parent=0 // pred_fallthru
    _
  // Predicated region
  $region66: #{pallas_forward.1} parent=0 // pred_check
    _
  $region67: #{pallas_forward.1} parent=0 // pred_check_branch
    %59 = sbr.rel (0) target = $region69
  $region68: #{pallas_forward.1} parent=0 // pred_region
    _
  $region69: #{pallas_forward.1} parent=0 // pred_fallthru
    _
  // Predicated region
  $region70: #{pallas_forward.1} parent=0 // pred_check
    _
  $region71: #{pallas_forward.1} parent=0 // pred_check_branch
    %61 = sbr.rel (0) target = $region73
  $region72: #{pallas_forward.1} parent=0 // pred_region
    _
  $region73: #{pallas_forward.1} parent=0 // pred_fallthru
    _
  // Predicated region
  $region74: #{pallas_forward.1} parent=0 // pred_check
    _
  $region75: #{pallas_forward.1} parent=0 // pred_check_branch
    %63 = sbr.rel (0) target = $region77
  $region76: #{pallas_forward.1} parent=0 // pred_region
    _
  $region77: #{pallas_forward.1} parent=0 // pred_fallthru
    _
  %v65 = vld [vmem:[%s1] sm:$0xf]
  %v66 = vld [vmem:[%s1 + $0x4] sm:$0xf]
  %v67 = vld [vmem:[%s2] sm:$0xf]
  %v68 = vld [vmem:[%s2 + $0x4] sm:$0xf]
  %v69 = vld [vmem:[%s2 + $0x8] sm:$0xf]
  %v70 = vld [vmem:[%s2 + $0xc] sm:$0xf]
  %v71 = vld [vmem:[%s2 + $0x10] sm:$0xf]
  %v72 = vld [vmem:[%s2 + $0x14] sm:$0xf]
  %v73 = vld [vmem:[%s2 + $0x18] sm:$0xf]
  %v74 = vld [vmem:[%s2 + $0x1c] sm:$0xf]
  %v75 = vld [vmem:[%s2 + $0x20] sm:$0xf]
  %v76 = vld [vmem:[%s2 + $0x24] sm:$0xf]
  %v77 = vld [vmem:[%s2 + $0x28] sm:$0xf]
  %v78 = vld [vmem:[%s2 + $0x2c] sm:$0xf]
  %v79 = vld [vmem:[%s2 + $0x30] sm:$0xf]
  %v80 = vld [vmem:[%s2 + $0x34] sm:$0xf]
  %v81 = vld [vmem:[%s2 + $0x38] sm:$0xf]
  %v82 = vld [vmem:[%s2 + $0x3c] sm:$0xf]
  %v83 = vld [vmem:[%s4] sm:$0xf]
  %v84 = vld [vmem:[%s4 + $0x4] sm:$0xf]
  %v85 = vld [vmem:[%s4 + $0x8] sm:$0xf]
  %v86 = vld [vmem:[%s4 + $0xc] sm:$0xf]
  %v87 = vld [vmem:[%s4 + $0x10] sm:$0xf]
  %v88 = vld [vmem:[%s4 + $0x14] sm:$0xf]
  %v89 = vld [vmem:[%s4 + $0x18] sm:$0xf]
  %v90 = vld [vmem:[%s4 + $0x1c] sm:$0xf]
  %v91 = vld [vmem:[%s4 + $0x20] sm:$0xf]
  %v92 = vld [vmem:[%s4 + $0x24] sm:$0xf]
  %v93 = vld [vmem:[%s4 + $0x28] sm:$0xf]
  %v94 = vld [vmem:[%s4 + $0x2c] sm:$0xf]
  %v95 = vld [vmem:[%s4 + $0x30] sm:$0xf]
  %v96 = vld [vmem:[%s4 + $0x34] sm:$0xf]
  %v97 = vld [vmem:[%s4 + $0x38] sm:$0xf]
  %v98 = vld [vmem:[%s4 + $0x3c] sm:$0xf]
  %v99 = vld [vmem:[%s5] sm:$0xf]
  %v100 = vld [vmem:[%s5 + $0x4] sm:$0xf]
  %v101 = vld [vmem:[%s5 + $0x8] sm:$0xf]
  %v102 = vld [vmem:[%s5 + $0xc] sm:$0xf]
  %v103 = vld [vmem:[%s5 + $0x10] sm:$0xf]
  %v104 = vld [vmem:[%s5 + $0x14] sm:$0xf]
  %v105 = vld [vmem:[%s5 + $0x18] sm:$0xf]
  %v106 = vld [vmem:[%s5 + $0x1c] sm:$0xf]
  %v107 = vld [vmem:[%s5 + $0x20] sm:$0xf]
  %v108 = vld [vmem:[%s5 + $0x24] sm:$0xf]
  %v109 = vld [vmem:[%s5 + $0x28] sm:$0xf]
  %v110 = vld [vmem:[%s5 + $0x2c] sm:$0xf]
  %v111 = vld [vmem:[%s5 + $0x30] sm:$0xf]
  %v112 = vld [vmem:[%s5 + $0x34] sm:$0xf]
  %v113 = vld [vmem:[%s5 + $0x38] sm:$0xf]
  %v114 = vld [vmem:[%s5 + $0x3c] sm:$0xf]
  %v115 = vld [vmem:[%s7] sm:$0xf]
  %v116 = vld [vmem:[%s7 + $0x4] sm:$0xf]
  %v117 = vld [vmem:[%s7 + $0x8] sm:$0xf]
  %v118 = vld [vmem:[%s7 + $0xc] sm:$0xf]
  %v119 = vld [vmem:[%s7 + $0x10] sm:$0xf]
  %v120 = vld [vmem:[%s7 + $0x14] sm:$0xf]
  %v121 = vld [vmem:[%s7 + $0x18] sm:$0xf]
  %v122 = vld [vmem:[%s7 + $0x1c] sm:$0xf]
  %v123 = vld [vmem:[%s7 + $0x20] sm:$0xf]
  %v124 = vld [vmem:[%s7 + $0x24] sm:$0xf]
  %v125 = vld [vmem:[%s7 + $0x28] sm:$0xf]
  %v126 = vld [vmem:[%s7 + $0x2c] sm:$0xf]
  %v127 = vld [vmem:[%s7 + $0x30] sm:$0xf]
  %v128 = vld [vmem:[%s7 + $0x34] sm:$0xf]
  %v129 = vld [vmem:[%s7 + $0x38] sm:$0xf]
  %v130 = vld [vmem:[%s7 + $0x3c] sm:$0xf]
  %v131 = vld [vmem:[%s8] sm:$0xf]
  %v132 = vld [vmem:[%s8 + $0x4] sm:$0xf]
  %v133 = vld [vmem:[%s8 + $0x8] sm:$0xf]
  %v134 = vld [vmem:[%s8 + $0xc] sm:$0xf]
  %v135 = vld [vmem:[%s8 + $0x10] sm:$0xf]
  %v136 = vld [vmem:[%s8 + $0x14] sm:$0xf]
  %v137 = vld [vmem:[%s8 + $0x18] sm:$0xf]
  %v138 = vld [vmem:[%s8 + $0x1c] sm:$0xf]
  %v139 = vld [vmem:[%s8 + $0x20] sm:$0xf]
  %v140 = vld [vmem:[%s8 + $0x24] sm:$0xf]
  %v141 = vld [vmem:[%s8 + $0x28] sm:$0xf]
  %v142 = vld [vmem:[%s8 + $0x2c] sm:$0xf]
  %v143 = vld [vmem:[%s8 + $0x30] sm:$0xf]
  %v144 = vld [vmem:[%s8 + $0x34] sm:$0xf]
  %v145 = vld [vmem:[%s8 + $0x38] sm:$0xf]
  %v146 = vld [vmem:[%s8 + $0x3c] sm:$0xf]
  %v147 = vld [vmem:[%s11] sm:$0xf]
  %v148 = vld [vmem:[%s11 + $0x4] sm:$0xf]
  %v149 = vld [vmem:[%s11 + $0x8] sm:$0xf]
  %v150 = vld [vmem:[%s11 + $0xc] sm:$0xf]
  %v151 = vld [vmem:[%s11 + $0x10] sm:$0xf]
  %v152 = vld [vmem:[%s11 + $0x14] sm:$0xf]
  %v153 = vld [vmem:[%s11 + $0x18] sm:$0xf]
  %v154 = vld [vmem:[%s11 + $0x1c] sm:$0xf]
  %v155 = vld [vmem:[%s11 + $0x20] sm:$0xf]
  %v156 = vld [vmem:[%s11 + $0x24] sm:$0xf]
  %v157 = vld [vmem:[%s11 + $0x28] sm:$0xf]
  %v158 = vld [vmem:[%s11 + $0x2c] sm:$0xf]
  %v159 = vld [vmem:[%s11 + $0x30] sm:$0xf]
  %v160 = vld [vmem:[%s11 + $0x34] sm:$0xf]
  %v161 = vld [vmem:[%s11 + $0x38] sm:$0xf]
  %v162 = vld [vmem:[%s11 + $0x3c] sm:$0xf]
  %v163 = vld [vmem:[%s12] sm:$0xf]
  %v164 = vld [vmem:[%s12 + $0x4] sm:$0xf]
  %v165 = vld [vmem:[%s12 + $0x8] sm:$0xf]
  %v166 = vld [vmem:[%s12 + $0xc] sm:$0xf]
  %v167 = vld [vmem:[%s12 + $0x10] sm:$0xf]
  %v168 = vld [vmem:[%s12 + $0x14] sm:$0xf]
  %v169 = vld [vmem:[%s12 + $0x18] sm:$0xf]
  %v170 = vld [vmem:[%s12 + $0x1c] sm:$0xf]
  %v171 = vld [vmem:[%s12 + $0x20] sm:$0xf]
  %v172 = vld [vmem:[%s12 + $0x24] sm:$0xf]
  %v173 = vld [vmem:[%s12 + $0x28] sm:$0xf]
  %v174 = vld [vmem:[%s12 + $0x2c] sm:$0xf]
  %v175 = vld [vmem:[%s12 + $0x30] sm:$0xf]
  %v176 = vld [vmem:[%s12 + $0x34] sm:$0xf]
  %v177 = vld [vmem:[%s12 + $0x38] sm:$0xf]
  %v178 = vld [vmem:[%s12 + $0x3c] sm:$0xf]
  %v179 = vld [vmem:[%s0] sm:$0xf]
  %v180 = vld [vmem:[%s0 + $0x4] sm:$0xf]
  %v181 = vld [vmem:[%s0 + $0x8] sm:$0xf]
  %v182 = vld [vmem:[%s0 + $0xc] sm:$0xf]
  %v183 = vld [vmem:[%s0 + $0x10] sm:$0xf]
  %v184 = vld [vmem:[%s0 + $0x14] sm:$0xf]
  %v185 = vld [vmem:[%s0 + $0x18] sm:$0xf]
  %v186 = vld [vmem:[%s0 + $0x1c] sm:$0xf]
  %v187 = vld [vmem:[%s3] sm:$0x1]
  %v189 = vperm.slane %v187, 0
  %v199 = vunpack.c.l.b16 %v179
  %v200 = vunpack.c.l.b16 %v180
  %v201 = vunpack.c.l.b16 %v181
  %v202 = vunpack.c.l.b16 %v182
  %v203 = vunpack.c.l.b16 %v183
  %v204 = vunpack.c.l.b16 %v184
  %v205 = vunpack.c.l.b16 %v185
  %v206 = vunpack.c.l.b16 %v186
  %v207 = vpack.c.b16 %v200, %v199
  %v208 = vpack.c.b16 %v202, %v201
  %v209 = vpack.c.b16 %v204, %v203
  %v210 = vpack.c.b16 %v206, %v205
  %v213 = vunpack.c.l.b16 %v65
  %v214 = vunpack.c.l.b16 %v66
  %v215 = vpack.c.b16 %v214, %v213
  %vm217 = vcmask 130048
  %v219 = vsel %vm217, %v207, 0
  %v222 = vsel %vm217, %v208, 0
  %v225 = vsel %vm217, %v209, 0
  %v228 = vsel %vm217, %v210, 0
  %230 = vmatpush.bf16.msra.mxu0 0
  %231 = vmatpush.bf16.msra.mxu0 0
  %232 = vmatpush.bf16.msra.mxu0 0
  %233 = vmatpush.bf16.msra.mxu0 0
  %234 = vmatpush.bf16.msra.mxu0 0
  %235 = vmatpush.bf16.msra.mxu0 0
  %236 = vmatpush.bf16.msra.mxu0 0
  %237 = vmatpush.bf16.msra.mxu0 %v215
  %238 = vmatmul.bf16.gmra.mxu0 %v219
  %v239 = vpop.f32.mrf.mxu0
  %v240 = vadd.f32 %v189, %v239
  %v241 = vpop.f32.mrf.mxu0
  %v242 = vadd.f32 %v189, %v241
  %243 = vmatmul.bf16.gmra.mxu0 %v222
  %v244 = vpop.f32.mrf.mxu0
  %v245 = vadd.f32 %v189, %v244
  %v246 = vpop.f32.mrf.mxu0
  %v247 = vadd.f32 %v189, %v246
  %248 = vmatmul.bf16.gmra.mxu0 %v225
  %v249 = vpop.f32.mrf.mxu0
  %v250 = vadd.f32 %v189, %v249
  %v251 = vpop.f32.mrf.mxu0
  %v252 = vadd.f32 %v189, %v251
  %253 = vmatmul.bf16.gmra.mxu0 %v228
  %v254 = vpop.f32.mrf.mxu0
  %v255 = vadd.f32 %v189, %v254
  %v256 = vpop.f32.mrf.mxu0
  %v257 = vadd.f32 %v189, %v256
  %258 = vdwg.mxu0
  %v259 = vld [vmem:[%s6] sm:$0x1]
  %v261 = vperm.slane %v259, 0
  %v263 = vld [vmem:[%s9] sm:$0x1]
  %v265 = vperm.slane %v263, 0
  %v267 = vld [vmem:[%s10] sm:$0x1]
  %v269 = vperm.slane %v267, 0
  %v271 = vld [vmem:[%s13] sm:$0x1]
  %v273 = vperm.slane %v271, 0
  %v275 = vld [vmem:[%s14] sm:$0x1]
  %v277 = vperm.slane %v275, 0
  %v295 = vunpack.c.l.b16 %v67
  %v296 = vunpack.c.l.b16 %v68
  %v297 = vunpack.c.l.b16 %v69
  %v298 = vunpack.c.l.b16 %v70
  %v299 = vunpack.c.l.b16 %v71
  %v300 = vunpack.c.l.b16 %v72
  %v301 = vunpack.c.l.b16 %v73
  %v302 = vunpack.c.l.b16 %v74
  %v303 = vunpack.c.l.b16 %v75
  %v304 = vunpack.c.l.b16 %v76
  %v305 = vunpack.c.l.b16 %v77
  %v306 = vunpack.c.l.b16 %v78
  %v307 = vunpack.c.l.b16 %v79
  %v308 = vunpack.c.l.b16 %v80
  %v309 = vunpack.c.l.b16 %v81
  %v310 = vunpack.c.l.b16 %v82
  %v311 = vpack.c.b16 %v296, %v295
  %v312 = vpack.c.b16 %v298, %v297
  %v313 = vpack.c.b16 %v300, %v299
  %v314 = vpack.c.b16 %v302, %v301
  %v315 = vpack.c.b16 %v304, %v303
  %v316 = vpack.c.b16 %v306, %v305
  %v317 = vpack.c.b16 %v308, %v307
  %v318 = vpack.c.b16 %v310, %v309
  %327 = vmatpush.bf16.msra.mxu0 %v318
  %328 = vmatpush.bf16.msra.mxu0 %v317
  %329 = vmatpush.bf16.msra.mxu0 %v316
  %330 = vmatpush.bf16.msra.mxu0 %v315
  %331 = vmatpush.bf16.msra.mxu0 %v314
  %332 = vmatpush.bf16.msra.mxu0 %v313
  %333 = vmatpush.bf16.msra.mxu0 %v312
  %334 = vmatpush.bf16.msra.mxu0 %v311
  %335 = vmatmul.bf16.gmra.mxu0 0
  %v336 = vpop.f32.mrf.mxu0
  %v337 = vadd.f32 0.0, %v336
  %v338 = vpop.f32.mrf.mxu0
  %339 = vdwg.mxu0
  %v340 = vadd.f32 %v240, %v337
  %v341 = vmul.f32 %v340, 0.5
  %v342 = vtanh.pop %v341
  %v343 = vmul.f32 %v342, 0.5
  %v344 = vadd.f32 %v343, 0.5
  %v345 = vtanh.pop %v340
  %346 = vrot.lane.b32.xlu0 %v344, 96
  %v347 = vpop.permute.xlu0 %346
  %v348 = vmul.f32 %v347, 0.0
  %349 = vrot.lane.b32.xlu0 %v345, 64
  %v350 = vpop.permute.xlu0 %349
  %v351 = vmul.f32 %v344, %v350
  %v352 = vadd.f32 %v348, %v351
  %353 = vrot.lane.b32.xlu0 %v344, 32
  %v354 = vpop.permute.xlu0 %353
  %v355 = vtanh.pop %v352
  %v356 = vmul.f32 %v354, %v355
  %v357 = vpack.c.bf16 %v356, %v356
  %v374 = vunpack.c.l.b16 %v99
  %v375 = vunpack.c.l.b16 %v100
  %v376 = vunpack.c.l.b16 %v101
  %v377 = vunpack.c.l.b16 %v102
  %v378 = vunpack.c.l.b16 %v103
  %v379 = vunpack.c.l.b16 %v104
  %v380 = vunpack.c.l.b16 %v105
  %v381 = vunpack.c.l.b16 %v106
  %v382 = vunpack.c.l.b16 %v107
  %v383 = vunpack.c.l.b16 %v108
  %v384 = vunpack.c.l.b16 %v109
  %v385 = vunpack.c.l.b16 %v110
  %v386 = vunpack.c.l.b16 %v111
  %v387 = vunpack.c.l.b16 %v112
  %v388 = vunpack.c.l.b16 %v113
  %v389 = vunpack.c.l.b16 %v114
  %v390 = vpack.c.b16 %v375, %v374
  %v391 = vpack.c.b16 %v377, %v376
  %v392 = vpack.c.b16 %v379, %v378
  %v393 = vpack.c.b16 %v381, %v380
  %v394 = vpack.c.b16 %v383, %v382
  %v395 = vpack.c.b16 %v385, %v384
  %v396 = vpack.c.b16 %v387, %v386
  %v397 = vpack.c.b16 %v389, %v388
  %406 = vmatpush.bf16.msra.mxu0 %v397
  %407 = vmatpush.bf16.msra.mxu0 %v396
  %408 = vmatpush.bf16.msra.mxu0 %v395
  %409 = vmatpush.bf16.msra.mxu0 %v394
  %410 = vmatpush.bf16.msra.mxu0 %v393
  %411 = vmatpush.bf16.msra.mxu0 %v392
  %412 = vmatpush.bf16.msra.mxu0 %v391
  %413 = vmatpush.bf16.msra.mxu0 %v390
  %414 = vmatmul.bf16.gmra.mxu0 0
  %v415 = vpop.f32.mrf.mxu0
  %v416 = vadd.f32 0.0, %v415
  %v417 = vpop.f32.mrf.mxu0
  %418 = vdwg.mxu0
  %v435 = vunpack.c.l.b16 %v83
  %v436 = vunpack.c.l.b16 %v84
  %v437 = vunpack.c.l.b16 %v85
  %v438 = vunpack.c.l.b16 %v86
  %v439 = vunpack.c.l.b16 %v87
  %v440 = vunpack.c.l.b16 %v88
  %v441 = vunpack.c.l.b16 %v89
  %v442 = vunpack.c.l.b16 %v90
  %v443 = vunpack.c.l.b16 %v91
  %v444 = vunpack.c.l.b16 %v92
  %v445 = vunpack.c.l.b16 %v93
  %v446 = vunpack.c.l.b16 %v94
  %v447 = vunpack.c.l.b16 %v95
  %v448 = vunpack.c.l.b16 %v96
  %v449 = vunpack.c.l.b16 %v97
  %v450 = vunpack.c.l.b16 %v98
  %v451 = vpack.c.b16 %v436, %v435
  %v452 = vpack.c.b16 %v438, %v437
  %v453 = vpack.c.b16 %v440, %v439
  %v454 = vpack.c.b16 %v442, %v441
  %v455 = vpack.c.b16 %v444, %v443
  %v456 = vpack.c.b16 %v446, %v445
  %v457 = vpack.c.b16 %v448, %v447
  %v458 = vpack.c.b16 %v450, %v449
  %467 = vmatpush.bf16.msra.mxu0 %v458
  %468 = vmatpush.bf16.msra.mxu0 %v457
  %469 = vmatpush.bf16.msra.mxu0 %v456
  %470 = vmatpush.bf16.msra.mxu0 %v455
  %471 = vmatpush.bf16.msra.mxu0 %v454
  %472 = vmatpush.bf16.msra.mxu0 %v453
  %473 = vmatpush.bf16.msra.mxu0 %v452
  %474 = vmatpush.bf16.msra.mxu0 %v451
  %475 = vmatmul.bf16.gmra.mxu0 %v357
  %v476 = vpop.f32.mrf.mxu0
  %v477 = vadd.f32 %v416, %v476
  %v478 = vpop.f32.mrf.mxu0
  %479 = vdwg.mxu0
  %v480 = vadd.f32 %v477, %v261
  %v481 = vmul.f32 %v480, 0.5
  %v482 = vtanh.pop %v481
  %v483 = vmul.f32 %v482, 0.5
  %v484 = vadd.f32 %v483, 0.5
  %v485 = vtanh.pop %v480
  %486 = vrot.lane.b32.xlu0 %v484, 96
  %v487 = vpop.permute.xlu0 %486
  %v488 = vmul.f32 %v487, 0.0
  %489 = vrot.lane.b32.xlu0 %v485, 64
  %v490 = vpop.permute.xlu0 %489
  %v491 = vmul.f32 %v484, %v490
  %v492 = vadd.f32 %v488, %v491
  %493 = vrot.lane.b32.xlu0 %v484, 32
  %v494 = vpop.permute.xlu0 %493
  %v495 = vtanh.pop %v492
  %v496 = vmul.f32 %v494, %v495
  %v497 = vpack.c.bf16 %v496, %v496
  %v514 = vunpack.c.l.b16 %v115
  %v515 = vunpack.c.l.b16 %v116
  %v516 = vunpack.c.l.b16 %v117
  %v517 = vunpack.c.l.b16 %v118
  %v518 = vunpack.c.l.b16 %v119
  %v519 = vunpack.c.l.b16 %v120
  %v520 = vunpack.c.l.b16 %v121
  %v521 = vunpack.c.l.b16 %v122
  %v522 = vunpack.c.l.b16 %v123
  %v523 = vunpack.c.l.b16 %v124
  %v524 = vunpack.c.l.b16 %v125
  %v525 = vunpack.c.l.b16 %v126
  %v526 = vunpack.c.l.b16 %v127
  %v527 = vunpack.c.l.b16 %v128
  %v528 = vunpack.c.l.b16 %v129
  %v529 = vunpack.c.l.b16 %v130
  %v530 = vpack.c.b16 %v515, %v514
  %v531 = vpack.c.b16 %v517, %v516
  %v532 = vpack.c.b16 %v519, %v518
  %v533 = vpack.c.b16 %v521, %v520
  %v534 = vpack.c.b16 %v523, %v522
  %v535 = vpack.c.b16 %v525, %v524
  %v536 = vpack.c.b16 %v527, %v526
  %v537 = vpack.c.b16 %v529, %v528
  %546 = vmatpush.bf16.msra.mxu0 %v537
  %547 = vmatpush.bf16.msra.mxu0 %v536
  %548 = vmatpush.bf16.msra.mxu0 %v535
  %549 = vmatpush.bf16.msra.mxu0 %v534
  %550 = vmatpush.bf16.msra.mxu0 %v533
  %551 = vmatpush.bf16.msra.mxu0 %v532
  %552 = vmatpush.bf16.msra.mxu0 %v531
  %553 = vmatpush.bf16.msra.mxu0 %v530
  %554 = vmatmul.bf16.gmra.mxu0 %v497
  %v555 = vpop.f32.mrf.mxu0
  %v556 = vadd.f32 %v265, %v555
  %v557 = vpop.f32.mrf.mxu0
  %558 = vdwg.mxu0
  %v575 = vunpack.c.l.b16 %v131
  %v576 = vunpack.c.l.b16 %v132
  %v577 = vunpack.c.l.b16 %v133
  %v578 = vunpack.c.l.b16 %v134
  %v579 = vunpack.c.l.b16 %v135
  %v580 = vunpack.c.l.b16 %v136
  %v581 = vunpack.c.l.b16 %v137
  %v582 = vunpack.c.l.b16 %v138
  %v583 = vunpack.c.l.b16 %v139
  %v584 = vunpack.c.l.b16 %v140
  %v585 = vunpack.c.l.b16 %v141
  %v586 = vunpack.c.l.b16 %v142
  %v587 = vunpack.c.l.b16 %v143
  %v588 = vunpack.c.l.b16 %v144
  %v589 = vunpack.c.l.b16 %v145
  %v590 = vunpack.c.l.b16 %v146
  %v591 = vpack.c.b16 %v576, %v575
  %v592 = vpack.c.b16 %v578, %v577
  %v593 = vpack.c.b16 %v580, %v579
  %v594 = vpack.c.b16 %v582, %v581
  %v595 = vpack.c.b16 %v584, %v583
  %v596 = vpack.c.b16 %v586, %v585
  %v597 = vpack.c.b16 %v588, %v587
  %v598 = vpack.c.b16 %v590, %v589
  %607 = vmatpush.bf16.msra.mxu0 %v598
  %608 = vmatpush.bf16.msra.mxu0 %v597
  %609 = vmatpush.bf16.msra.mxu0 %v596
  %610 = vmatpush.bf16.msra.mxu0 %v595
  %611 = vmatpush.bf16.msra.mxu0 %v594
  %612 = vmatpush.bf16.msra.mxu0 %v593
  %613 = vmatpush.bf16.msra.mxu0 %v592
  %614 = vmatpush.bf16.msra.mxu0 %v591
  %615 = vmatmul.bf16.gmra.mxu0 0
  %v616 = vpop.f32.mrf.mxu0
  %v617 = vadd.f32 %v269, %v616
  %v618 = vpop.f32.mrf.mxu0
  %619 = vdwg.mxu0
  %v620 = vadd.f32 %v556, %v617
  %v621 = vmul.f32 %v620, 0.5
  %v622 = vtanh.pop %v621
  %v623 = vmul.f32 %v622, 0.5
  %v624 = vadd.f32 %v623, 0.5
  %625 = vrot.lane.b32.xlu0 %v624, 64
  %v626 = vpop.permute.xlu0 %625
  %v627 = vmul.f32 %v626, %v617
  %v628 = vadd.f32 %v556, %v627
  %v629 = vtanh.pop %v628
  %630 = vrot.lane.b32.xlu0 %v624, 96
  %v631 = vpop.permute.xlu0 %630
  %v632 = vsub.f32 1.0, %v631
  %633 = vrot.lane.b32.xlu0 %v629, 64
  %v634 = vpop.permute.xlu0 %633
  %v635 = vmul.f32 %v632, %v634
  %v636 = vmul.f32 %v631, 0.0
  %v637 = vadd.f32 %v635, %v636
  %v638 = vpack.c.bf16 %v637, %v637
  %v655 = vunpack.c.l.b16 %v147
  %v656 = vunpack.c.l.b16 %v148
  %v657 = vunpack.c.l.b16 %v149
  %v658 = vunpack.c.l.b16 %v150
  %v659 = vunpack.c.l.b16 %v151
  %v660 = vunpack.c.l.b16 %v152
  %v661 = vunpack.c.l.b16 %v153
  %v662 = vunpack.c.l.b16 %v154
  %v663 = vunpack.c.l.b16 %v155
  %v664 = vunpack.c.l.b16 %v156
  %v665 = vunpack.c.l.b16 %v157
  %v666 = vunpack.c.l.b16 %v158
  %v667 = vunpack.c.l.b16 %v159
  %v668 = vunpack.c.l.b16 %v160
  %v669 = vunpack.c.l.b16 %v161
  %v670 = vunpack.c.l.b16 %v162
  %v671 = vpack.c.b16 %v656, %v655
  %v672 = vpack.c.b16 %v658, %v657
  %v673 = vpack.c.b16 %v660, %v659
  %v674 = vpack.c.b16 %v662, %v661
  %v675 = vpack.c.b16 %v664, %v663
  %v676 = vpack.c.b16 %v666, %v665
  %v677 = vpack.c.b16 %v668, %v667
  %v678 = vpack.c.b16 %v670, %v669
  %687 = vmatpush.bf16.msra.mxu0 %v678
  %688 = vmatpush.bf16.msra.mxu0 %v677
  %689 = vmatpush.bf16.msra.mxu0 %v676
  %690 = vmatpush.bf16.msra.mxu0 %v675
  %691 = vmatpush.bf16.msra.mxu0 %v674
  %692 = vmatpush.bf16.msra.mxu0 %v673
  %693 = vmatpush.bf16.msra.mxu0 %v672
  %694 = vmatpush.bf16.msra.mxu0 %v671
  %695 = vmatmul.bf16.gmra.mxu0 %v638
  %v696 = vpop.f32.mrf.mxu0
  %v697 = vadd.f32 %v273, %v696
  %v698 = vpop.f32.mrf.mxu0
  %699 = vdwg.mxu0
  %v716 = vunpack.c.l.b16 %v163
  %v717 = vunpack.c.l.b16 %v164
  %v718 = vunpack.c.l.b16 %v165
  %v719 = vunpack.c.l.b16 %v166
  %v720 = vunpack.c.l.b16 %v167
  %v721 = vunpack.c.l.b16 %v168
  %v722 = vunpack.c.l.b16 %v169
  %v723 = vunpack.c.l.b16 %v170
  %v724 = vunpack.c.l.b16 %v171
  %v725 = vunpack.c.l.b16 %v172
  %v726 = vunpack.c.l.b16 %v173
  %v727 = vunpack.c.l.b16 %v174
  %v728 = vunpack.c.l.b16 %v175
  %v729 = vunpack.c.l.b16 %v176
  %v730 = vunpack.c.l.b16 %v177
  %v731 = vunpack.c.l.b16 %v178
  %v732 = vpack.c.b16 %v717, %v716
  %v733 = vpack.c.b16 %v719, %v718
  %v734 = vpack.c.b16 %v721, %v720
  %v735 = vpack.c.b16 %v723, %v722
  %v736 = vpack.c.b16 %v725, %v724
  %v737 = vpack.c.b16 %v727, %v726
  %v738 = vpack.c.b16 %v729, %v728
  %v739 = vpack.c.b16 %v731, %v730
  %748 = vmatpush.bf16.msra.mxu0 %v739
  %749 = vmatpush.bf16.msra.mxu0 %v738
  %750 = vmatpush.bf16.msra.mxu0 %v737
  %751 = vmatpush.bf16.msra.mxu0 %v736
  %752 = vmatpush.bf16.msra.mxu0 %v735
  %753 = vmatpush.bf16.msra.mxu0 %v734
  %754 = vmatpush.bf16.msra.mxu0 %v733
  %755 = vmatpush.bf16.msra.mxu0 %v732
  %756 = vmatmul.bf16.gmra.mxu0 0
  %v757 = vpop.f32.mrf.mxu0
  %v758 = vadd.f32 %v277, %v757
  %v759 = vpop.f32.mrf.mxu0
  %760 = vdwg.mxu0
  %v761 = vadd.f32 %v697, %v758
  %v762 = vmul.f32 %v761, 0.5
  %v763 = vtanh.pop %v762
  %v764 = vmul.f32 %v763, 0.5
  %v765 = vadd.f32 %v764, 0.5
  %766 = vrot.lane.b32.xlu0 %v765, 64
  %v767 = vpop.permute.xlu0 %766
  %v768 = vmul.f32 %v767, %v758
  %v769 = vadd.f32 %v697, %v768
  %v770 = vtanh.pop %v769
  %771 = vrot.lane.b32.xlu0 %v765, 96
  %v772 = vpop.permute.xlu0 %771
  %v773 = vsub.f32 1.0, %v772
  %774 = vrot.lane.b32.xlu0 %v770, 64
  %v775 = vpop.permute.xlu0 %774
  %v776 = vmul.f32 %v773, %v775
  %v777 = vmul.f32 %v772, 0.0
  %v778 = vadd.f32 %v776, %v777
  %v779 = vpack.c.bf16 %v778, %v778
  %780 = vmatpush.bf16.msra.mxu0 %v318
  %781 = vmatpush.bf16.msra.mxu0 %v317
  %782 = vmatpush.bf16.msra.mxu0 %v316
  %783 = vmatpush.bf16.msra.mxu0 %v315
  %784 = vmatpush.bf16.msra.mxu0 %v314
  %785 = vmatpush.bf16.msra.mxu0 %v313
  %786 = vmatpush.bf16.msra.mxu0 %v312
  %787 = vmatpush.bf16.msra.mxu0 %v311
  %788 = vmatmul.bf16.gmra.mxu0 %v357
  %v789 = vpop.f32.mrf.mxu0
  %v790 = vadd.f32 0.0, %v789
  %v791 = vpop.f32.mrf.mxu0
  %792 = vdwg.mxu0
  %v793 = vadd.f32 %v242, %v790
  %v794 = vmul.f32 %v793, 0.5
  %v795 = vtanh.pop %v794
  %v796 = vmul.f32 %v795, 0.5
  %v797 = vadd.f32 %v796, 0.5
  %v798 = vtanh.pop %v793
  %799 = vrot.lane.b32.xlu0 %v797, 96
  %v800 = vpop.permute.xlu0 %799
  %v801 = vmul.f32 %v800, %v352
  %802 = vrot.lane.b32.xlu0 %v798, 64
  %v803 = vpop.permute.xlu0 %802
  %v804 = vmul.f32 %v797, %v803
  %v805 = vadd.f32 %v801, %v804
  %806 = vrot.lane.b32.xlu0 %v797, 32
  %v807 = vpop.permute.xlu0 %806
  %v808 = vtanh.pop %v805
  %v809 = vmul.f32 %v807, %v808
  %v810 = vpack.c.bf16 %v809, %v809
  %811 = vmatpush.bf16.msra.mxu0 %v397
  %812 = vmatpush.bf16.msra.mxu0 %v396
  %813 = vmatpush.bf16.msra.mxu0 %v395
  %814 = vmatpush.bf16.msra.mxu0 %v394
  %815 = vmatpush.bf16.msra.mxu0 %v393
  %816 = vmatpush.bf16.msra.mxu0 %v392
  %817 = vmatpush.bf16.msra.mxu0 %v391
  %818 = vmatpush.bf16.msra.mxu0 %v390
  %819 = vmatmul.bf16.gmra.mxu0 %v497
  %v820 = vpop.f32.mrf.mxu0
  %v821 = vadd.f32 0.0, %v820
  %v822 = vpop.f32.mrf.mxu0
  %823 = vdwg.mxu0
  %824 = vmatpush.bf16.msra.mxu0 %v458
  %825 = vmatpush.bf16.msra.mxu0 %v457
  %826 = vmatpush.bf16.msra.mxu0 %v456
  %827 = vmatpush.bf16.msra.mxu0 %v455
  %828 = vmatpush.bf16.msra.mxu0 %v454
  %829 = vmatpush.bf16.msra.mxu0 %v453
  %830 = vmatpush.bf16.msra.mxu0 %v452
  %831 = vmatpush.bf16.msra.mxu0 %v451
  %832 = vmatmul.bf16.gmra.mxu0 %v810
  %v833 = vpop.f32.mrf.mxu0
  %v834 = vadd.f32 %v821, %v833
  %v835 = vpop.f32.mrf.mxu0
  %836 = vdwg.mxu0
  %v837 = vadd.f32 %v834, %v261
  %v838 = vmul.f32 %v837, 0.5
  %v839 = vtanh.pop %v838
  %v840 = vmul.f32 %v839, 0.5
  %v841 = vadd.f32 %v840, 0.5
  %v842 = vtanh.pop %v837
  %843 = vrot.lane.b32.xlu0 %v841, 96
  %v844 = vpop.permute.xlu0 %843
  %v845 = vmul.f32 %v844, %v492
  %846 = vrot.lane.b32.xlu0 %v842, 64
  %v847 = vpop.permute.xlu0 %846
  %v848 = vmul.f32 %v841, %v847
  %v849 = vadd.f32 %v845, %v848
  %850 = vrot.lane.b32.xlu0 %v841, 32
  %v851 = vpop.permute.xlu0 %850
  %v852 = vtanh.pop %v849
  %v853 = vmul.f32 %v851, %v852
  %v854 = vpack.c.bf16 %v853, %v853
  %855 = vmatpush.bf16.msra.mxu0 %v537
  %856 = vmatpush.bf16.msra.mxu0 %v536
  %857 = vmatpush.bf16.msra.mxu0 %v535
  %858 = vmatpush.bf16.msra.mxu0 %v534
  %859 = vmatpush.bf16.msra.mxu0 %v533
  %860 = vmatpush.bf16.msra.mxu0 %v532
  %861 = vmatpush.bf16.msra.mxu0 %v531
  %862 = vmatpush.bf16.msra.mxu0 %v530
  %863 = vmatmul.bf16.gmra.mxu0 %v854
  %v864 = vpop.f32.mrf.mxu0
  %v865 = vadd.f32 %v265, %v864
  %v866 = vpop.f32.mrf.mxu0
  %867 = vdwg.mxu0
  %868 = vmatpush.bf16.msra.mxu0 %v598
  %869 = vmatpush.bf16.msra.mxu0 %v597
  %870 = vmatpush.bf16.msra.mxu0 %v596
  %871 = vmatpush.bf16.msra.mxu0 %v595
  %872 = vmatpush.bf16.msra.mxu0 %v594
  %873 = vmatpush.bf16.msra.mxu0 %v593
  %874 = vmatpush.bf16.msra.mxu0 %v592
  %875 = vmatpush.bf16.msra.mxu0 %v591
  %876 = vmatmul.bf16.gmra.mxu0 %v638
  %v877 = vpop.f32.mrf.mxu0
  %v878 = vadd.f32 %v269, %v877
  %v879 = vpop.f32.mrf.mxu0
  %880 = vdwg.mxu0
  %v881 = vadd.f32 %v865, %v878
  %v882 = vmul.f32 %v881, 0.5
  %v883 = vtanh.pop %v882
  %v884 = vmul.f32 %v883, 0.5
  %v885 = vadd.f32 %v884, 0.5
  %886 = vrot.lane.b32.xlu0 %v885, 64
  %v887 = vpop.permute.xlu0 %886
  %v888 = vmul.f32 %v887, %v878
  %v889 = vadd.f32 %v865, %v888
  %v890 = vtanh.pop %v889
  %891 = vrot.lane.b32.xlu0 %v885, 96
  %v892 = vpop.permute.xlu0 %891
  %v893 = vsub.f32 1.0, %v892
  %894 = vrot.lane.b32.xlu0 %v890, 64
  %v895 = vpop.permute.xlu0 %894
  %v896 = vmul.f32 %v893, %v895
  %v897 = vmul.f32 %v892, %v637
  %v898 = vadd.f32 %v896, %v897
  %v899 = vpack.c.bf16 %v898, %v898
  %900 = vmatpush.bf16.msra.mxu0 %v678
  %901 = vmatpush.bf16.msra.mxu0 %v677
  %902 = vmatpush.bf16.msra.mxu0 %v676
  %903 = vmatpush.bf16.msra.mxu0 %v675
  %904 = vmatpush.bf16.msra.mxu0 %v674
  %905 = vmatpush.bf16.msra.mxu0 %v673
  %906 = vmatpush.bf16.msra.mxu0 %v672
  %907 = vmatpush.bf16.msra.mxu0 %v671
  %908 = vmatmul.bf16.gmra.mxu0 %v899
  %v909 = vpop.f32.mrf.mxu0
  %v910 = vadd.f32 %v273, %v909
  %v911 = vpop.f32.mrf.mxu0
  %912 = vdwg.mxu0
  %913 = vmatpush.bf16.msra.mxu0 %v739
  %914 = vmatpush.bf16.msra.mxu0 %v738
  %915 = vmatpush.bf16.msra.mxu0 %v737
  %916 = vmatpush.bf16.msra.mxu0 %v736
  %917 = vmatpush.bf16.msra.mxu0 %v735
  %918 = vmatpush.bf16.msra.mxu0 %v734
  %919 = vmatpush.bf16.msra.mxu0 %v733
  %920 = vmatpush.bf16.msra.mxu0 %v732
  %921 = vmatmul.bf16.gmra.mxu0 %v779
  %v922 = vpop.f32.mrf.mxu0
  %v923 = vadd.f32 %v277, %v922
  %v924 = vpop.f32.mrf.mxu0
  %925 = vdwg.mxu0
  %v926 = vadd.f32 %v910, %v923
  %v927 = vmul.f32 %v926, 0.5
  %v928 = vtanh.pop %v927
  %v929 = vmul.f32 %v928, 0.5
  %v930 = vadd.f32 %v929, 0.5
  %931 = vrot.lane.b32.xlu0 %v930, 64
  %v932 = vpop.permute.xlu0 %931
  %v933 = vmul.f32 %v932, %v923
  %v934 = vadd.f32 %v910, %v933
  %v935 = vtanh.pop %v934
  %936 = vrot.lane.b32.xlu0 %v930, 96
  %v937 = vpop.permute.xlu0 %936
  %v938 = vsub.f32 1.0, %v937
  %939 = vrot.lane.b32.xlu0 %v935, 64
  %v940 = vpop.permute.xlu0 %939
  %v941 = vmul.f32 %v938, %v940
  %v942 = vmul.f32 %v937, %v778
  %v943 = vadd.f32 %v941, %v942
  %v944 = vpack.c.bf16 %v943, %v943
  %945 = vmatpush.bf16.msra.mxu0 %v318
  %946 = vmatpush.bf16.msra.mxu0 %v317
  %947 = vmatpush.bf16.msra.mxu0 %v316
  %948 = vmatpush.bf16.msra.mxu0 %v315
  %949 = vmatpush.bf16.msra.mxu0 %v314
  %950 = vmatpush.bf16.msra.mxu0 %v313
  %951 = vmatpush.bf16.msra.mxu0 %v312
  %952 = vmatpush.bf16.msra.mxu0 %v311
  %953 = vmatmul.bf16.gmra.mxu0 %v810
  %v954 = vpop.f32.mrf.mxu0
  %v955 = vadd.f32 0.0, %v954
  %v956 = vpop.f32.mrf.mxu0
  %957 = vdwg.mxu0
  %v958 = vadd.f32 %v245, %v955
  %v959 = vmul.f32 %v958, 0.5
  %v960 = vtanh.pop %v959
  %v961 = vmul.f32 %v960, 0.5
  %v962 = vadd.f32 %v961, 0.5
  %v963 = vtanh.pop %v958
  %964 = vrot.lane.b32.xlu0 %v962, 96
  %v965 = vpop.permute.xlu0 %964
  %v966 = vmul.f32 %v965, %v805
  %967 = vrot.lane.b32.xlu0 %v963, 64
  %v968 = vpop.permute.xlu0 %967
  %v969 = vmul.f32 %v962, %v968
  %v970 = vadd.f32 %v966, %v969
  %971 = vrot.lane.b32.xlu0 %v962, 32
  %v972 = vpop.permute.xlu0 %971
  %v973 = vtanh.pop %v970
  %v974 = vmul.f32 %v972, %v973
  %v975 = vpack.c.bf16 %v974, %v974
  %976 = vmatpush.bf16.msra.mxu0 %v397
  %977 = vmatpush.bf16.msra.mxu0 %v396
  %978 = vmatpush.bf16.msra.mxu0 %v395
  %979 = vmatpush.bf16.msra.mxu0 %v394
  %980 = vmatpush.bf16.msra.mxu0 %v393
  %981 = vmatpush.bf16.msra.mxu0 %v392
  %982 = vmatpush.bf16.msra.mxu0 %v391
  %983 = vmatpush.bf16.msra.mxu0 %v390
  %984 = vmatmul.bf16.gmra.mxu0 %v854
  %v985 = vpop.f32.mrf.mxu0
  %v986 = vadd.f32 0.0, %v985
  %v987 = vpop.f32.mrf.mxu0
  %988 = vdwg.mxu0
  %989 = vmatpush.bf16.msra.mxu0 %v458
  %990 = vmatpush.bf16.msra.mxu0 %v457
  %991 = vmatpush.bf16.msra.mxu0 %v456
  %992 = vmatpush.bf16.msra.mxu0 %v455
  %993 = vmatpush.bf16.msra.mxu0 %v454
  %994 = vmatpush.bf16.msra.mxu0 %v453
  %995 = vmatpush.bf16.msra.mxu0 %v452
  %996 = vmatpush.bf16.msra.mxu0 %v451
  %997 = vmatmul.bf16.gmra.mxu0 %v975
  %v998 = vpop.f32.mrf.mxu0
  %v999 = vadd.f32 %v986, %v998
  %v1000 = vpop.f32.mrf.mxu0
  %1001 = vdwg.mxu0
  %v1002 = vadd.f32 %v999, %v261
  %v1003 = vmul.f32 %v1002, 0.5
  %v1004 = vtanh.pop %v1003
  %v1005 = vmul.f32 %v1004, 0.5
  %v1006 = vadd.f32 %v1005, 0.5
  %v1007 = vtanh.pop %v1002
  %1008 = vrot.lane.b32.xlu0 %v1006, 96
  %v1009 = vpop.permute.xlu0 %1008
  %v1010 = vmul.f32 %v1009, %v849
  %1011 = vrot.lane.b32.xlu0 %v1007, 64
  %v1012 = vpop.permute.xlu0 %1011
  %v1013 = vmul.f32 %v1006, %v1012
  %v1014 = vadd.f32 %v1010, %v1013
  %1015 = vrot.lane.b32.xlu0 %v1006, 32
  %v1016 = vpop.permute.xlu0 %1015
  %v1017 = vtanh.pop %v1014
  %v1018 = vmul.f32 %v1016, %v1017
  %v1019 = vpack.c.bf16 %v1018, %v1018
  %1020 = vmatpush.bf16.msra.mxu0 %v537
  %1021 = vmatpush.bf16.msra.mxu0 %v536
  %1022 = vmatpush.bf16.msra.mxu0 %v535
  %1023 = vmatpush.bf16.msra.mxu0 %v534
  %1024 = vmatpush.bf16.msra.mxu0 %v533
  %1025 = vmatpush.bf16.msra.mxu0 %v532
  %1026 = vmatpush.bf16.msra.mxu0 %v531
  %1027 = vmatpush.bf16.msra.mxu0 %v530
  %1028 = vmatmul.bf16.gmra.mxu0 %v1019
  %v1029 = vpop.f32.mrf.mxu0
  %v1030 = vadd.f32 %v265, %v1029
  %v1031 = vpop.f32.mrf.mxu0
  %1032 = vdwg.mxu0
  %1033 = vmatpush.bf16.msra.mxu0 %v598
  %1034 = vmatpush.bf16.msra.mxu0 %v597
  %1035 = vmatpush.bf16.msra.mxu0 %v596
  %1036 = vmatpush.bf16.msra.mxu0 %v595
  %1037 = vmatpush.bf16.msra.mxu0 %v594
  %1038 = vmatpush.bf16.msra.mxu0 %v593
  %1039 = vmatpush.bf16.msra.mxu0 %v592
  %1040 = vmatpush.bf16.msra.mxu0 %v591
  %1041 = vmatmul.bf16.gmra.mxu0 %v899
  %v1042 = vpop.f32.mrf.mxu0
  %v1043 = vadd.f32 %v269, %v1042
  %v1044 = vpop.f32.mrf.mxu0
  %1045 = vdwg.mxu0
  %v1046 = vadd.f32 %v1030, %v1043
  %v1047 = vmul.f32 %v1046, 0.5
  %v1048 = vtanh.pop %v1047
  %v1049 = vmul.f32 %v1048, 0.5
  %v1050 = vadd.f32 %v1049, 0.5
  %1051 = vrot.lane.b32.xlu0 %v1050, 64
  %v1052 = vpop.permute.xlu0 %1051
  %v1053 = vmul.f32 %v1052, %v1043
  %v1054 = vadd.f32 %v1030, %v1053
  %v1055 = vtanh.pop %v1054
  %1056 = vrot.lane.b32.xlu0 %v1050, 96
  %v1057 = vpop.permute.xlu0 %1056
  %v1058 = vsub.f32 1.0, %v1057
  %1059 = vrot.lane.b32.xlu0 %v1055, 64
  %v1060 = vpop.permute.xlu0 %1059
  %v1061 = vmul.f32 %v1058, %v1060
  %v1062 = vmul.f32 %v1057, %v898
  %v1063 = vadd.f32 %v1061, %v1062
  %v1064 = vpack.c.bf16 %v1063, %v1063
  %1065 = vmatpush.bf16.msra.mxu0 %v678
  %1066 = vmatpush.bf16.msra.mxu0 %v677
  %1067 = vmatpush.bf16.msra.mxu0 %v676
  %1068 = vmatpush.bf16.msra.mxu0 %v675
  %1069 = vmatpush.bf16.msra.mxu0 %v674
  %1070 = vmatpush.bf16.msra.mxu0 %v673
  %1071 = vmatpush.bf16.msra.mxu0 %v672
  %1072 = vmatpush.bf16.msra.mxu0 %v671
  %1073 = vmatmul.bf16.gmra.mxu0 %v1064
  %v1074 = vpop.f32.mrf.mxu0
  %v1075 = vadd.f32 %v273, %v1074
  %v1076 = vpop.f32.mrf.mxu0
  %1077 = vdwg.mxu0
  %1078 = vmatpush.bf16.msra.mxu0 %v739
  %1079 = vmatpush.bf16.msra.mxu0 %v738
  %1080 = vmatpush.bf16.msra.mxu0 %v737
  %1081 = vmatpush.bf16.msra.mxu0 %v736
  %1082 = vmatpush.bf16.msra.mxu0 %v735
  %1083 = vmatpush.bf16.msra.mxu0 %v734
  %1084 = vmatpush.bf16.msra.mxu0 %v733
  %1085 = vmatpush.bf16.msra.mxu0 %v732
  %1086 = vmatmul.bf16.gmra.mxu0 %v944
  %v1087 = vpop.f32.mrf.mxu0
  %v1088 = vadd.f32 %v277, %v1087
  %v1089 = vpop.f32.mrf.mxu0
  %1090 = vdwg.mxu0
  %v1091 = vadd.f32 %v1075, %v1088
  %v1092 = vmul.f32 %v1091, 0.5
  %v1093 = vtanh.pop %v1092
  %v1094 = vmul.f32 %v1093, 0.5
  %v1095 = vadd.f32 %v1094, 0.5
  %1096 = vrot.lane.b32.xlu0 %v1095, 64
  %v1097 = vpop.permute.xlu0 %1096
  %v1098 = vmul.f32 %v1097, %v1088
  %v1099 = vadd.f32 %v1075, %v1098
  %v1100 = vtanh.pop %v1099
  %1101 = vrot.lane.b32.xlu0 %v1095, 96
  %v1102 = vpop.permute.xlu0 %1101
  %v1103 = vsub.f32 1.0, %v1102
  %1104 = vrot.lane.b32.xlu0 %v1100, 64
  %v1105 = vpop.permute.xlu0 %1104
  %v1106 = vmul.f32 %v1103, %v1105
  %v1107 = vmul.f32 %v1102, %v943
  %v1108 = vadd.f32 %v1106, %v1107
  %v1109 = vpack.c.bf16 %v1108, %v1108
  %1110 = vmatpush.bf16.msra.mxu0 %v318
  %1111 = vmatpush.bf16.msra.mxu0 %v317
  %1112 = vmatpush.bf16.msra.mxu0 %v316
  %1113 = vmatpush.bf16.msra.mxu0 %v315
  %1114 = vmatpush.bf16.msra.mxu0 %v314
  %1115 = vmatpush.bf16.msra.mxu0 %v313
  %1116 = vmatpush.bf16.msra.mxu0 %v312
  %1117 = vmatpush.bf16.msra.mxu0 %v311
  %1118 = vmatmul.bf16.gmra.mxu0 %v975
  %v1119 = vpop.f32.mrf.mxu0
  %v1120 = vadd.f32 0.0, %v1119
  %v1121 = vpop.f32.mrf.mxu0
  %1122 = vdwg.mxu0
  %v1123 = vadd.f32 %v247, %v1120
  %v1124 = vmul.f32 %v1123, 0.5
  %v1125 = vtanh.pop %v1124
  %v1126 = vmul.f32 %v1125, 0.5
  %v1127 = vadd.f32 %v1126, 0.5
  %v1128 = vtanh.pop %v1123
  %1129 = vrot.lane.b32.xlu0 %v1127, 96
  %v1130 = vpop.permute.xlu0 %1129
  %v1131 = vmul.f32 %v1130, %v970
  %1132 = vrot.lane.b32.xlu0 %v1128, 64
  %v1133 = vpop.permute.xlu0 %1132
  %v1134 = vmul.f32 %v1127, %v1133
  %v1135 = vadd.f32 %v1131, %v1134
  %1136 = vrot.lane.b32.xlu0 %v1127, 32
  %v1137 = vpop.permute.xlu0 %1136
  %v1138 = vtanh.pop %v1135
  %v1139 = vmul.f32 %v1137, %v1138
  %v1140 = vpack.c.bf16 %v1139, %v1139
  %1141 = vmatpush.bf16.msra.mxu0 %v397
  %1142 = vmatpush.bf16.msra.mxu0 %v396
  %1143 = vmatpush.bf16.msra.mxu0 %v395
  %1144 = vmatpush.bf16.msra.mxu0 %v394
  %1145 = vmatpush.bf16.msra.mxu0 %v393
  %1146 = vmatpush.bf16.msra.mxu0 %v392
  %1147 = vmatpush.bf16.msra.mxu0 %v391
  %1148 = vmatpush.bf16.msra.mxu0 %v390
  %1149 = vmatmul.bf16.gmra.mxu0 %v1019
  %v1150 = vpop.f32.mrf.mxu0
  %v1151 = vadd.f32 0.0, %v1150
  %v1152 = vpop.f32.mrf.mxu0
  %1153 = vdwg.mxu0
  %1154 = vmatpush.bf16.msra.mxu0 %v458
  %1155 = vmatpush.bf16.msra.mxu0 %v457
  %1156 = vmatpush.bf16.msra.mxu0 %v456
  %1157 = vmatpush.bf16.msra.mxu0 %v455
  %1158 = vmatpush.bf16.msra.mxu0 %v454
  %1159 = vmatpush.bf16.msra.mxu0 %v453
  %1160 = vmatpush.bf16.msra.mxu0 %v452
  %1161 = vmatpush.bf16.msra.mxu0 %v451
  %1162 = vmatmul.bf16.gmra.mxu0 %v1140
  %v1163 = vpop.f32.mrf.mxu0
  %v1164 = vadd.f32 %v1151, %v1163
  %v1165 = vpop.f32.mrf.mxu0
  %1166 = vdwg.mxu0
  %v1167 = vadd.f32 %v1164, %v261
  %v1168 = vmul.f32 %v1167, 0.5
  %v1169 = vtanh.pop %v1168
  %v1170 = vmul.f32 %v1169, 0.5
  %v1171 = vadd.f32 %v1170, 0.5
  %v1172 = vtanh.pop %v1167
  %1173 = vrot.lane.b32.xlu0 %v1171, 96
  %v1174 = vpop.permute.xlu0 %1173
  %v1175 = vmul.f32 %v1174, %v1014
  %1176 = vrot.lane.b32.xlu0 %v1172, 64
  %v1177 = vpop.permute.xlu0 %1176
  %v1178 = vmul.f32 %v1171, %v1177
  %v1179 = vadd.f32 %v1175, %v1178
  %1180 = vrot.lane.b32.xlu0 %v1171, 32
  %v1181 = vpop.permute.xlu0 %1180
  %v1182 = vtanh.pop %v1179
  %v1183 = vmul.f32 %v1181, %v1182
  %v1184 = vpack.c.bf16 %v1183, %v1183
  %1185 = vmatpush.bf16.msra.mxu0 %v537
  %1186 = vmatpush.bf16.msra.mxu0 %v536
  %1187 = vmatpush.bf16.msra.mxu0 %v535
  %1188 = vmatpush.bf16.msra.mxu0 %v534
  %1189 = vmatpush.bf16.msra.mxu0 %v533
  %1190 = vmatpush.bf16.msra.mxu0 %v532
  %1191 = vmatpush.bf16.msra.mxu0 %v531
  %1192 = vmatpush.bf16.msra.mxu0 %v530
  %1193 = vmatmul.bf16.gmra.mxu0 %v1184
  %v1194 = vpop.f32.mrf.mxu0
  %v1195 = vadd.f32 %v265, %v1194
  %v1196 = vpop.f32.mrf.mxu0
  %1197 = vdwg.mxu0
  %1198 = vmatpush.bf16.msra.mxu0 %v598
  %1199 = vmatpush.bf16.msra.mxu0 %v597
  %1200 = vmatpush.bf16.msra.mxu0 %v596
  %1201 = vmatpush.bf16.msra.mxu0 %v595
  %1202 = vmatpush.bf16.msra.mxu0 %v594
  %1203 = vmatpush.bf16.msra.mxu0 %v593
  %1204 = vmatpush.bf16.msra.mxu0 %v592
  %1205 = vmatpush.bf16.msra.mxu0 %v591
  %1206 = vmatmul.bf16.gmra.mxu0 %v1064
  %v1207 = vpop.f32.mrf.mxu0
  %v1208 = vadd.f32 %v269, %v1207
  %v1209 = vpop.f32.mrf.mxu0
  %1210 = vdwg.mxu0
  %v1211 = vadd.f32 %v1195, %v1208
  %v1212 = vmul.f32 %v1211, 0.5
  %v1213 = vtanh.pop %v1212
  %v1214 = vmul.f32 %v1213, 0.5
  %v1215 = vadd.f32 %v1214, 0.5
  %1216 = vrot.lane.b32.xlu0 %v1215, 64
  %v1217 = vpop.permute.xlu0 %1216
  %v1218 = vmul.f32 %v1217, %v1208
  %v1219 = vadd.f32 %v1195, %v1218
  %v1220 = vtanh.pop %v1219
  %1221 = vrot.lane.b32.xlu0 %v1215, 96
  %v1222 = vpop.permute.xlu0 %1221
  %v1223 = vsub.f32 1.0, %v1222
  %1224 = vrot.lane.b32.xlu0 %v1220, 64
  %v1225 = vpop.permute.xlu0 %1224
  %v1226 = vmul.f32 %v1223, %v1225
  %v1227 = vmul.f32 %v1222, %v1063
  %v1228 = vadd.f32 %v1226, %v1227
  %v1229 = vpack.c.bf16 %v1228, %v1228
  %1230 = vmatpush.bf16.msra.mxu0 %v678
  %1231 = vmatpush.bf16.msra.mxu0 %v677
  %1232 = vmatpush.bf16.msra.mxu0 %v676
  %1233 = vmatpush.bf16.msra.mxu0 %v675
  %1234 = vmatpush.bf16.msra.mxu0 %v674
  %1235 = vmatpush.bf16.msra.mxu0 %v673
  %1236 = vmatpush.bf16.msra.mxu0 %v672
  %1237 = vmatpush.bf16.msra.mxu0 %v671
  %1238 = vmatmul.bf16.gmra.mxu0 %v1229
  %v1239 = vpop.f32.mrf.mxu0
  %v1240 = vadd.f32 %v273, %v1239
  %v1241 = vpop.f32.mrf.mxu0
  %1242 = vdwg.mxu0
  %1243 = vmatpush.bf16.msra.mxu0 %v739
  %1244 = vmatpush.bf16.msra.mxu0 %v738
  %1245 = vmatpush.bf16.msra.mxu0 %v737
  %1246 = vmatpush.bf16.msra.mxu0 %v736
  %1247 = vmatpush.bf16.msra.mxu0 %v735
  %1248 = vmatpush.bf16.msra.mxu0 %v734
  %1249 = vmatpush.bf16.msra.mxu0 %v733
  %1250 = vmatpush.bf16.msra.mxu0 %v732
  %1251 = vmatmul.bf16.gmra.mxu0 %v1109
  %v1252 = vpop.f32.mrf.mxu0
  %v1253 = vadd.f32 %v277, %v1252
  %v1254 = vpop.f32.mrf.mxu0
  %1255 = vdwg.mxu0
  %v1256 = vadd.f32 %v1240, %v1253
  %v1257 = vmul.f32 %v1256, 0.5
  %v1258 = vtanh.pop %v1257
  %v1259 = vmul.f32 %v1258, 0.5
  %v1260 = vadd.f32 %v1259, 0.5
  %1261 = vrot.lane.b32.xlu0 %v1260, 64
  %v1262 = vpop.permute.xlu0 %1261
  %v1263 = vmul.f32 %v1262, %v1253
  %v1264 = vadd.f32 %v1240, %v1263
  %v1265 = vtanh.pop %v1264
  %1266 = vrot.lane.b32.xlu0 %v1260, 96
  %v1267 = vpop.permute.xlu0 %1266
  %v1268 = vsub.f32 1.0, %v1267
  %1269 = vrot.lane.b32.xlu0 %v1265, 64
  %v1270 = vpop.permute.xlu0 %1269
  %v1271 = vmul.f32 %v1268, %v1270
  %v1272 = vmul.f32 %v1267, %v1108
  %v1273 = vadd.f32 %v1271, %v1272
  %v1274 = vpack.c.bf16 %v1273, %v1273
  %1275 = vmatpush.bf16.msra.mxu0 %v318
  %1276 = vmatpush.bf16.msra.mxu0 %v317
  %1277 = vmatpush.bf16.msra.mxu0 %v316
  %1278 = vmatpush.bf16.msra.mxu0 %v315
  %1279 = vmatpush.bf16.msra.mxu0 %v314
  %1280 = vmatpush.bf16.msra.mxu0 %v313
  %1281 = vmatpush.bf16.msra.mxu0 %v312
  %1282 = vmatpush.bf16.msra.mxu0 %v311
  %1283 = vmatmul.bf16.gmra.mxu0 %v1140
  %v1284 = vpop.f32.mrf.mxu0
  %v1285 = vadd.f32 0.0, %v1284
  %v1286 = vpop.f32.mrf.mxu0
  %1287 = vdwg.mxu0
  %v1288 = vadd.f32 %v250, %v1285
  %v1289 = vmul.f32 %v1288, 0.5
  %v1290 = vtanh.pop %v1289
  %v1291 = vmul.f32 %v1290, 0.5
  %v1292 = vadd.f32 %v1291, 0.5
  %v1293 = vtanh.pop %v1288
  %1294 = vrot.lane.b32.xlu0 %v1292, 96
  %v1295 = vpop.permute.xlu0 %1294
  %v1296 = vmul.f32 %v1295, %v1135
  %1297 = vrot.lane.b32.xlu0 %v1293, 64
  %v1298 = vpop.permute.xlu0 %1297
  %v1299 = vmul.f32 %v1292, %v1298
  %v1300 = vadd.f32 %v1296, %v1299
  %1301 = vrot.lane.b32.xlu0 %v1292, 32
  %v1302 = vpop.permute.xlu0 %1301
  %v1303 = vtanh.pop %v1300
  %v1304 = vmul.f32 %v1302, %v1303
  %v1305 = vpack.c.bf16 %v1304, %v1304
  %1306 = vmatpush.bf16.msra.mxu0 %v397
  %1307 = vmatpush.bf16.msra.mxu0 %v396
  %1308 = vmatpush.bf16.msra.mxu0 %v395
  %1309 = vmatpush.bf16.msra.mxu0 %v394
  %1310 = vmatpush.bf16.msra.mxu0 %v393
  %1311 = vmatpush.bf16.msra.mxu0 %v392
  %1312 = vmatpush.bf16.msra.mxu0 %v391
  %1313 = vmatpush.bf16.msra.mxu0 %v390
  %1314 = vmatmul.bf16.gmra.mxu0 %v1184
  %v1315 = vpop.f32.mrf.mxu0
  %v1316 = vadd.f32 0.0, %v1315
  %v1317 = vpop.f32.mrf.mxu0
  %1318 = vdwg.mxu0
  %1319 = vmatpush.bf16.msra.mxu0 %v458
  %1320 = vmatpush.bf16.msra.mxu0 %v457
  %1321 = vmatpush.bf16.msra.mxu0 %v456
  %1322 = vmatpush.bf16.msra.mxu0 %v455
  %1323 = vmatpush.bf16.msra.mxu0 %v454
  %1324 = vmatpush.bf16.msra.mxu0 %v453
  %1325 = vmatpush.bf16.msra.mxu0 %v452
  %1326 = vmatpush.bf16.msra.mxu0 %v451
  %1327 = vmatmul.bf16.gmra.mxu0 %v1305
  %v1328 = vpop.f32.mrf.mxu0
  %v1329 = vadd.f32 %v1316, %v1328
  %v1330 = vpop.f32.mrf.mxu0
  %1331 = vdwg.mxu0
  %v1332 = vadd.f32 %v1329, %v261
  %v1333 = vmul.f32 %v1332, 0.5
  %v1334 = vtanh.pop %v1333
  %v1335 = vmul.f32 %v1334, 0.5
  %v1336 = vadd.f32 %v1335, 0.5
  %v1337 = vtanh.pop %v1332
  %1338 = vrot.lane.b32.xlu0 %v1336, 96
  %v1339 = vpop.permute.xlu0 %1338
  %v1340 = vmul.f32 %v1339, %v1179
  %1341 = vrot.lane.b32.xlu0 %v1337, 64
  %v1342 = vpop.permute.xlu0 %1341
  %v1343 = vmul.f32 %v1336, %v1342
  %v1344 = vadd.f32 %v1340, %v1343
  %1345 = vrot.lane.b32.xlu0 %v1336, 32
  %v1346 = vpop.permute.xlu0 %1345
  %v1347 = vtanh.pop %v1344
  %v1348 = vmul.f32 %v1346, %v1347
  %v1349 = vpack.c.bf16 %v1348, %v1348
  %1350 = vmatpush.bf16.msra.mxu0 %v537
  %1351 = vmatpush.bf16.msra.mxu0 %v536
  %1352 = vmatpush.bf16.msra.mxu0 %v535
  %1353 = vmatpush.bf16.msra.mxu0 %v534
  %1354 = vmatpush.bf16.msra.mxu0 %v533
  %1355 = vmatpush.bf16.msra.mxu0 %v532
  %1356 = vmatpush.bf16.msra.mxu0 %v531
  %1357 = vmatpush.bf16.msra.mxu0 %v530
  %1358 = vmatmul.bf16.gmra.mxu0 %v1349
  %v1359 = vpop.f32.mrf.mxu0
  %v1360 = vadd.f32 %v265, %v1359
  %v1361 = vpop.f32.mrf.mxu0
  %1362 = vdwg.mxu0
  %1363 = vmatpush.bf16.msra.mxu0 %v598
  %1364 = vmatpush.bf16.msra.mxu0 %v597
  %1365 = vmatpush.bf16.msra.mxu0 %v596
  %1366 = vmatpush.bf16.msra.mxu0 %v595
  %1367 = vmatpush.bf16.msra.mxu0 %v594
  %1368 = vmatpush.bf16.msra.mxu0 %v593
  %1369 = vmatpush.bf16.msra.mxu0 %v592
  %1370 = vmatpush.bf16.msra.mxu0 %v591
  %1371 = vmatmul.bf16.gmra.mxu0 %v1229
  %v1372 = vpop.f32.mrf.mxu0
  %v1373 = vadd.f32 %v269, %v1372
  %v1374 = vpop.f32.mrf.mxu0
  %1375 = vdwg.mxu0
  %v1376 = vadd.f32 %v1360, %v1373
  %v1377 = vmul.f32 %v1376, 0.5
  %v1378 = vtanh.pop %v1377
  %v1379 = vmul.f32 %v1378, 0.5
  %v1380 = vadd.f32 %v1379, 0.5
  %1381 = vrot.lane.b32.xlu0 %v1380, 64
  %v1382 = vpop.permute.xlu0 %1381
  %v1383 = vmul.f32 %v1382, %v1373
  %v1384 = vadd.f32 %v1360, %v1383
  %v1385 = vtanh.pop %v1384
  %1386 = vrot.lane.b32.xlu0 %v1380, 96
  %v1387 = vpop.permute.xlu0 %1386
  %v1388 = vsub.f32 1.0, %v1387
  %1389 = vrot.lane.b32.xlu0 %v1385, 64
  %v1390 = vpop.permute.xlu0 %1389
  %v1391 = vmul.f32 %v1388, %v1390
  %v1392 = vmul.f32 %v1387, %v1228
  %v1393 = vadd.f32 %v1391, %v1392
  %v1394 = vpack.c.bf16 %v1393, %v1393
  %1395 = vmatpush.bf16.msra.mxu0 %v678
  %1396 = vmatpush.bf16.msra.mxu0 %v677
  %1397 = vmatpush.bf16.msra.mxu0 %v676
  %1398 = vmatpush.bf16.msra.mxu0 %v675
  %1399 = vmatpush.bf16.msra.mxu0 %v674
  %1400 = vmatpush.bf16.msra.mxu0 %v673
  %1401 = vmatpush.bf16.msra.mxu0 %v672
  %1402 = vmatpush.bf16.msra.mxu0 %v671
  %1403 = vmatmul.bf16.gmra.mxu0 %v1394
  %v1404 = vpop.f32.mrf.mxu0
  %v1405 = vadd.f32 %v273, %v1404
  %v1406 = vpop.f32.mrf.mxu0
  %1407 = vdwg.mxu0
  %1408 = vmatpush.bf16.msra.mxu0 %v739
  %1409 = vmatpush.bf16.msra.mxu0 %v738
  %1410 = vmatpush.bf16.msra.mxu0 %v737
  %1411 = vmatpush.bf16.msra.mxu0 %v736
  %1412 = vmatpush.bf16.msra.mxu0 %v735
  %1413 = vmatpush.bf16.msra.mxu0 %v734
  %1414 = vmatpush.bf16.msra.mxu0 %v733
  %1415 = vmatpush.bf16.msra.mxu0 %v732
  %1416 = vmatmul.bf16.gmra.mxu0 %v1274
  %v1417 = vpop.f32.mrf.mxu0
  %v1418 = vadd.f32 %v277, %v1417
  %v1419 = vpop.f32.mrf.mxu0
  %1420 = vdwg.mxu0
  %v1421 = vadd.f32 %v1405, %v1418
  %v1422 = vmul.f32 %v1421, 0.5
  %v1423 = vtanh.pop %v1422
  %v1424 = vmul.f32 %v1423, 0.5
  %v1425 = vadd.f32 %v1424, 0.5
  %1426 = vrot.lane.b32.xlu0 %v1425, 64
  %v1427 = vpop.permute.xlu0 %1426
  %v1428 = vmul.f32 %v1427, %v1418
  %v1429 = vadd.f32 %v1405, %v1428
  %v1430 = vtanh.pop %v1429
  %1431 = vrot.lane.b32.xlu0 %v1425, 96
  %v1432 = vpop.permute.xlu0 %1431
  %v1433 = vsub.f32 1.0, %v1432
  %1434 = vrot.lane.b32.xlu0 %v1430, 64
  %v1435 = vpop.permute.xlu0 %1434
  %v1436 = vmul.f32 %v1433, %v1435
  %v1437 = vmul.f32 %v1432, %v1273
  %v1438 = vadd.f32 %v1436, %v1437
  %v1439 = vpack.c.bf16 %v1438, %v1438
  %1440 = vmatpush.bf16.msra.mxu0 %v318
  %1441 = vmatpush.bf16.msra.mxu0 %v317
  %1442 = vmatpush.bf16.msra.mxu0 %v316
  %1443 = vmatpush.bf16.msra.mxu0 %v315
  %1444 = vmatpush.bf16.msra.mxu0 %v314
  %1445 = vmatpush.bf16.msra.mxu0 %v313
  %1446 = vmatpush.bf16.msra.mxu0 %v312
  %1447 = vmatpush.bf16.msra.mxu0 %v311
  %1448 = vmatmul.bf16.gmra.mxu0 %v1305
  %v1449 = vpop.f32.mrf.mxu0
  %v1450 = vadd.f32 0.0, %v1449
  %v1451 = vpop.f32.mrf.mxu0
  %1452 = vdwg.mxu0
  %v1453 = vadd.f32 %v252, %v1450
  %v1454 = vmul.f32 %v1453, 0.5
  %v1455 = vtanh.pop %v1454
  %v1456 = vmul.f32 %v1455, 0.5
  %v1457 = vadd.f32 %v1456, 0.5
  %v1458 = vtanh.pop %v1453
  %1459 = vrot.lane.b32.xlu0 %v1457, 96
  %v1460 = vpop.permute.xlu0 %1459
  %v1461 = vmul.f32 %v1460, %v1300
  %1462 = vrot.lane.b32.xlu0 %v1458, 64
  %v1463 = vpop.permute.xlu0 %1462
  %v1464 = vmul.f32 %v1457, %v1463
  %v1465 = vadd.f32 %v1461, %v1464
  %1466 = vrot.lane.b32.xlu0 %v1457, 32
  %v1467 = vpop.permute.xlu0 %1466
  %v1468 = vtanh.pop %v1465
  %v1469 = vmul.f32 %v1467, %v1468
  %v1470 = vpack.c.bf16 %v1469, %v1469
  %1471 = vmatpush.bf16.msra.mxu0 %v397
  %1472 = vmatpush.bf16.msra.mxu0 %v396
  %1473 = vmatpush.bf16.msra.mxu0 %v395
  %1474 = vmatpush.bf16.msra.mxu0 %v394
  %1475 = vmatpush.bf16.msra.mxu0 %v393
  %1476 = vmatpush.bf16.msra.mxu0 %v392
  %1477 = vmatpush.bf16.msra.mxu0 %v391
  %1478 = vmatpush.bf16.msra.mxu0 %v390
  %1479 = vmatmul.bf16.gmra.mxu0 %v1349
  %v1480 = vpop.f32.mrf.mxu0
  %v1481 = vadd.f32 0.0, %v1480
  %v1482 = vpop.f32.mrf.mxu0
  %1483 = vdwg.mxu0
  %1484 = vmatpush.bf16.msra.mxu0 %v458
  %1485 = vmatpush.bf16.msra.mxu0 %v457
  %1486 = vmatpush.bf16.msra.mxu0 %v456
  %1487 = vmatpush.bf16.msra.mxu0 %v455
  %1488 = vmatpush.bf16.msra.mxu0 %v454
  %1489 = vmatpush.bf16.msra.mxu0 %v453
  %1490 = vmatpush.bf16.msra.mxu0 %v452
  %1491 = vmatpush.bf16.msra.mxu0 %v451
  %1492 = vmatmul.bf16.gmra.mxu0 %v1470
  %v1493 = vpop.f32.mrf.mxu0
  %v1494 = vadd.f32 %v1481, %v1493
  %v1495 = vpop.f32.mrf.mxu0
  %1496 = vdwg.mxu0
  %v1497 = vadd.f32 %v1494, %v261
  %v1498 = vmul.f32 %v1497, 0.5
  %v1499 = vtanh.pop %v1498
  %v1500 = vmul.f32 %v1499, 0.5
  %v1501 = vadd.f32 %v1500, 0.5
  %v1502 = vtanh.pop %v1497
  %1503 = vrot.lane.b32.xlu0 %v1501, 96
  %v1504 = vpop.permute.xlu0 %1503
  %v1505 = vmul.f32 %v1504, %v1344
  %1506 = vrot.lane.b32.xlu0 %v1502, 64
  %v1507 = vpop.permute.xlu0 %1506
  %v1508 = vmul.f32 %v1501, %v1507
  %v1509 = vadd.f32 %v1505, %v1508
  %1510 = vrot.lane.b32.xlu0 %v1501, 32
  %v1511 = vpop.permute.xlu0 %1510
  %v1512 = vtanh.pop %v1509
  %v1513 = vmul.f32 %v1511, %v1512
  %v1514 = vpack.c.bf16 %v1513, %v1513
  %1515 = vmatpush.bf16.msra.mxu0 %v537
  %1516 = vmatpush.bf16.msra.mxu0 %v536
  %1517 = vmatpush.bf16.msra.mxu0 %v535
  %1518 = vmatpush.bf16.msra.mxu0 %v534
  %1519 = vmatpush.bf16.msra.mxu0 %v533
  %1520 = vmatpush.bf16.msra.mxu0 %v532
  %1521 = vmatpush.bf16.msra.mxu0 %v531
  %1522 = vmatpush.bf16.msra.mxu0 %v530
  %1523 = vmatmul.bf16.gmra.mxu0 %v1514
  %v1524 = vpop.f32.mrf.mxu0
  %v1525 = vadd.f32 %v265, %v1524
  %v1526 = vpop.f32.mrf.mxu0
  %1527 = vdwg.mxu0
  %1528 = vmatpush.bf16.msra.mxu0 %v598
  %1529 = vmatpush.bf16.msra.mxu0 %v597
  %1530 = vmatpush.bf16.msra.mxu0 %v596
  %1531 = vmatpush.bf16.msra.mxu0 %v595
  %1532 = vmatpush.bf16.msra.mxu0 %v594
  %1533 = vmatpush.bf16.msra.mxu0 %v593
  %1534 = vmatpush.bf16.msra.mxu0 %v592
  %1535 = vmatpush.bf16.msra.mxu0 %v591
  %1536 = vmatmul.bf16.gmra.mxu0 %v1394
  %v1537 = vpop.f32.mrf.mxu0
  %v1538 = vadd.f32 %v269, %v1537
  %v1539 = vpop.f32.mrf.mxu0
  %1540 = vdwg.mxu0
  %v1541 = vadd.f32 %v1525, %v1538
  %v1542 = vmul.f32 %v1541, 0.5
  %v1543 = vtanh.pop %v1542
  %v1544 = vmul.f32 %v1543, 0.5
  %v1545 = vadd.f32 %v1544, 0.5
  %1546 = vrot.lane.b32.xlu0 %v1545, 64
  %v1547 = vpop.permute.xlu0 %1546
  %v1548 = vmul.f32 %v1547, %v1538
  %v1549 = vadd.f32 %v1525, %v1548
  %v1550 = vtanh.pop %v1549
  %1551 = vrot.lane.b32.xlu0 %v1545, 96
  %v1552 = vpop.permute.xlu0 %1551
  %v1553 = vsub.f32 1.0, %v1552
  %1554 = vrot.lane.b32.xlu0 %v1550, 64
  %v1555 = vpop.permute.xlu0 %1554
  %v1556 = vmul.f32 %v1553, %v1555
  %v1557 = vmul.f32 %v1552, %v1393
  %v1558 = vadd.f32 %v1556, %v1557
  %v1559 = vpack.c.bf16 %v1558, %v1558
  %1560 = vmatpush.bf16.msra.mxu0 %v678
  %1561 = vmatpush.bf16.msra.mxu0 %v677
  %1562 = vmatpush.bf16.msra.mxu0 %v676
  %1563 = vmatpush.bf16.msra.mxu0 %v675
  %1564 = vmatpush.bf16.msra.mxu0 %v674
  %1565 = vmatpush.bf16.msra.mxu0 %v673
  %1566 = vmatpush.bf16.msra.mxu0 %v672
  %1567 = vmatpush.bf16.msra.mxu0 %v671
  %1568 = vmatmul.bf16.gmra.mxu0 %v1559
  %v1569 = vpop.f32.mrf.mxu0
  %v1570 = vadd.f32 %v273, %v1569
  %v1571 = vpop.f32.mrf.mxu0
  %1572 = vdwg.mxu0
  %1573 = vmatpush.bf16.msra.mxu0 %v739
  %1574 = vmatpush.bf16.msra.mxu0 %v738
  %1575 = vmatpush.bf16.msra.mxu0 %v737
  %1576 = vmatpush.bf16.msra.mxu0 %v736
  %1577 = vmatpush.bf16.msra.mxu0 %v735
  %1578 = vmatpush.bf16.msra.mxu0 %v734
  %1579 = vmatpush.bf16.msra.mxu0 %v733
  %1580 = vmatpush.bf16.msra.mxu0 %v732
  %1581 = vmatmul.bf16.gmra.mxu0 %v1439
  %v1582 = vpop.f32.mrf.mxu0
  %v1583 = vadd.f32 %v277, %v1582
  %v1584 = vpop.f32.mrf.mxu0
  %1585 = vdwg.mxu0
  %v1586 = vadd.f32 %v1570, %v1583
  %v1587 = vmul.f32 %v1586, 0.5
  %v1588 = vtanh.pop %v1587
  %v1589 = vmul.f32 %v1588, 0.5
  %v1590 = vadd.f32 %v1589, 0.5
  %1591 = vrot.lane.b32.xlu0 %v1590, 64
  %v1592 = vpop.permute.xlu0 %1591
  %v1593 = vmul.f32 %v1592, %v1583
  %v1594 = vadd.f32 %v1570, %v1593
  %v1595 = vtanh.pop %v1594
  %1596 = vrot.lane.b32.xlu0 %v1590, 96
  %v1597 = vpop.permute.xlu0 %1596
  %v1598 = vsub.f32 1.0, %v1597
  %1599 = vrot.lane.b32.xlu0 %v1595, 64
  %v1600 = vpop.permute.xlu0 %1599
  %v1601 = vmul.f32 %v1598, %v1600
  %v1602 = vmul.f32 %v1597, %v1438
  %v1603 = vadd.f32 %v1601, %v1602
  %v1604 = vpack.c.bf16 %v1603, %v1603
  %1605 = vmatpush.bf16.msra.mxu0 %v318
  %1606 = vmatpush.bf16.msra.mxu0 %v317
  %1607 = vmatpush.bf16.msra.mxu0 %v316
  %1608 = vmatpush.bf16.msra.mxu0 %v315
  %1609 = vmatpush.bf16.msra.mxu0 %v314
  %1610 = vmatpush.bf16.msra.mxu0 %v313
  %1611 = vmatpush.bf16.msra.mxu0 %v312
  %1612 = vmatpush.bf16.msra.mxu0 %v311
  %1613 = vmatmul.bf16.gmra.mxu0 %v1470
  %v1614 = vpop.f32.mrf.mxu0
  %v1615 = vadd.f32 0.0, %v1614
  %v1616 = vpop.f32.mrf.mxu0
  %1617 = vdwg.mxu0
  %v1618 = vadd.f32 %v255, %v1615
  %v1619 = vmul.f32 %v1618, 0.5
  %v1620 = vtanh.pop %v1619
  %v1621 = vmul.f32 %v1620, 0.5
  %v1622 = vadd.f32 %v1621, 0.5
  %v1623 = vtanh.pop %v1618
  %1624 = vrot.lane.b32.xlu0 %v1622, 96
  %v1625 = vpop.permute.xlu0 %1624
  %v1626 = vmul.f32 %v1625, %v1465
  %1627 = vrot.lane.b32.xlu0 %v1623, 64
  %v1628 = vpop.permute.xlu0 %1627
  %v1629 = vmul.f32 %v1622, %v1628
  %v1630 = vadd.f32 %v1626, %v1629
  %1631 = vrot.lane.b32.xlu0 %v1622, 32
  %v1632 = vpop.permute.xlu0 %1631
  %v1633 = vtanh.pop %v1630
  %v1634 = vmul.f32 %v1632, %v1633
  %v1635 = vpack.c.bf16 %v1634, %v1634
  %1636 = vmatpush.bf16.msra.mxu0 %v397
  %1637 = vmatpush.bf16.msra.mxu0 %v396
  %1638 = vmatpush.bf16.msra.mxu0 %v395
  %1639 = vmatpush.bf16.msra.mxu0 %v394
  %1640 = vmatpush.bf16.msra.mxu0 %v393
  %1641 = vmatpush.bf16.msra.mxu0 %v392
  %1642 = vmatpush.bf16.msra.mxu0 %v391
  %1643 = vmatpush.bf16.msra.mxu0 %v390
  %1644 = vmatmul.bf16.gmra.mxu0 %v1514
  %v1645 = vpop.f32.mrf.mxu0
  %v1646 = vadd.f32 0.0, %v1645
  %v1647 = vpop.f32.mrf.mxu0
  %1648 = vdwg.mxu0
  %1649 = vmatpush.bf16.msra.mxu0 %v458
  %1650 = vmatpush.bf16.msra.mxu0 %v457
  %1651 = vmatpush.bf16.msra.mxu0 %v456
  %1652 = vmatpush.bf16.msra.mxu0 %v455
  %1653 = vmatpush.bf16.msra.mxu0 %v454
  %1654 = vmatpush.bf16.msra.mxu0 %v453
  %1655 = vmatpush.bf16.msra.mxu0 %v452
  %1656 = vmatpush.bf16.msra.mxu0 %v451
  %1657 = vmatmul.bf16.gmra.mxu0 %v1635
  %v1658 = vpop.f32.mrf.mxu0
  %v1659 = vadd.f32 %v1646, %v1658
  %v1660 = vpop.f32.mrf.mxu0
  %1661 = vdwg.mxu0
  %v1662 = vadd.f32 %v1659, %v261
  %v1663 = vmul.f32 %v1662, 0.5
  %v1664 = vtanh.pop %v1663
  %v1665 = vmul.f32 %v1664, 0.5
  %v1666 = vadd.f32 %v1665, 0.5
  %v1667 = vtanh.pop %v1662
  %1668 = vrot.lane.b32.xlu0 %v1666, 96
  %v1669 = vpop.permute.xlu0 %1668
  %v1670 = vmul.f32 %v1669, %v1509
  %1671 = vrot.lane.b32.xlu0 %v1667, 64
  %v1672 = vpop.permute.xlu0 %1671
  %v1673 = vmul.f32 %v1666, %v1672
  %v1674 = vadd.f32 %v1670, %v1673
  %1675 = vrot.lane.b32.xlu0 %v1666, 32
  %v1676 = vpop.permute.xlu0 %1675
  %v1677 = vtanh.pop %v1674
  %v1678 = vmul.f32 %v1676, %v1677
  %v1679 = vpack.c.bf16 %v1678, %v1678
  %1680 = vmatpush.bf16.msra.mxu0 %v537
  %1681 = vmatpush.bf16.msra.mxu0 %v536
  %1682 = vmatpush.bf16.msra.mxu0 %v535
  %1683 = vmatpush.bf16.msra.mxu0 %v534
  %1684 = vmatpush.bf16.msra.mxu0 %v533
  %1685 = vmatpush.bf16.msra.mxu0 %v532
  %1686 = vmatpush.bf16.msra.mxu0 %v531
  %1687 = vmatpush.bf16.msra.mxu0 %v530
  %1688 = vmatmul.bf16.gmra.mxu0 %v1679
  %v1689 = vpop.f32.mrf.mxu0
  %v1690 = vadd.f32 %v265, %v1689
  %v1691 = vpop.f32.mrf.mxu0
  %1692 = vdwg.mxu0
  %1693 = vmatpush.bf16.msra.mxu0 %v598
  %1694 = vmatpush.bf16.msra.mxu0 %v597
  %1695 = vmatpush.bf16.msra.mxu0 %v596
  %1696 = vmatpush.bf16.msra.mxu0 %v595
  %1697 = vmatpush.bf16.msra.mxu0 %v594
  %1698 = vmatpush.bf16.msra.mxu0 %v593
  %1699 = vmatpush.bf16.msra.mxu0 %v592
  %1700 = vmatpush.bf16.msra.mxu0 %v591
  %1701 = vmatmul.bf16.gmra.mxu0 %v1559
  %v1702 = vpop.f32.mrf.mxu0
  %v1703 = vadd.f32 %v269, %v1702
  %v1704 = vpop.f32.mrf.mxu0
  %1705 = vdwg.mxu0
  %v1706 = vadd.f32 %v1690, %v1703
  %v1707 = vmul.f32 %v1706, 0.5
  %v1708 = vtanh.pop %v1707
  %v1709 = vmul.f32 %v1708, 0.5
  %v1710 = vadd.f32 %v1709, 0.5
  %1711 = vrot.lane.b32.xlu0 %v1710, 64
  %v1712 = vpop.permute.xlu0 %1711
  %v1713 = vmul.f32 %v1712, %v1703
  %v1714 = vadd.f32 %v1690, %v1713
  %v1715 = vtanh.pop %v1714
  %1716 = vrot.lane.b32.xlu0 %v1710, 96
  %v1717 = vpop.permute.xlu0 %1716
  %v1718 = vsub.f32 1.0, %v1717
  %1719 = vrot.lane.b32.xlu0 %v1715, 64
  %v1720 = vpop.permute.xlu0 %1719
  %v1721 = vmul.f32 %v1718, %v1720
  %v1722 = vmul.f32 %v1717, %v1558
  %v1723 = vadd.f32 %v1721, %v1722
  %v1724 = vpack.c.bf16 %v1723, %v1723
  %1725 = vmatpush.bf16.msra.mxu0 %v678
  %1726 = vmatpush.bf16.msra.mxu0 %v677
  %1727 = vmatpush.bf16.msra.mxu0 %v676
  %1728 = vmatpush.bf16.msra.mxu0 %v675
  %1729 = vmatpush.bf16.msra.mxu0 %v674
  %1730 = vmatpush.bf16.msra.mxu0 %v673
  %1731 = vmatpush.bf16.msra.mxu0 %v672
  %1732 = vmatpush.bf16.msra.mxu0 %v671
  %1733 = vmatmul.bf16.gmra.mxu0 %v1724
  %v1734 = vpop.f32.mrf.mxu0
  %v1735 = vadd.f32 %v273, %v1734
  %v1736 = vpop.f32.mrf.mxu0
  %1737 = vdwg.mxu0
  %1738 = vmatpush.bf16.msra.mxu0 %v739
  %1739 = vmatpush.bf16.msra.mxu0 %v738
  %1740 = vmatpush.bf16.msra.mxu0 %v737
  %1741 = vmatpush.bf16.msra.mxu0 %v736
  %1742 = vmatpush.bf16.msra.mxu0 %v735
  %1743 = vmatpush.bf16.msra.mxu0 %v734
  %1744 = vmatpush.bf16.msra.mxu0 %v733
  %1745 = vmatpush.bf16.msra.mxu0 %v732
  %1746 = vmatmul.bf16.gmra.mxu0 %v1604
  %v1747 = vpop.f32.mrf.mxu0
  %v1748 = vadd.f32 %v277, %v1747
  %v1749 = vpop.f32.mrf.mxu0
  %1750 = vdwg.mxu0
  %v1751 = vadd.f32 %v1735, %v1748
  %v1752 = vmul.f32 %v1751, 0.5
  %v1753 = vtanh.pop %v1752
  %v1754 = vmul.f32 %v1753, 0.5
  %v1755 = vadd.f32 %v1754, 0.5
  %1756 = vrot.lane.b32.xlu0 %v1755, 64
  %v1757 = vpop.permute.xlu0 %1756
  %v1758 = vmul.f32 %v1757, %v1748
  %v1759 = vadd.f32 %v1735, %v1758
  %v1760 = vtanh.pop %v1759
  %1761 = vrot.lane.b32.xlu0 %v1755, 96
  %v1762 = vpop.permute.xlu0 %1761
  %v1763 = vsub.f32 1.0, %v1762
  %1764 = vrot.lane.b32.xlu0 %v1760, 64
  %v1765 = vpop.permute.xlu0 %1764
  %v1766 = vmul.f32 %v1763, %v1765
  %v1767 = vmul.f32 %v1762, %v1603
  %v1768 = vadd.f32 %v1766, %v1767
  %v1769 = vpack.c.bf16 %v1768, %v1768
  %1770 = vmatpush.bf16.msra.mxu0 %v318
  %1771 = vmatpush.bf16.msra.mxu0 %v317
  %1772 = vmatpush.bf16.msra.mxu0 %v316
  %1773 = vmatpush.bf16.msra.mxu0 %v315
  %1774 = vmatpush.bf16.msra.mxu0 %v314
  %1775 = vmatpush.bf16.msra.mxu0 %v313
  %1776 = vmatpush.bf16.msra.mxu0 %v312
  %1777 = vmatpush.bf16.msra.mxu0 %v311
  %1778 = vmatmul.bf16.gmra.mxu0 %v1635
  %v1779 = vpop.f32.mrf.mxu0
  %v1780 = vadd.f32 0.0, %v1779
  %v1781 = vpop.f32.mrf.mxu0
  %1782 = vdwg.mxu0
  %v1783 = vadd.f32 %v257, %v1780
  %v1784 = vmul.f32 %v1783, 0.5
  %v1785 = vtanh.pop %v1784
  %v1786 = vmul.f32 %v1785, 0.5
  %v1787 = vadd.f32 %v1786, 0.5
  %v1788 = vtanh.pop %v1783
  %1789 = vrot.lane.b32.xlu0 %v1787, 96
  %v1790 = vpop.permute.xlu0 %1789
  %v1791 = vmul.f32 %v1790, %v1630
  %1792 = vrot.lane.b32.xlu0 %v1788, 64
  %v1793 = vpop.permute.xlu0 %1792
  %v1794 = vmul.f32 %v1787, %v1793
  %v1795 = vadd.f32 %v1791, %v1794
  %1796 = vrot.lane.b32.xlu0 %v1787, 32
  %v1797 = vpop.permute.xlu0 %1796
  %v1798 = vtanh.pop %v1795
  %v1799 = vmul.f32 %v1797, %v1798
  %v1800 = vpack.c.bf16 %v1799, %v1799
  %1801 = vmatpush.bf16.msra.mxu0 %v397
  %1802 = vmatpush.bf16.msra.mxu0 %v396
  %1803 = vmatpush.bf16.msra.mxu0 %v395
  %1804 = vmatpush.bf16.msra.mxu0 %v394
  %1805 = vmatpush.bf16.msra.mxu0 %v393
  %1806 = vmatpush.bf16.msra.mxu0 %v392
  %1807 = vmatpush.bf16.msra.mxu0 %v391
  %1808 = vmatpush.bf16.msra.mxu0 %v390
  %1809 = vmatmul.bf16.gmra.mxu0 %v1679
  %v1810 = vpop.f32.mrf.mxu0
  %v1811 = vadd.f32 0.0, %v1810
  %v1812 = vpop.f32.mrf.mxu0
  %1813 = vdwg.mxu0
  %1814 = vmatpush.bf16.msra.mxu0 %v458
  %1815 = vmatpush.bf16.msra.mxu0 %v457
  %1816 = vmatpush.bf16.msra.mxu0 %v456
  %1817 = vmatpush.bf16.msra.mxu0 %v455
  %1818 = vmatpush.bf16.msra.mxu0 %v454
  %1819 = vmatpush.bf16.msra.mxu0 %v453
  %1820 = vmatpush.bf16.msra.mxu0 %v452
  %1821 = vmatpush.bf16.msra.mxu0 %v451
  %1822 = vmatmul.bf16.gmra.mxu0 %v1800
  %v1823 = vpop.f32.mrf.mxu0
  %v1824 = vadd.f32 %v1811, %v1823
  %v1825 = vpop.f32.mrf.mxu0
  %1826 = vdwg.mxu0
  %v1827 = vadd.f32 %v1824, %v261
  %v1828 = vmul.f32 %v1827, 0.5
  %v1829 = vtanh.pop %v1828
  %v1830 = vmul.f32 %v1829, 0.5
  %v1831 = vadd.f32 %v1830, 0.5
  %v1832 = vtanh.pop %v1827
  %1833 = vrot.lane.b32.xlu0 %v1831, 96
  %v1834 = vpop.permute.xlu0 %1833
  %v1835 = vmul.f32 %v1834, %v1674
  %1836 = vrot.lane.b32.xlu0 %v1832, 64
  %v1837 = vpop.permute.xlu0 %1836
  %v1838 = vmul.f32 %v1831, %v1837
  %v1839 = vadd.f32 %v1835, %v1838
  %1840 = vrot.lane.b32.xlu0 %v1831, 32
  %v1841 = vpop.permute.xlu0 %1840
  %v1842 = vtanh.pop %v1839
  %v1843 = vmul.f32 %v1841, %v1842
  %v1844 = vpack.c.bf16 %v1843, %v1843
  %1845 = vmatpush.bf16.msra.mxu0 %v537
  %1846 = vmatpush.bf16.msra.mxu0 %v536
  %1847 = vmatpush.bf16.msra.mxu0 %v535
  %1848 = vmatpush.bf16.msra.mxu0 %v534
  %1849 = vmatpush.bf16.msra.mxu0 %v533
  %1850 = vmatpush.bf16.msra.mxu0 %v532
  %1851 = vmatpush.bf16.msra.mxu0 %v531
  %1852 = vmatpush.bf16.msra.mxu0 %v530
  %1853 = vmatmul.bf16.gmra.mxu0 %v1844
  %v1854 = vpop.f32.mrf.mxu0
  %v1855 = vadd.f32 %v265, %v1854
  %v1856 = vpop.f32.mrf.mxu0
  %1857 = vdwg.mxu0
  %1858 = vmatpush.bf16.msra.mxu0 %v598
  %1859 = vmatpush.bf16.msra.mxu0 %v597
  %1860 = vmatpush.bf16.msra.mxu0 %v596
  %1861 = vmatpush.bf16.msra.mxu0 %v595
  %1862 = vmatpush.bf16.msra.mxu0 %v594
  %1863 = vmatpush.bf16.msra.mxu0 %v593
  %1864 = vmatpush.bf16.msra.mxu0 %v592
  %1865 = vmatpush.bf16.msra.mxu0 %v591
  %1866 = vmatmul.bf16.gmra.mxu0 %v1724
  %v1867 = vpop.f32.mrf.mxu0
  %v1868 = vadd.f32 %v269, %v1867
  %v1869 = vpop.f32.mrf.mxu0
  %1870 = vdwg.mxu0
  %v1871 = vadd.f32 %v1855, %v1868
  %v1872 = vmul.f32 %v1871, 0.5
  %v1873 = vtanh.pop %v1872
  %v1874 = vmul.f32 %v1873, 0.5
  %v1875 = vadd.f32 %v1874, 0.5
  %1876 = vrot.lane.b32.xlu0 %v1875, 64
  %v1877 = vpop.permute.xlu0 %1876
  %v1878 = vmul.f32 %v1877, %v1868
  %v1879 = vadd.f32 %v1855, %v1878
  %v1880 = vtanh.pop %v1879
  %1881 = vrot.lane.b32.xlu0 %v1875, 96
  %v1882 = vpop.permute.xlu0 %1881
  %v1883 = vsub.f32 1.0, %v1882
  %1884 = vrot.lane.b32.xlu0 %v1880, 64
  %v1885 = vpop.permute.xlu0 %1884
  %v1886 = vmul.f32 %v1883, %v1885
  %v1887 = vmul.f32 %v1882, %v1723
  %v1888 = vadd.f32 %v1886, %v1887
  %v1889 = vpack.c.bf16 %v1888, %v1888
  %1890 = vmatpush.bf16.msra.mxu0 %v678
  %1891 = vmatpush.bf16.msra.mxu0 %v677
  %1892 = vmatpush.bf16.msra.mxu0 %v676
  %1893 = vmatpush.bf16.msra.mxu0 %v675
  %1894 = vmatpush.bf16.msra.mxu0 %v674
  %1895 = vmatpush.bf16.msra.mxu0 %v673
  %1896 = vmatpush.bf16.msra.mxu0 %v672
  %1897 = vmatpush.bf16.msra.mxu0 %v671
  %1898 = vmatmul.bf16.gmra.mxu0 %v1889
  %v1899 = vpop.f32.mrf.mxu0
  %v1900 = vadd.f32 %v273, %v1899
  %v1901 = vpop.f32.mrf.mxu0
  %1902 = vdwg.mxu0
  %1903 = vmatpush.bf16.msra.mxu0 %v739
  %1904 = vmatpush.bf16.msra.mxu0 %v738
  %1905 = vmatpush.bf16.msra.mxu0 %v737
  %1906 = vmatpush.bf16.msra.mxu0 %v736
  %1907 = vmatpush.bf16.msra.mxu0 %v735
  %1908 = vmatpush.bf16.msra.mxu0 %v734
  %1909 = vmatpush.bf16.msra.mxu0 %v733
  %1910 = vmatpush.bf16.msra.mxu0 %v732
  %1911 = vmatmul.bf16.gmra.mxu0 %v1769
  %v1912 = vpop.f32.mrf.mxu0
  %v1913 = vadd.f32 %v277, %v1912
  %v1914 = vpop.f32.mrf.mxu0
  %1915 = vdwg.mxu0
  %v1916 = vadd.f32 %v1900, %v1913
  %v1917 = vmul.f32 %v1916, 0.5
  %v1918 = vtanh.pop %v1917
  %v1919 = vmul.f32 %v1918, 0.5
  %v1920 = vadd.f32 %v1919, 0.5
  %1921 = vrot.lane.b32.xlu0 %v1920, 64
  %v1922 = vpop.permute.xlu0 %1921
  %v1923 = vmul.f32 %v1922, %v1913
  %v1924 = vadd.f32 %v1900, %v1923
  %v1925 = vtanh.pop %v1924
  %1926 = vrot.lane.b32.xlu0 %v1920, 96
  %v1927 = vpop.permute.xlu0 %1926
  %v1928 = vsub.f32 1.0, %v1927
  %1929 = vrot.lane.b32.xlu0 %v1925, 64
  %v1930 = vpop.permute.xlu0 %1929
  %v1931 = vmul.f32 %v1928, %v1930
  %v1932 = vmul.f32 %v1927, %v1768
  %v1933 = vadd.f32 %v1931, %v1932
  %v1934 = vpack.c.bf16 %v1933, %v1933
  %v1935 = vld [vmem:[%s15] sm:$0xf]
  %v1936 = vld [vmem:[%s15 + $0x4] sm:$0xf]
  %v1937 = vld [vmem:[%s15 + $0x8] sm:$0xf]
  %v1938 = vld [vmem:[%s15 + $0xc] sm:$0xf]
  %v1939 = vld [vmem:[%s15 + $0x10] sm:$0xf]
  %v1940 = vld [vmem:[%s15 + $0x14] sm:$0xf]
  %v1941 = vld [vmem:[%s15 + $0x18] sm:$0xf]
  %v1942 = vld [vmem:[%s15 + $0x1c] sm:$0xf]
  %v1943 = vld [vmem:[%s15 + $0x20] sm:$0xf]
  %v1944 = vld [vmem:[%s15 + $0x24] sm:$0xf]
  %v1945 = vld [vmem:[%s15 + $0x28] sm:$0xf]
  %v1946 = vld [vmem:[%s15 + $0x2c] sm:$0xf]
  %v1947 = vld [vmem:[%s15 + $0x30] sm:$0xf]
  %v1948 = vld [vmem:[%s15 + $0x34] sm:$0xf]
  %v1949 = vld [vmem:[%s15 + $0x38] sm:$0xf]
  %v1950 = vld [vmem:[%s15 + $0x3c] sm:$0xf]
  %v1951 = vld [vmem:[%s16] sm:$0x1]
  %v1953 = vperm.slane %v1951, 0
  %v1971 = vunpack.c.l.b16 %v1935
  %v1972 = vunpack.c.l.b16 %v1936
  %v1973 = vunpack.c.l.b16 %v1937
  %v1974 = vunpack.c.l.b16 %v1938
  %v1975 = vunpack.c.l.b16 %v1939
  %v1976 = vunpack.c.l.b16 %v1940
  %v1977 = vunpack.c.l.b16 %v1941
  %v1978 = vunpack.c.l.b16 %v1942
  %v1979 = vunpack.c.l.b16 %v1943
  %v1980 = vunpack.c.l.b16 %v1944
  %v1981 = vunpack.c.l.b16 %v1945
  %v1982 = vunpack.c.l.b16 %v1946
  %v1983 = vunpack.c.l.b16 %v1947
  %v1984 = vunpack.c.l.b16 %v1948
  %v1985 = vunpack.c.l.b16 %v1949
  %v1986 = vunpack.c.l.b16 %v1950
  %v1987 = vpack.c.b16 %v1972, %v1971
  %v1988 = vpack.c.b16 %v1974, %v1973
  %v1989 = vpack.c.b16 %v1976, %v1975
  %v1990 = vpack.c.b16 %v1978, %v1977
  %v1991 = vpack.c.b16 %v1980, %v1979
  %v1992 = vpack.c.b16 %v1982, %v1981
  %v1993 = vpack.c.b16 %v1984, %v1983
  %v1994 = vpack.c.b16 %v1986, %v1985
  %2003 = vmatpush.bf16.msra.mxu0 %v1994
  %2004 = vmatpush.bf16.msra.mxu0 %v1993
  %2005 = vmatpush.bf16.msra.mxu0 %v1992
  %2006 = vmatpush.bf16.msra.mxu0 %v1991
  %2007 = vmatpush.bf16.msra.mxu0 %v1990
  %2008 = vmatpush.bf16.msra.mxu0 %v1989
  %2009 = vmatpush.bf16.msra.mxu0 %v1988
  %2010 = vmatpush.bf16.msra.mxu0 %v1987
  %2011 = vmatmul.bf16.gmra.mxu0 %v1934
  %v2012 = vpop.f32.mrf.mxu0
  %v2013 = vadd.f32 %v1953, %v2012
  %v2014 = vpop.f32.mrf.mxu0
  %2015 = vdwg.mxu0
  %v2016 = vmax.f32 %v2013, 0.0
  %v2017 = vld [vmem:[%s17] sm:$0x1]
  %v2019 = vperm.slane %v2017, 0
  %v2021 = vmul.f32 %v2016, %v2019
  %v2022 = vsel %vm217, %v2021, 0.0
  %2023 = vadd.xlane.f32.xlu0 %v2022
  %v2024 = vpop.xlane.xlu0 %2023
  %v2025 = vld [vmem:[#allocation2] sm:$0x1]
  %v2027 = vperm.slane %v2025, 0
  %v2029 = vadd.f32 %v2024, %v2027
  %vm2030 = vcmask 7168
  %2031 = vst.msk [vmem:[%s19] sm:$0xff] %vm2030, %v2029
  // Predicated region
  $region78: #{pallas_forward.1} parent=0 // pred_check
    _
  $region79: #{pallas_forward.1} parent=0 // pred_check_branch
    %2033 = sbr.rel (0) target = $region81
  $region80: #{pallas_forward.1} parent=0 // pred_region
    _
  $region81: #{pallas_forward.1} parent=0 // pred_fallthru
    _
  // Predicated region
  $region82: #{pallas_forward.1} parent=0 // pred_check
    _
  $region83: #{pallas_forward.1} parent=0 // pred_check_branch
    %2035 = sbr.rel (0) target = $region85
  $region84: #{pallas_forward.1} parent=0 // pred_region
    _
  $region85: #{pallas_forward.1} parent=0 // pred_fallthru
    _

</llo_original>
